<compile_context>
chip_gen: v6e
topology: v6e:2x2x1
jax: 0.10.0
libtpu: 0.0.40
codegen_flags: <defaults>
</compile_context>

<pallas_src>
import functools
import math

import jax
import jax.numpy as jnp
from jax.experimental import pallas as pl
from jax.experimental.pallas import tpu as pltpu

_SUBLANE = 8
_LANE = 128
_COMPUTE_DTYPE = jnp.bfloat16


# ----------------------------- Pallas kernel --------------------------------

def _mlp_kernel(x_ref, w1_ref, w2_ref, o_ref, *scratch, th, resident):
    """grid = (M_pad // tm, H // th); the hidden axis (axis 1) is the reduction.

      x_ref : (tm, D)                     input rows (cast to bf16 in-kernel)
      w1_ref: (D, H) resident / (D, th)   c_fc weight, bf16
      w2_ref: (H, D_out) / (th, D_out)    c_proj weight, bf16
      o_ref : (tm, D_out)                 output rows (resident across hidden axis)
      scratch: optional (tm, D_out) f32 accumulator (only when o_ref is not f32)
    """
    acc_ref = scratch[0] if scratch else o_ref
    j = pl.program_id(1)

    @pl.when(j == 0)
    def _init():
        acc_ref[...] = jnp.zeros_like(acc_ref)

    x = x_ref[...].astype(_COMPUTE_DTYPE)

    if resident and th != w1_ref.shape[1]:
        # Weights are fully resident in VMEM; select this step's hidden chunk.
        off = pl.multiple_of(j * th, th)
        w1 = w1_ref[:, pl.ds(off, th)]          # (D, th)
        w2 = w2_ref[pl.ds(off, th), :]          # (th, D_out)
    else:
        w1 = w1_ref[...]
        w2 = w2_ref[...]

    # c_fc matmul -> fused relu(.)^2 epilogue (f32, VPU) -> c_proj partial matmul,
    # accumulated in f32 across hidden chunks.
    h = jnp.dot(x, w1, preferred_element_type=jnp.float32)
    h = jnp.square(jnp.maximum(h, 0.0))
    acc_ref[...] += jnp.dot(h.astype(_COMPUTE_DTYPE), w2,
                            preferred_element_type=jnp.float32)

    if scratch:
        @pl.when(j == pl.num_programs(1) - 1)
        def _finalize():
            o_ref[...] = acc_ref[...].astype(o_ref.dtype)


# --------------------------- tile / VMEM selection ---------------------------

def _vmem_budget_bytes():
    try:
        phys = int(pltpu.get_tpu_info().vmem_capacity_bytes)
    except Exception:
        phys = 64 * 1024 * 1024            # assume the smallest (v7x per-TC) VMEM
    return min(phys * 3 // 4, 96 * 1024 * 1024)


def _estimate_vmem(tm, th, resident, D, H, D_out, x_bytes, out_bytes):
    wb = jnp.dtype(_COMPUTE_DTYPE).itemsize
    w1_cols = H if resident else th
    w2_rows = H if resident else th
    v = 2 * tm * D * x_bytes               # double-buffered x blocks
    v += 2 * D * w1_cols * wb              # w1 block(s) (counted double-buffered)
    v += 2 * w2_rows * D_out * wb          # w2 block(s)
    v += 2 * tm * D_out * out_bytes        # double-buffered output blocks
    if out_bytes != 4:
        v += tm * D_out * 4                # f32 accumulator scratch
    v += tm * th * (4 + wb)                # in-kernel h (f32) + bf16 copy
    return v


def _choose_config(M, D, H, D_out, x_bytes, out_bytes, budget):
    usable = budget - 4 * 1024 * 1024      # headroom for compiler-internal scratch
    tm_prefs = [t for t in (1024, 512, 256, 128, 64, 32, 16, 8)
                if t <= max(M, _SUBLANE)]
    th_prefs = [H] + [t for t in (2048, 1024, 512, 256, 128)
                      if t < H and H % t == 0]
    # Prefer resident weights (weights DMA'd from HBM exactly once per call),
    # then the largest M tile (amortizes weight re-fetch), then the largest th.
    for resident in (True, False):
        for tm in tm_prefs:
            for th in th_prefs:
                if _estimate_vmem(tm, th, resident, D, H, D_out,
                                  x_bytes, out_bytes) <= usable:
                    return tm, th, resident
    return tm_prefs[-1], th_prefs[-1], False


# ------------------------------- wrapper -------------------------------------

def prepare_mlp_params(w_fc, w_proj, dtype=_COMPUTE_DTYPE):
    """One-time relayout of PyTorch-layout weights into the kernel layout.

    w_fc:   (H, D)     -> w1: (D, H)     bf16
    w_proj: (D_out, H) -> w2: (H, D_out) bf16
    Do this once per weight update, NOT per forward call.
    """
    return jnp.asarray(w_fc).T.astype(dtype), jnp.asarray(w_proj).T.astype(dtype)


def mlp_forward(x, w1, w2, *, out_dtype=None, tm=None, th=None, resident=None):
    """Fused MLP: relu(x @ w1)**2 @ w2, with (w1, w2) from prepare_mlp_params."""
    *lead, D = x.shape
    M = int(math.prod(lead)) if lead else 1
    d_in, H = w1.shape
    h_in, D_out = w2.shape
    assert d_in == D and h_in == H, "weight shapes inconsistent with input"

    out_dtype = jnp.dtype(x.dtype if out_dtype is None else out_dtype)
    x_bytes = jnp.dtype(x.dtype).itemsize
    out_bytes = out_dtype.itemsize

    budget = _vmem_budget_bytes()
    auto_tm, auto_th, auto_res = _choose_config(M, D, H, D_out,
                                                x_bytes, out_bytes, budget)
    tm_given = tm is not None
    tm = auto_tm if tm is None else int(tm)
    th = auto_th if th is None else int(th)
    resident = auto_res if resident is None else bool(resident)

    # When splitting M is free (resident weights -> no extra weight HBM traffic),
    # make sure the "parallel" axis has >= 2 steps so both v7x TCs get work.
    if resident and not tm_given and tm >= M and M >= 2 * _SUBLANE:
        half = ((-(-M // 2)) + _SUBLANE - 1) // _SUBLANE * _SUBLANE
        tm = min(tm, half)

    assert tm % _SUBLANE == 0, f"tm={tm} must be a multiple of {_SUBLANE}"
    assert H % th == 0, f"th={th} must divide H={H}"
    assert th == H or th % _LANE == 0, f"th={th} must be a multiple of {_LANE} or H"

    grid_m = -(-M // tm)
    m_pad = grid_m * tm
    grid_h = H // th

    x2 = x.reshape(M, D)
    if m_pad != M:
        x2 = jnp.pad(x2, ((0, m_pad - M), (0, 0)))

    if resident:
        w1_spec = pl.BlockSpec((D, H), lambda i, j: (0, 0))         # fetched once
        w2_spec = pl.BlockSpec((H, D_out), lambda i, j: (0, 0))     # fetched once
    else:
        w1_spec = pl.BlockSpec((D, th), lambda i, j: (0, j))
        w2_spec = pl.BlockSpec((th, D_out), lambda i, j: (j, 0))

    # Accumulate directly into the f32 output block; only narrow outputs need an
    # explicit f32 scratch accumulator.
    scratch = ([] if out_dtype == jnp.dtype(jnp.float32)
               else [pltpu.VMEM((tm, D_out), jnp.float32)])

    kernel = functools.partial(_mlp_kernel, th=th, resident=resident)

    out = pl.pallas_call(
        kernel,
        out_shape=jax.ShapeDtypeStruct((m_pad, D_out), out_dtype),
        grid=(grid_m, grid_h),
        in_specs=[
            pl.BlockSpec((tm, D), lambda i, j: (i, 0)),              # x rows
            w1_spec,                                                 # c_fc weight
            w2_spec,                                                 # c_proj weight
        ],
        out_specs=pl.BlockSpec((tm, D_out), lambda i, j: (i, 0)),
        scratch_shapes=scratch,
        compiler_params=pltpu.CompilerParams(
            dimension_semantics=("parallel", "arbitrary"),
            vmem_limit_bytes=budget),
    )(x2, w1, w2)

    out = out[:M]
    return out.reshape(*lead, D_out)


# ------------------------------- references ----------------------------------

def _reference_mlp(x, w1, w2, out_dtype=None):
    """Plain-JAX reference with identical dtypes (bf16 MXU operands, f32 acc)."""
    out_dtype = x.dtype if out_dtype is None else out_dtype
    lead = x.shape[:-1]
    xb = x.reshape(-1, x.shape[-1]).astype(_COMPUTE_DTYPE)
    h = jnp.dot(xb, w1, preferred_element_type=jnp.float32)
    h = jnp.square(jnp.maximum(h, 0.0))
    y = jnp.dot(h.astype(_COMPUTE_DTYPE), w2, preferred_element_type=jnp.float32)
    return y.reshape(*lead, w2.shape[-1]).astype(out_dtype)


def _reference_mlp_f32(x, w_fc, w_proj):
    """Pure f32 reference in the original PyTorch weight layout."""
    h = jnp.einsum('...k,nk->...n', x.astype(jnp.float32), w_fc.astype(jnp.float32))
    h = jnp.square(jnp.maximum(h, 0.0))
    return jnp.einsum('...k,nk->...n', h, w_proj.astype(jnp.float32))


# --------------------------------- main ---------------------------------------

if __name__ == "__main__":
    key = jax.random.PRNGKey(0)

    def casted_linear_init(k, out_features, in_features):
        # CastedLinear.reset_parameters: uniform(-b, b), b = sqrt(3) * 0.5 / sqrt(in)
        std = 0.5 * in_features ** -0.5
        bound = math.sqrt(3) * std
        return jax.random.uniform(k, (out_features, in_features), jnp.float32,
                                  -bound, bound)

    fwd = jax.jit(mlp_forward, static_argnames=("out_dtype", "tm", "th", "resident"))

    # (B, T, dim, overrides); hidden = 4 * dim.  Overrides exercise every code path.
    configs = [
        (4, 128, 256, {}),                                       # auto: resident weights
        (2, 128, 128, dict(resident=False, tm=128, th=128)),     # HBM-chunked reduction
        (1, 200, 256, dict(resident=True, tm=64, th=256)),       # resident + pl.ds chunks + ragged M
        (2, 64, 128, dict(out_dtype=jnp.bfloat16)),              # bf16 output (f32 scratch)
    ]
    for (B, T, dim, overrides) in configs:
        hdim = 4 * dim
        k1, k2, k3, key = jax.random.split(key, 4)
        x = jax.random.normal(k1, (B, T, dim), jnp.float32)
        w_fc = casted_linear_init(k2, hdim, dim)
        # NOTE: the PyTorch module zero-initializes c_proj.weight; random values are
        # used here so the correctness check is non-trivial (forward math identical).
        w_proj = casted_linear_init(k3, dim, hdim)

        # One-time weight relayout + bf16 cast (per the perf review: not per call).
        w1, w2 = prepare_mlp_params(w_fc, w_proj)

        y = fwd(x, w1, w2, **overrides)
        jax.block_until_ready(y)
        out_dtype = overrides.get("out_dtype", None)
        assert y.shape == (B, T, dim)
        assert bool(jnp.isfinite(y.astype(jnp.float32)).all()), "non-finite output"

        # Tight check: plain-JAX computation with identical dtypes.
        y_ref = _reference_mlp(x, w1, w2, out_dtype=out_dtype)
        scale = float(jnp.max(jnp.abs(y_ref.astype(jnp.float32)))) + 1e-6
        err = float(jnp.max(jnp.abs(y.astype(jnp.float32)
                                    - y_ref.astype(jnp.float32)))) / scale
        tol = 1e-2 if out_dtype == jnp.bfloat16 else 2e-3
        assert err < tol, f"kernel mismatch vs dtype-matched reference: {err:.3e}"

        # Loose check: pure-f32 reference (only bf16 operand rounding allowed).
        y_f32 = _reference_mlp_f32(x, w_fc, w_proj)
        scale32 = float(jnp.max(jnp.abs(y_f32))) + 1e-6
        err32 = float(jnp.max(jnp.abs(y.astype(jnp.float32) - y_f32))) / scale32
        assert err32 < 5e-2, f"kernel drifted from f32 reference: {err32:.3e}"

    print("KERNEL_OK")
</pallas_src>

<mosaic_0001>
module attributes {stable_mosaic.version = 11 : i64} {
  func.func @_mlp_kernel(%arg0: i32, %arg1: i32, %arg2: memref<256x256xf32, #tpu.memory_space<vmem>>, %arg3: memref<256x1024xbf16, #tpu.memory_space<vmem>>, %arg4: memref<1024x256xbf16, #tpu.memory_space<vmem>>, %arg5: memref<256x256xf32, #tpu.memory_space<vmem>>) attributes {dimension_semantics = [#tpu.dimension_semantics<parallel>, #tpu.dimension_semantics<arbitrary>], iteration_bounds = array<i64: 2, 1>, scalar_prefetch = 0 : i64, scratch_operands = 0 : i64, tpu.core_type = #tpu.core_type<tc>, window_params = [{transform_indices = @transform_0, window_bounds = array<i64: 256, 256>}, {pipeline_mode = #tpu.pipeline_mode<synchronous>, transform_indices = @transform_1, window_bounds = array<i64: 256, 1024>}, {pipeline_mode = #tpu.pipeline_mode<synchronous>, transform_indices = @transform_2, window_bounds = array<i64: 1024, 256>}, {transform_indices = @transform_3, window_bounds = array<i64: 256, 256>}]} {
    %c0_i32 = arith.constant 0 : i32
    %0 = arith.cmpi eq, %arg1, %c0_i32 : i32
    %1 = arith.extui %0 : i1 to i32
    %c0_i32_0 = arith.constant 0 : i32
    %2 = arith.cmpi ne, %1, %c0_i32_0 : i32
    scf.if %2 {
      %cst_12 = arith.constant 0.000000e+00 : f32
      %16 = vector.broadcast %cst_12 : f32 to vector<256x256xf32>
      %c0_13 = arith.constant 0 : index
      %c0_14 = arith.constant 0 : index
      %17 = vector.load %arg5[%c0_13, %c0_14] : memref<256x256xf32, #tpu.memory_space<vmem>>, vector<256x256xf32>
      tpu.vector_store %arg5[%c0_13, %c0_14], %16 {strides = array<i32>} : memref<256x256xf32, #tpu.memory_space<vmem>>, vector<256x256xf32>,
    } else {
    }
    %c0 = arith.constant 0 : index
    %c0_1 = arith.constant 0 : index
    %3 = vector.load %arg2[%c0, %c0_1] : memref<256x256xf32, #tpu.memory_space<vmem>>, vector<256x256xf32>
    %4 = arith.truncf %3 : vector<256x256xf32> to vector<256x256xbf16>
    %c0_2 = arith.constant 0 : index
    %c0_3 = arith.constant 0 : index
    %5 = vector.load %arg3[%c0_2, %c0_3] : memref<256x1024xbf16, #tpu.memory_space<vmem>>, vector<256x1024xbf16>
    %c0_4 = arith.constant 0 : index
    %c0_5 = arith.constant 0 : index
    %6 = vector.load %arg4[%c0_4, %c0_5] : memref<1024x256xbf16, #tpu.memory_space<vmem>>, vector<1024x256xbf16>
    %cst = arith.constant dense<0.000000e+00> : vector<256x1024xf32>
    %7 = tpu.matmul %4, %5, %cst {dimension_numbers = #tpu.dot_dimension_numbers<[1], [0], [0], [1], [0, 0, 1, 1], [], []>} : vector<256x256xbf16>, vector<256x1024xbf16>, vector<256x1024xf32> -> vector<256x1024xf32>
    %cst_6 = arith.constant 0.000000e+00 : f32
    %8 = vector.broadcast %cst_6 : f32 to vector<256x1024xf32>
    %9 = arith.maximumf %7, %8 : vector<256x1024xf32>
    %10 = arith.mulf %9, %9 : vector<256x1024xf32>
    %c0_7 = arith.constant 0 : index
    %c0_8 = arith.constant 0 : index
    %11 = vector.load %arg5[%c0_7, %c0_8] : memref<256x256xf32, #tpu.memory_space<vmem>>, vector<256x256xf32>
    %12 = arith.truncf %10 : vector<256x1024xf32> to vector<256x1024xbf16>
    %cst_9 = arith.constant dense<0.000000e+00> : vector<256x256xf32>
    %13 = tpu.matmul %12, %6, %cst_9 {dimension_numbers = #tpu.dot_dimension_numbers<[1], [0], [0], [1], [0, 0, 1, 1], [], []>} : vector<256x1024xbf16>, vector<1024x256xbf16>, vector<256x256xf32> -> vector<256x256xf32>
    %14 = arith.addf %11, %13 : vector<256x256xf32>
    %c0_10 = arith.constant 0 : index
    %c0_11 = arith.constant 0 : index
    %15 = vector.load %arg5[%c0_10, %c0_11] : memref<256x256xf32, #tpu.memory_space<vmem>>, vector<256x256xf32>
    tpu.vector_store %arg5[%c0_10, %c0_11], %14 {strides = array<i32>} : memref<256x256xf32, #tpu.memory_space<vmem>>, vector<256x256xf32>,
    return
  }
  func.func @transform_0(%arg0: i32, %arg1: i32) -> (i32, i32) {
    %c0_i32 = arith.constant 0 : i32
    %c0_i32_0 = arith.constant 0 : i32
    return %arg0, %c0_i32 : i32, i32
  }
  func.func @transform_1(%arg0: i32, %arg1: i32) -> (i32, i32) {
    %c0_i32 = arith.constant 0 : i32
    %c0_i32_0 = arith.constant 0 : i32
    %c0_i32_1 = arith.constant 0 : i32
    return %c0_i32, %c0_i32_0 : i32, i32
  }
  func.func @transform_2(%arg0: i32, %arg1: i32) -> (i32, i32) {
    %c0_i32 = arith.constant 0 : i32
    %c0_i32_0 = arith.constant 0 : i32
    %c0_i32_1 = arith.constant 0 : i32
    return %c0_i32, %c0_i32_0 : i32, i32
  }
  func.func @transform_3(%arg0: i32, %arg1: i32) -> (i32, i32) {
    %c0_i32 = arith.constant 0 : i32
    %c0_i32_0 = arith.constant 0 : i32
    return %arg0, %c0_i32 : i32, i32
  }
}

</mosaic_0001>

<llo_original>
// kernel: mlp_forward.1
$region0: #{mlp_forward.1}
  #allocation0 [shape = 'u32[]', space=smem, size = 0x4, offset = 0x4, fixed_abs, tag = 'smem constant byte address 0x4 - core index']
  #allocation1 [shape = 'u32[144,128]{1,0:T(1,128)}', space=vmem, size = 0x12000, scoped, tag = 'internal scratch']
  %s0 = inlined_call_operand.hbm [shape: f32[512,256], index: 0, kind: input, shape index: {}]
  %s1 = inlined_call_operand.hbm [shape: bf16[256,1024], index: 1, kind: input, shape index: {}]
  %s2 = inlined_call_operand.hbm [shape: bf16[1024,256], index: 2, kind: input, shape index: {}]
  %s3 = inlined_call_operand.hbm [shape: f32[512,256], index: 3, kind: output, shape index: {}]
  %s4 = sld [smem:[#allocation0]]
  $region61: #{mlp_forward.1} parent=0
    _
  %s6 = ssub.s32 1, %s4
  %s7 = scalar_select 0, %s6, %s4
  $region1: #{mlp_forward.1} parent=0
    #allocation2 [shape = 'u8[524288]{0}', space=vmem, size = 0x80000, scoped, tag = 'input window, operand 0']
    #allocation3 [shape = 's32[2]{0}', space=sflag, size = 0x8, scoped, tag = 'scoped memory for mlp_forward.1']
    #allocation4 [shape = 's32[2]{0}', space=sflag, size = 0x8, scoped, tag = 'scoped memory for mlp_forward.1']
    #allocation5 [shape = 'u8[524288]{0}', space=vmem, size = 0x80000, scoped, tag = 'input window, operand 1, single buffered']
    #allocation6 [shape = 's32[1]{0}', space=sflag, size = 0x4, scoped, tag = 'scoped memory for mlp_forward.1']
    #allocation7 [shape = 'u8[524288]{0}', space=vmem, size = 0x80000, scoped, tag = 'input window, operand 2, single buffered']
    #allocation8 [shape = 'u8[524288]{0}', space=vmem, size = 0x80000, scoped, tag = 'output window, operand 0']
    %8 = vsyncpa [#allocation3], 0
    %s9 = scalar_lea.sflag [#allocation3], 1
    %10 = vsyncpa %s9, 0
    %11 = vsyncpa [#allocation6], 0
    %12 = vsyncpa [#allocation4], 0
    %s13 = scalar_lea.sflag [#allocation4], 1
    %14 = vsyncpa %s13, 0
    loop: start=0, step=1, limit=4
    $region2: #{mlp_forward.1} parent=1 // loop_pre_header
      _
    $region3: #{mlp_forward.1} parent=1 // loop_header
      %s16 = sphi 0, %s20
      %p17 = scmp.ge.s32.totalorder %s16, 4
      %s23 = sphi 0, %s35
      %s24 = sphi 0, %s31
      %s25 = sphi 0, %s23
      %s26 = sphi 0, %s24
      %s27 = sphi 0, %s25
      %s28 = sphi 0, %s26
      %s38 = sphi 0, %s40
      %s41 = sphi 0, %s38
      %s42 = sphi 0, %s41
      %s58 = sphi 0, %s42
      %s62 = sphi 0, %s62
      %s64 = sphi 0, %s62
      %s65 = sphi 0, %s64
      %s79 = sphi 0, %s65
      %s83 = sphi 0, %s83
      %s85 = sphi 0, %s83
      %s86 = sphi 0, %s85
      %s100 = sphi 0, %s86
      %s106 = sphi 0, %s108
      %s109 = sphi 0, %s106
      %s110 = sphi 0, %s109
      %s126 = sphi 0, %s110
    $region4: #{mlp_forward.1} parent=1 // loop_header_branch
      %19 = sbr.rel (%p17) target = $region8
    $region5: #{mlp_forward.1} parent=1 // loop_body
      %s21 = ssub.s32 %s16, 1
      %s22 = ssub.s32 %s16, 2
      %s29 = sadd.s32 1, %s24
      %p30 = scmp.ge.s32.totalorder %s29, 1
      %s31 = scalar_select %p30, 0, %s29
      %s32 = sadd.s32 1, %s23
      %s33 = scalar_select %p30, %s32, %s23
      %p34 = scmp.ge.s32.totalorder %s33, 2
      %s35 = scalar_select %p34, 0, %s33
      %s36 = ssub.s32 %s23, %s35
      %p37 = scmp.eq.s32.totalorder %s36, 0
      %s39 = sadd.s32 %s38, 1
      %s40 = scalar_select %p37, %s38, %s39
      %p43 = pneg %p37
      %p44 = scmp.eq.s32.totalorder %s16, 1
      %p45 = por %p43, %p44
      %p46 = scmp.ne.s32.totalorder %s38, %s41
      %p47 = scmp.eq.s32.totalorder %s16, 0
      %p48 = por %p46, %p47
      %p49 = scmp.ne.s32.totalorder %s38, %s41
      %p50 = scmp.eq.s32.totalorder %s21, 1
      %p51 = por %p49, %p50
      %p52 = scmp.ne.s32.totalorder %s41, %s42
      %p53 = scmp.eq.s32.totalorder %s21, 0
      %p54 = por %p52, %p53
      %p55 = scmp.ne.s32.totalorder %s41, %s42
      %p56 = scmp.eq.s32.totalorder %s22, 1
      %p57 = por %p55, %p56
      %p59 = scmp.ne.s32.totalorder %s42, %s58
      %p60 = scmp.eq.s32.totalorder %s22, 0
      %p61 = por %p59, %p60
      %s63 = sadd.s32 %s62, 1
      %p66 = scmp.eq.s32.totalorder %s16, 1
      %p67 = scmp.ne.s32.totalorder %s62, %s64
      %p68 = scmp.eq.s32.totalorder %s16, 0
      %p69 = por %p67, %p68
      %p70 = scmp.ne.s32.totalorder %s62, %s64
      %p71 = scmp.eq.s32.totalorder %s21, 1
      %p72 = por %p70, %p71
      %p73 = scmp.ne.s32.totalorder %s64, %s65
      %p74 = scmp.eq.s32.totalorder %s21, 0
      %p75 = por %p73, %p74
      %p76 = scmp.ne.s32.totalorder %s64, %s65
      %p77 = scmp.eq.s32.totalorder %s22, 1
      %p78 = por %p76, %p77
      %p80 = scmp.ne.s32.totalorder %s65, %s79
      %p81 = scmp.eq.s32.totalorder %s22, 0
      %p82 = por %p80, %p81
      %s84 = sadd.s32 %s83, 1
      %p87 = scmp.eq.s32.totalorder %s16, 1
      %p88 = scmp.ne.s32.totalorder %s83, %s85
      %p89 = scmp.eq.s32.totalorder %s16, 0
      %p90 = por %p88, %p89
      %p91 = scmp.ne.s32.totalorder %s83, %s85
      %p92 = scmp.eq.s32.totalorder %s21, 1
      %p93 = por %p91, %p92
      %p94 = scmp.ne.s32.totalorder %s85, %s86
      %p95 = scmp.eq.s32.totalorder %s21, 0
      %p96 = por %p94, %p95
      %p97 = scmp.ne.s32.totalorder %s85, %s86
      %p98 = scmp.eq.s32.totalorder %s22, 1
      %p99 = por %p97, %p98
      %p101 = scmp.ne.s32.totalorder %s86, %s100
      %p102 = scmp.eq.s32.totalorder %s22, 0
      %p103 = por %p101, %p102
      %s104 = ssub.s32 %s23, %s35
      %p105 = scmp.eq.s32.totalorder %s104, 0
      %s107 = sadd.s32 %s106, 1
      %s108 = scalar_select %p105, %s106, %s107
      %p111 = pneg %p105
      %p112 = scmp.eq.s32.totalorder %s16, 1
      %p113 = por %p111, %p112
      %p114 = scmp.ne.s32.totalorder %s106, %s109
      %p115 = scmp.eq.s32.totalorder %s16, 0
      %p116 = por %p114, %p115
      %p117 = scmp.ne.s32.totalorder %s106, %s109
      %p118 = scmp.eq.s32.totalorder %s21, 1
      %p119 = por %p117, %p118
      %p120 = scmp.ne.s32.totalorder %s109, %s110
      %p121 = scmp.eq.s32.totalorder %s21, 0
      %p122 = por %p120, %p121
      %p123 = scmp.ne.s32.totalorder %s109, %s110
      %p124 = scmp.eq.s32.totalorder %s22, 1
      %p125 = por %p123, %p124
      %p127 = scmp.ne.s32.totalorder %s110, %s126
      %p128 = scmp.eq.s32.totalorder %s22, 0
      %p129 = por %p127, %p128
      %p130 = scmp.le.s32.totalorder 1, %s16
      %p131 = scmp.lt.s32.totalorder %s16, 3
      %p132 = pnand %p130, %p131
      %p133 = pneg %p132
      // Predicated region
      $region9: #{mlp_forward.1} parent=5 // pred_check
        _
      $region10: #{mlp_forward.1} parent=5 // pred_check_branch
        %135 = sbr.rel (%p132) target = $region12
      $region11: #{mlp_forward.1} parent=5 // pred_region
        %s136 = ssub.s32 %s16, 1
        // Predicated region
        $region13: #{mlp_forward.1} parent=11 // pred_check
          %p137 = pneg %p75
        $region14: #{mlp_forward.1} parent=11 // pred_check_branch
          %139 = sbr.rel (%p137) target = $region16
        $region15: #{mlp_forward.1} parent=11 // pred_region
          %s141 = ssub.s32 16384, 16384
          %142 = vsyncadd [#allocation6], %s141
          %s143 = sshll.u32 [#allocation5], 4
          %s144 = int_to_ptr.vmem [resolvable:$true] %s143
          %149 = dma.hbm_to_vmem [thread:$0]  %s1, 16384, %s144, [#allocation6], 512, 512, 32
        $region16: #{mlp_forward.1} parent=11 // pred_fallthru
          _
        // Predicated region
        $region17: #{mlp_forward.1} parent=11 // pred_check
          %p150 = pneg %p96
        $region18: #{mlp_forward.1} parent=11 // pred_check_branch
          %152 = sbr.rel (%p150) target = $region20
        $region19: #{mlp_forward.1} parent=11 // pred_region
          %s154 = ssub.s32 16384, 16384
          %155 = vsyncadd [#allocation6], %s154
          %s156 = sshll.u32 [#allocation7], 4
          %s157 = int_to_ptr.vmem [resolvable:$true] %s156
          %162 = dma.hbm_to_vmem [thread:$0]  %s2, 16384, %s157, [#allocation6], 128, 128, 8
        $region20: #{mlp_forward.1} parent=11 // pred_fallthru
          _
      $region12: #{mlp_forward.1} parent=5 // pred_fallthru
        _
      %p163 = scmp.lt.s32.totalorder %s16, 2
      // Predicated region
      $region21: #{mlp_forward.1} parent=5 // pred_check
        %p164 = pneg %p163
      $region22: #{mlp_forward.1} parent=5 // pred_check_branch
        %166 = sbr.rel (%p164) target = $region24
      $region23: #{mlp_forward.1} parent=5 // pred_region
        // Predicated region
        $region25: #{mlp_forward.1} parent=23 // pred_check
          %p167 = pneg %p48
        $region26: #{mlp_forward.1} parent=23 // pred_check_branch
          %169 = sbr.rel (%p167) target = $region28
        $region27: #{mlp_forward.1} parent=23 // pred_region
          %s170 = sand.u32 %s38, 1
          %s171 = scalar_lea.sflag [#allocation3], %s170
          %s172 = sand.u32 %s38, 1
          %s173 = smul.addr %s172, 512
          %s174 = scalar_lea.vmem [#allocation2], %s173
          %s175 = smul.u32 32, %s23
          %s177 = ssub.s32 8192, 8192
          %178 = vsyncadd %s171, %s177
          %s179 = smul.addr %s175, 2
          %s180 = smul.addr %s179, 128
          %s181 = scalar_lea.hbm %s0, %s180
          %s182 = sshll.u32 %s174, 4
          %s183 = int_to_ptr.vmem [resolvable:$true] %s182
          %188 = dma.hbm_to_vmem [thread:$0]  %s181, 8192, %s183, %s171, 256, 256, 16
        $region28: #{mlp_forward.1} parent=23 // pred_fallthru
          _
      $region24: #{mlp_forward.1} parent=5 // pred_fallthru
        _
      %p189 = scmp.le.s32.totalorder 1, %s16
      %p190 = scmp.lt.s32.totalorder %s16, 3
      %p191 = pnand %p189, %p190
      %p192 = pneg %p191
      // Predicated region
      $region29: #{mlp_forward.1} parent=5 // pred_check
        _
      $region30: #{mlp_forward.1} parent=5 // pred_check_branch
        %194 = sbr.rel (%p191) target = $region32
      $region31: #{mlp_forward.1} parent=5 // pred_region
        %s195 = ssub.s32 %s16, 1
        %s196 = sand.u32 %s41, 1
        %s197 = scalar_lea.sflag [#allocation3], %s196
        %s198 = sand.u32 %s41, 1
        %s199 = smul.addr %s198, 512
        %s200 = scalar_lea.vmem [#allocation2], %s199
        // Predicated region
        $region33: #{mlp_forward.1} parent=31 // pred_check
          %p201 = pneg %p54
        $region34: #{mlp_forward.1} parent=31 // pred_check_branch
          %203 = sbr.rel (%p201) target = $region36
        $region35: #{mlp_forward.1} parent=31 // pred_region
          %204 = dma.done %s197, 8192
        $region36: #{mlp_forward.1} parent=31 // pred_fallthru
          _
        // Predicated region
        $region37: #{mlp_forward.1} parent=31 // pred_check
          %p205 = pneg %p75
        $region38: #{mlp_forward.1} parent=31 // pred_check_branch
          %207 = sbr.rel (%p205) target = $region40
        $region39: #{mlp_forward.1} parent=31 // pred_region
          %208 = dma.done [#allocation6], 16384
        $region40: #{mlp_forward.1} parent=31 // pred_fallthru
          _
        // Predicated region
        $region41: #{mlp_forward.1} parent=31 // pred_check
          %p209 = pneg %p96
        $region42: #{mlp_forward.1} parent=31 // pred_check_branch
          %211 = sbr.rel (%p209) target = $region44
        $region43: #{mlp_forward.1} parent=31 // pred_region
          %212 = dma.done [#allocation6], 16384
        $region44: #{mlp_forward.1} parent=31 // pred_fallthru
          _
        %s213 = sand.u32 %s41, 1
        %s214 = scalar_lea.sflag [#allocation3], %s213
        %s215 = sand.u32 %s41, 1
        %s216 = smul.addr %s215, 512
        %s217 = scalar_lea.vmem [#allocation2], %s216
        %p218 = pneg %p54
        %p219 = pneg %p51
        %p220 = pneg %p75
        %p221 = pneg %p72
        %p222 = pneg %p96
        %p223 = pneg %p93
        %p224 = pneg %p122
        %p225 = pneg %p119
        %s226 = sand.u32 %s109, 1
        %s227 = scalar_lea.sflag [#allocation4], %s226
        %s228 = sand.u32 %s109, 1
        %s229 = smul.addr %s228, 512
        %s230 = scalar_lea.vmem [#allocation8], %s229
        %s231 = smul.u32 32, %s25
        %s232 = smul.u32 32, %s25
        %p233 = scmp.eq.s32.totalorder %s26, 0
        // Predicated region
        $region45: #{mlp_forward.1} parent=31 // pred_check
          %p234 = pneg %p233
        $region46: #{mlp_forward.1} parent=31 // pred_check_branch
          %236 = sbr.rel (%p234) target = $region48
        $region47: #{mlp_forward.1} parent=31 // pred_region
          %237 = vst [vmem:[%s230] sm:$0xff] 0.0
          %238 = vst [vmem:[%s230 + $0x8] sm:$0xff] 0.0
          %239 = vst [vmem:[%s230 + $0x10] sm:$0xff] 0.0
          %240 = vst [vmem:[%s230 + $0x18] sm:$0xff] 0.0
          %241 = vst [vmem:[%s230 + $0x20] sm:$0xff] 0.0
          %242 = vst [vmem:[%s230 + $0x28] sm:$0xff] 0.0
          %243 = vst [vmem:[%s230 + $0x30] sm:$0xff] 0.0
          %244 = vst [vmem:[%s230 + $0x38] sm:$0xff] 0.0
          %245 = vst [vmem:[%s230 + $0x40] sm:$0xff] 0.0
          %246 = vst [vmem:[%s230 + $0x48] sm:$0xff] 0.0
          %247 = vst [vmem:[%s230 + $0x50] sm:$0xff] 0.0
          %248 = vst [vmem:[%s230 + $0x58] sm:$0xff] 0.0
          %249 = vst [vmem:[%s230 + $0x60] sm:$0xff] 0.0
          %250 = vst [vmem:[%s230 + $0x68] sm:$0xff] 0.0
          %251 = vst [vmem:[%s230 + $0x70] sm:$0xff] 0.0
          %252 = vst [vmem:[%s230 + $0x78] sm:$0xff] 0.0
          %253 = vst [vmem:[%s230 + $0x80] sm:$0xff] 0.0
          %254 = vst [vmem:[%s230 + $0x88] sm:$0xff] 0.0
          %255 = vst [vmem:[%s230 + $0x90] sm:$0xff] 0.0
          %256 = vst [vmem:[%s230 + $0x98] sm:$0xff] 0.0
          %257 = vst [vmem:[%s230 + $0xa0] sm:$0xff] 0.0
          %258 = vst [vmem:[%s230 + $0xa8] sm:$0xff] 0.0
          %259 = vst [vmem:[%s230 + $0xb0] sm:$0xff] 0.0
          %260 = vst [vmem:[%s230 + $0xb8] sm:$0xff] 0.0
          %261 = vst [vmem:[%s230 + $0xc0] sm:$0xff] 0.0
          %262 = vst [vmem:[%s230 + $0xc8] sm:$0xff] 0.0
          %263 = vst [vmem:[%s230 + $0xd0] sm:$0xff] 0.0
          %264 = vst [vmem:[%s230 + $0xd8] sm:$0xff] 0.0
          %265 = vst [vmem:[%s230 + $0xe0] sm:$0xff] 0.0
          %266 = vst [vmem:[%s230 + $0xe8] sm:$0xff] 0.0
          %267 = vst [vmem:[%s230 + $0xf0] sm:$0xff] 0.0
          %268 = vst [vmem:[%s230 + $0xf8] sm:$0xff] 0.0
          %269 = vst [vmem:[%s230 + $0x100] sm:$0xff] 0.0
          %270 = vst [vmem:[%s230 + $0x108] sm:$0xff] 0.0
          %271 = vst [vmem:[%s230 + $0x110] sm:$0xff] 0.0
          %272 = vst [vmem:[%s230 + $0x118] sm:$0xff] 0.0
          %273 = vst [vmem:[%s230 + $0x120] sm:$0xff] 0.0
          %274 = vst [vmem:[%s230 + $0x128] sm:$0xff] 0.0
          %275 = vst [vmem:[%s230 + $0x130] sm:$0xff] 0.0
          %276 = vst [vmem:[%s230 + $0x138] sm:$0xff] 0.0
          %277 = vst [vmem:[%s230 + $0x140] sm:$0xff] 0.0
          %278 = vst [vmem:[%s230 + $0x148] sm:$0xff] 0.0
          %279 = vst [vmem:[%s230 + $0x150] sm:$0xff] 0.0
          %280 = vst [vmem:[%s230 + $0x158] sm:$0xff] 0.0
          %281 = vst [vmem:[%s230 + $0x160] sm:$0xff] 0.0
          %282 = vst [vmem:[%s230 + $0x168] sm:$0xff] 0.0
          %283 = vst [vmem:[%s230 + $0x170] sm:$0xff] 0.0
          %284 = vst [vmem:[%s230 + $0x178] sm:$0xff] 0.0
          %285 = vst [vmem:[%s230 + $0x180] sm:$0xff] 0.0
          %286 = vst [vmem:[%s230 + $0x188] sm:$0xff] 0.0
          %287 = vst [vmem:[%s230 + $0x190] sm:$0xff] 0.0
          %288 = vst [vmem:[%s230 + $0x198] sm:$0xff] 0.0
          %289 = vst [vmem:[%s230 + $0x1a0] sm:$0xff] 0.0
          %290 = vst [vmem:[%s230 + $0x1a8] sm:$0xff] 0.0
          %291 = vst [vmem:[%s230 + $0x1b0] sm:$0xff] 0.0
          %292 = vst [vmem:[%s230 + $0x1b8] sm:$0xff] 0.0
          %293 = vst [vmem:[%s230 + $0x1c0] sm:$0xff] 0.0
          %294 = vst [vmem:[%s230 + $0x1c8] sm:$0xff] 0.0
          %295 = vst [vmem:[%s230 + $0x1d0] sm:$0xff] 0.0
          %296 = vst [vmem:[%s230 + $0x1d8] sm:$0xff] 0.0
          %297 = vst [vmem:[%s230 + $0x1e0] sm:$0xff] 0.0
          %298 = vst [vmem:[%s230 + $0x1e8] sm:$0xff] 0.0
          %299 = vst [vmem:[%s230 + $0x1f0] sm:$0xff] 0.0
          %300 = vst [vmem:[%s230 + $0x1f8] sm:$0xff] 0.0
        $region48: #{mlp_forward.1} parent=31 // pred_fallthru
          _
        %v301 = vld [vmem:[%s200] sm:$0xff]
        %v302 = vld [vmem:[%s200 + $0x8] sm:$0xff]
        %v303 = vld [vmem:[%s200 + $0x10] sm:$0xff]
        %v304 = vld [vmem:[%s200 + $0x18] sm:$0xff]
        %v305 = vld [vmem:[%s200 + $0x20] sm:$0xff]
        %v306 = vld [vmem:[%s200 + $0x28] sm:$0xff]
        %v307 = vld [vmem:[%s200 + $0x30] sm:$0xff]
        %v308 = vld [vmem:[%s200 + $0x38] sm:$0xff]
        %v309 = vld [vmem:[%s200 + $0x40] sm:$0xff]
        %v310 = vld [vmem:[%s200 + $0x48] sm:$0xff]
        %v311 = vld [vmem:[%s200 + $0x50] sm:$0xff]
        %v312 = vld [vmem:[%s200 + $0x58] sm:$0xff]
        %v313 = vld [vmem:[%s200 + $0x60] sm:$0xff]
        %v314 = vld [vmem:[%s200 + $0x68] sm:$0xff]
        %v315 = vld [vmem:[%s200 + $0x70] sm:$0xff]
        %v316 = vld [vmem:[%s200 + $0x78] sm:$0xff]
        %v317 = vld [vmem:[%s200 + $0x80] sm:$0xff]
        %v318 = vld [vmem:[%s200 + $0x88] sm:$0xff]
        %v319 = vld [vmem:[%s200 + $0x90] sm:$0xff]
        %v320 = vld [vmem:[%s200 + $0x98] sm:$0xff]
        %v321 = vld [vmem:[%s200 + $0xa0] sm:$0xff]
        %v322 = vld [vmem:[%s200 + $0xa8] sm:$0xff]
        %v323 = vld [vmem:[%s200 + $0xb0] sm:$0xff]
        %v324 = vld [vmem:[%s200 + $0xb8] sm:$0xff]
        %v325 = vld [vmem:[%s200 + $0xc0] sm:$0xff]
        %v326 = vld [vmem:[%s200 + $0xc8] sm:$0xff]
        %v327 = vld [vmem:[%s200 + $0xd0] sm:$0xff]
        %v328 = vld [vmem:[%s200 + $0xd8] sm:$0xff]
        %v329 = vld [vmem:[%s200 + $0xe0] sm:$0xff]
        %v330 = vld [vmem:[%s200 + $0xe8] sm:$0xff]
        %v331 = vld [vmem:[%s200 + $0xf0] sm:$0xff]
        %v332 = vld [vmem:[%s200 + $0xf8] sm:$0xff]
        %v333 = vld [vmem:[%s200 + $0x100] sm:$0xff]
        %v334 = vld [vmem:[%s200 + $0x108] sm:$0xff]
        %v335 = vld [vmem:[%s200 + $0x110] sm:$0xff]
        %v336 = vld [vmem:[%s200 + $0x118] sm:$0xff]
        %v337 = vld [vmem:[%s200 + $0x120] sm:$0xff]
        %v338 = vld [vmem:[%s200 + $0x128] sm:$0xff]
        %v339 = vld [vmem:[%s200 + $0x130] sm:$0xff]
        %v340 = vld [vmem:[%s200 + $0x138] sm:$0xff]
        %v341 = vld [vmem:[%s200 + $0x140] sm:$0xff]
        %v342 = vld [vmem:[%s200 + $0x148] sm:$0xff]
        %v343 = vld [vmem:[%s200 + $0x150] sm:$0xff]
        %v344 = vld [vmem:[%s200 + $0x158] sm:$0xff]
        %v345 = vld [vmem:[%s200 + $0x160] sm:$0xff]
        %v346 = vld [vmem:[%s200 + $0x168] sm:$0xff]
        %v347 = vld [vmem:[%s200 + $0x170] sm:$0xff]
        %v348 = vld [vmem:[%s200 + $0x178] sm:$0xff]
        %v349 = vld [vmem:[%s200 + $0x180] sm:$0xff]
        %v350 = vld [vmem:[%s200 + $0x188] sm:$0xff]
        %v351 = vld [vmem:[%s200 + $0x190] sm:$0xff]
        %v352 = vld [vmem:[%s200 + $0x198] sm:$0xff]
        %v353 = vld [vmem:[%s200 + $0x1a0] sm:$0xff]
        %v354 = vld [vmem:[%s200 + $0x1a8] sm:$0xff]
        %v355 = vld [vmem:[%s200 + $0x1b0] sm:$0xff]
        %v356 = vld [vmem:[%s200 + $0x1b8] sm:$0xff]
        %v357 = vld [vmem:[%s200 + $0x1c0] sm:$0xff]
        %v358 = vld [vmem:[%s200 + $0x1c8] sm:$0xff]
        %v359 = vld [vmem:[%s200 + $0x1d0] sm:$0xff]
        %v360 = vld [vmem:[%s200 + $0x1d8] sm:$0xff]
        %v361 = vld [vmem:[%s200 + $0x1e0] sm:$0xff]
        %v362 = vld [vmem:[%s200 + $0x1e8] sm:$0xff]
        %v363 = vld [vmem:[%s200 + $0x1f0] sm:$0xff]
        %v364 = vld [vmem:[%s200 + $0x1f8] sm:$0xff]
        %v365 = vpack.c.bf16 %v303, %v301
        %v366 = vpack.c.bf16 %v304, %v302
        %v367 = vpack.c.bf16 %v307, %v305
        %v368 = vpack.c.bf16 %v308, %v306
        %v369 = vpack.c.bf16 %v311, %v309
        %v370 = vpack.c.bf16 %v312, %v310
        %v371 = vpack.c.bf16 %v315, %v313
        %v372 = vpack.c.bf16 %v316, %v314
        %v373 = vpack.c.bf16 %v319, %v317
        %v374 = vpack.c.bf16 %v320, %v318
        %v375 = vpack.c.bf16 %v323, %v321
        %v376 = vpack.c.bf16 %v324, %v322
        %v377 = vpack.c.bf16 %v327, %v325
        %v378 = vpack.c.bf16 %v328, %v326
        %v379 = vpack.c.bf16 %v331, %v329
        %v380 = vpack.c.bf16 %v332, %v330
        %v381 = vpack.c.bf16 %v335, %v333
        %v382 = vpack.c.bf16 %v336, %v334
        %v383 = vpack.c.bf16 %v339, %v337
        %v384 = vpack.c.bf16 %v340, %v338
        %v385 = vpack.c.bf16 %v343, %v341
        %v386 = vpack.c.bf16 %v344, %v342
        %v387 = vpack.c.bf16 %v347, %v345
        %v388 = vpack.c.bf16 %v348, %v346
        %v389 = vpack.c.bf16 %v351, %v349
        %v390 = vpack.c.bf16 %v352, %v350
        %v391 = vpack.c.bf16 %v355, %v353
        %v392 = vpack.c.bf16 %v356, %v354
        %v393 = vpack.c.bf16 %v359, %v357
        %v394 = vpack.c.bf16 %v360, %v358
        %v395 = vpack.c.bf16 %v363, %v361
        %v396 = vpack.c.bf16 %v364, %v362
        %v397 = vld [vmem:[#allocation5] sm:$0xff]
        %v398 = vld [vmem:[#allocation5 + $0x8] sm:$0xff]
        %v399 = vld [vmem:[#allocation5 + $0x10] sm:$0xff]
        %v400 = vld [vmem:[#allocation5 + $0x18] sm:$0xff]
        %v401 = vld [vmem:[#allocation5 + $0x20] sm:$0xff]
        %v402 = vld [vmem:[#allocation5 + $0x28] sm:$0xff]
        %v403 = vld [vmem:[#allocation5 + $0x30] sm:$0xff]
        %v404 = vld [vmem:[#allocation5 + $0x38] sm:$0xff]
        %v405 = vld [vmem:[#allocation5 + $0x40] sm:$0xff]
        %v406 = vld [vmem:[#allocation5 + $0x48] sm:$0xff]
        %v407 = vld [vmem:[#allocation5 + $0x50] sm:$0xff]
        %v408 = vld [vmem:[#allocation5 + $0x58] sm:$0xff]
        %v409 = vld [vmem:[#allocation5 + $0x60] sm:$0xff]
        %v410 = vld [vmem:[#allocation5 + $0x68] sm:$0xff]
        %v411 = vld [vmem:[#allocation5 + $0x70] sm:$0xff]
        %v412 = vld [vmem:[#allocation5 + $0x78] sm:$0xff]
        %v413 = vld [vmem:[#allocation5 + $0x80] sm:$0xff]
        %v414 = vld [vmem:[#allocation5 + $0x88] sm:$0xff]
        %v415 = vld [vmem:[#allocation5 + $0x90] sm:$0xff]
        %v416 = vld [vmem:[#allocation5 + $0x98] sm:$0xff]
        %v417 = vld [vmem:[#allocation5 + $0xa0] sm:$0xff]
        %v418 = vld [vmem:[#allocation5 + $0xa8] sm:$0xff]
        %v419 = vld [vmem:[#allocation5 + $0xb0] sm:$0xff]
        %v420 = vld [vmem:[#allocation5 + $0xb8] sm:$0xff]
        %v421 = vld [vmem:[#allocation5 + $0xc0] sm:$0xff]
        %v422 = vld [vmem:[#allocation5 + $0xc8] sm:$0xff]
        %v423 = vld [vmem:[#allocation5 + $0xd0] sm:$0xff]
        %v424 = vld [vmem:[#allocation5 + $0xd8] sm:$0xff]
        %v425 = vld [vmem:[#allocation5 + $0xe0] sm:$0xff]
        %v426 = vld [vmem:[#allocation5 + $0xe8] sm:$0xff]
        %v427 = vld [vmem:[#allocation5 + $0xf0] sm:$0xff]
        %v428 = vld [vmem:[#allocation5 + $0xf8] sm:$0xff]
        %v429 = vld [vmem:[#allocation5 + $0x100] sm:$0xff]
        %v430 = vld [vmem:[#allocation5 + $0x108] sm:$0xff]
        %v431 = vld [vmem:[#allocation5 + $0x110] sm:$0xff]
        %v432 = vld [vmem:[#allocation5 + $0x118] sm:$0xff]
        %v433 = vld [vmem:[#allocation5 + $0x120] sm:$0xff]
        %v434 = vld [vmem:[#allocation5 + $0x128] sm:$0xff]
        %v435 = vld [vmem:[#allocation5 + $0x130] sm:$0xff]
        %v436 = vld [vmem:[#allocation5 + $0x138] sm:$0xff]
        %v437 = vld [vmem:[#allocation5 + $0x140] sm:$0xff]
        %v438 = vld [vmem:[#allocation5 + $0x148] sm:$0xff]
        %v439 = vld [vmem:[#allocation5 + $0x150] sm:$0xff]
        %v440 = vld [vmem:[#allocation5 + $0x158] sm:$0xff]
        %v441 = vld [vmem:[#allocation5 + $0x160] sm:$0xff]
        %v442 = vld [vmem:[#allocation5 + $0x168] sm:$0xff]
        %v443 = vld [vmem:[#allocation5 + $0x170] sm:$0xff]
        %v444 = vld [vmem:[#allocation5 + $0x178] sm:$0xff]
        %v445 = vld [vmem:[#allocation5 + $0x180] sm:$0xff]
        %v446 = vld [vmem:[#allocation5 + $0x188] sm:$0xff]
        %v447 = vld [vmem:[#allocation5 + $0x190] sm:$0xff]
        %v448 = vld [vmem:[#allocation5 + $0x198] sm:$0xff]
        %v449 = vld [vmem:[#allocation5 + $0x1a0] sm:$0xff]
        %v450 = vld [vmem:[#allocation5 + $0x1a8] sm:$0xff]
        %v451 = vld [vmem:[#allocation5 + $0x1b0] sm:$0xff]
        %v452 = vld [vmem:[#allocation5 + $0x1b8] sm:$0xff]
        %v453 = vld [vmem:[#allocation5 + $0x1c0] sm:$0xff]
        %v454 = vld [vmem:[#allocation5 + $0x1c8] sm:$0xff]
        %v455 = vld [vmem:[#allocation5 + $0x1d0] sm:$0xff]
        %v456 = vld [vmem:[#allocation5 + $0x1d8] sm:$0xff]
        %v457 = vld [vmem:[#allocation5 + $0x1e0] sm:$0xff]
        %v458 = vld [vmem:[#allocation5 + $0x1e8] sm:$0xff]
        %v459 = vld [vmem:[#allocation5 + $0x1f0] sm:$0xff]
        %v460 = vld [vmem:[#allocation5 + $0x1f8] sm:$0xff]
        %v461 = vld [vmem:[#allocation5 + $0x200] sm:$0xff]
        %v462 = vld [vmem:[#allocation5 + $0x208] sm:$0xff]
        %v463 = vld [vmem:[#allocation5 + $0x210] sm:$0xff]
        %v464 = vld [vmem:[#allocation5 + $0x218] sm:$0xff]
        %v465 = vld [vmem:[#allocation5 + $0x220] sm:$0xff]
        %v466 = vld [vmem:[#allocation5 + $0x228] sm:$0xff]
        %v467 = vld [vmem:[#allocation5 + $0x230] sm:$0xff]
        %v468 = vld [vmem:[#allocation5 + $0x238] sm:$0xff]
        %v469 = vld [vmem:[#allocation5 + $0x240] sm:$0xff]
        %v470 = vld [vmem:[#allocation5 + $0x248] sm:$0xff]
        %v471 = vld [vmem:[#allocation5 + $0x250] sm:$0xff]
        %v472 = vld [vmem:[#allocation5 + $0x258] sm:$0xff]
        %v473 = vld [vmem:[#allocation5 + $0x260] sm:$0xff]
        %v474 = vld [vmem:[#allocation5 + $0x268] sm:$0xff]
        %v475 = vld [vmem:[#allocation5 + $0x270] sm:$0xff]
        %v476 = vld [vmem:[#allocation5 + $0x278] sm:$0xff]
        %v477 = vld [vmem:[#allocation5 + $0x280] sm:$0xff]
        %v478 = vld [vmem:[#allocation5 + $0x288] sm:$0xff]
        %v479 = vld [vmem:[#allocation5 + $0x290] sm:$0xff]
        %v480 = vld [vmem:[#allocation5 + $0x298] sm:$0xff]
        %v481 = vld [vmem:[#allocation5 + $0x2a0] sm:$0xff]
        %v482 = vld [vmem:[#allocation5 + $0x2a8] sm:$0xff]
        %v483 = vld [vmem:[#allocation5 + $0x2b0] sm:$0xff]
        %v484 = vld [vmem:[#allocation5 + $0x2b8] sm:$0xff]
        %v485 = vld [vmem:[#allocation5 + $0x2c0] sm:$0xff]
        %v486 = vld [vmem:[#allocation5 + $0x2c8] sm:$0xff]
        %v487 = vld [vmem:[#allocation5 + $0x2d0] sm:$0xff]
        %v488 = vld [vmem:[#allocation5 + $0x2d8] sm:$0xff]
        %v489 = vld [vmem:[#allocation5 + $0x2e0] sm:$0xff]
        %v490 = vld [vmem:[#allocation5 + $0x2e8] sm:$0xff]
        %v491 = vld [vmem:[#allocation5 + $0x2f0] sm:$0xff]
        %v492 = vld [vmem:[#allocation5 + $0x2f8] sm:$0xff]
        %v493 = vld [vmem:[#allocation5 + $0x300] sm:$0xff]
        %v494 = vld [vmem:[#allocation5 + $0x308] sm:$0xff]
        %v495 = vld [vmem:[#allocation5 + $0x310] sm:$0xff]
        %v496 = vld [vmem:[#allocation5 + $0x318] sm:$0xff]
        %v497 = vld [vmem:[#allocation5 + $0x320] sm:$0xff]
        %v498 = vld [vmem:[#allocation5 + $0x328] sm:$0xff]
        %v499 = vld [vmem:[#allocation5 + $0x330] sm:$0xff]
        %v500 = vld [vmem:[#allocation5 + $0x338] sm:$0xff]
        %v501 = vld [vmem:[#allocation5 + $0x340] sm:$0xff]
        %v502 = vld [vmem:[#allocation5 + $0x348] sm:$0xff]
        %v503 = vld [vmem:[#allocation5 + $0x350] sm:$0xff]
        %v504 = vld [vmem:[#allocation5 + $0x358] sm:$0xff]
        %v505 = vld [vmem:[#allocation5 + $0x360] sm:$0xff]
        %v506 = vld [vmem:[#allocation5 + $0x368] sm:$0xff]
        %v507 = vld [vmem:[#allocation5 + $0x370] sm:$0xff]
        %v508 = vld [vmem:[#allocation5 + $0x378] sm:$0xff]
        %v509 = vld [vmem:[#allocation5 + $0x380] sm:$0xff]
        %v510 = vld [vmem:[#allocation5 + $0x388] sm:$0xff]
        %v511 = vld [vmem:[#allocation5 + $0x390] sm:$0xff]
        %v512 = vld [vmem:[#allocation5 + $0x398] sm:$0xff]
        %v513 = vld [vmem:[#allocation5 + $0x3a0] sm:$0xff]
        %v514 = vld [vmem:[#allocation5 + $0x3a8] sm:$0xff]
        %v515 = vld [vmem:[#allocation5 + $0x3b0] sm:$0xff]
        %v516 = vld [vmem:[#allocation5 + $0x3b8] sm:$0xff]
        %v517 = vld [vmem:[#allocation5 + $0x3c0] sm:$0xff]
        %v518 = vld [vmem:[#allocation5 + $0x3c8] sm:$0xff]
        %v519 = vld [vmem:[#allocation5 + $0x3d0] sm:$0xff]
        %v520 = vld [vmem:[#allocation5 + $0x3d8] sm:$0xff]
        %v521 = vld [vmem:[#allocation5 + $0x3e0] sm:$0xff]
        %v522 = vld [vmem:[#allocation5 + $0x3e8] sm:$0xff]
        %v523 = vld [vmem:[#allocation5 + $0x3f0] sm:$0xff]
        %v524 = vld [vmem:[#allocation5 + $0x3f8] sm:$0xff]
        %v525 = vld [vmem:[#allocation7] sm:$0xff]
        %v526 = vld [vmem:[#allocation7 + $0x8] sm:$0xff]
        %v527 = vld [vmem:[#allocation7 + $0x10] sm:$0xff]
        %v528 = vld [vmem:[#allocation7 + $0x18] sm:$0xff]
        %v529 = vld [vmem:[#allocation7 + $0x20] sm:$0xff]
        %v530 = vld [vmem:[#allocation7 + $0x28] sm:$0xff]
        %v531 = vld [vmem:[#allocation7 + $0x30] sm:$0xff]
        %v532 = vld [vmem:[#allocation7 + $0x38] sm:$0xff]
        %v533 = vld [vmem:[#allocation7 + $0x40] sm:$0xff]
        %v534 = vld [vmem:[#allocation7 + $0x48] sm:$0xff]
        %v535 = vld [vmem:[#allocation7 + $0x50] sm:$0xff]
        %v536 = vld [vmem:[#allocation7 + $0x58] sm:$0xff]
        %v537 = vld [vmem:[#allocation7 + $0x60] sm:$0xff]
        %v538 = vld [vmem:[#allocation7 + $0x68] sm:$0xff]
        %v539 = vld [vmem:[#allocation7 + $0x70] sm:$0xff]
        %v540 = vld [vmem:[#allocation7 + $0x78] sm:$0xff]
        %v541 = vld [vmem:[#allocation7 + $0x80] sm:$0xff]
        %v542 = vld [vmem:[#allocation7 + $0x88] sm:$0xff]
        %v543 = vld [vmem:[#allocation7 + $0x90] sm:$0xff]
        %v544 = vld [vmem:[#allocation7 + $0x98] sm:$0xff]
        %v545 = vld [vmem:[#allocation7 + $0xa0] sm:$0xff]
        %v546 = vld [vmem:[#allocation7 + $0xa8] sm:$0xff]
        %v547 = vld [vmem:[#allocation7 + $0xb0] sm:$0xff]
        %v548 = vld [vmem:[#allocation7 + $0xb8] sm:$0xff]
        %v549 = vld [vmem:[#allocation7 + $0xc0] sm:$0xff]
        %v550 = vld [vmem:[#allocation7 + $0xc8] sm:$0xff]
        %v551 = vld [vmem:[#allocation7 + $0xd0] sm:$0xff]
        %v552 = vld [vmem:[#allocation7 + $0xd8] sm:$0xff]
        %v553 = vld [vmem:[#allocation7 + $0xe0] sm:$0xff]
        %v554 = vld [vmem:[#allocation7 + $0xe8] sm:$0xff]
        %v555 = vld [vmem:[#allocation7 + $0xf0] sm:$0xff]
        %v556 = vld [vmem:[#allocation7 + $0xf8] sm:$0xff]
        %v557 = vld [vmem:[#allocation7 + $0x100] sm:$0xff]
        %v558 = vld [vmem:[#allocation7 + $0x108] sm:$0xff]
        %v559 = vld [vmem:[#allocation7 + $0x110] sm:$0xff]
        %v560 = vld [vmem:[#allocation7 + $0x118] sm:$0xff]
        %v561 = vld [vmem:[#allocation7 + $0x120] sm:$0xff]
        %v562 = vld [vmem:[#allocation7 + $0x128] sm:$0xff]
        %v563 = vld [vmem:[#allocation7 + $0x130] sm:$0xff]
        %v564 = vld [vmem:[#allocation7 + $0x138] sm:$0xff]
        %v565 = vld [vmem:[#allocation7 + $0x140] sm:$0xff]
        %v566 = vld [vmem:[#allocation7 + $0x148] sm:$0xff]
        %v567 = vld [vmem:[#allocation7 + $0x150] sm:$0xff]
        %v568 = vld [vmem:[#allocation7 + $0x158] sm:$0xff]
        %v569 = vld [vmem:[#allocation7 + $0x160] sm:$0xff]
        %v570 = vld [vmem:[#allocation7 + $0x168] sm:$0xff]
        %v571 = vld [vmem:[#allocation7 + $0x170] sm:$0xff]
        %v572 = vld [vmem:[#allocation7 + $0x178] sm:$0xff]
        %v573 = vld [vmem:[#allocation7 + $0x180] sm:$0xff]
        %v574 = vld [vmem:[#allocation7 + $0x188] sm:$0xff]
        %v575 = vld [vmem:[#allocation7 + $0x190] sm:$0xff]
        %v576 = vld [vmem:[#allocation7 + $0x198] sm:$0xff]
        %v577 = vld [vmem:[#allocation7 + $0x1a0] sm:$0xff]
        %v578 = vld [vmem:[#allocation7 + $0x1a8] sm:$0xff]
        %v579 = vld [vmem:[#allocation7 + $0x1b0] sm:$0xff]
        %v580 = vld [vmem:[#allocation7 + $0x1b8] sm:$0xff]
        %v581 = vld [vmem:[#allocation7 + $0x1c0] sm:$0xff]
        %v582 = vld [vmem:[#allocation7 + $0x1c8] sm:$0xff]
        %v583 = vld [vmem:[#allocation7 + $0x1d0] sm:$0xff]
        %v584 = vld [vmem:[#allocation7 + $0x1d8] sm:$0xff]
        %v585 = vld [vmem:[#allocation7 + $0x1e0] sm:$0xff]
        %v586 = vld [vmem:[#allocation7 + $0x1e8] sm:$0xff]
        %v587 = vld [vmem:[#allocation7 + $0x1f0] sm:$0xff]
        %v588 = vld [vmem:[#allocation7 + $0x1f8] sm:$0xff]
        %v589 = vld [vmem:[#allocation7 + $0x200] sm:$0xff]
        %v590 = vld [vmem:[#allocation7 + $0x208] sm:$0xff]
        %v591 = vld [vmem:[#allocation7 + $0x210] sm:$0xff]
        %v592 = vld [vmem:[#allocation7 + $0x218] sm:$0xff]
        %v593 = vld [vmem:[#allocation7 + $0x220] sm:$0xff]
        %v594 = vld [vmem:[#allocation7 + $0x228] sm:$0xff]
        %v595 = vld [vmem:[#allocation7 + $0x230] sm:$0xff]
        %v596 = vld [vmem:[#allocation7 + $0x238] sm:$0xff]
        %v597 = vld [vmem:[#allocation7 + $0x240] sm:$0xff]
        %v598 = vld [vmem:[#allocation7 + $0x248] sm:$0xff]
        %v599 = vld [vmem:[#allocation7 + $0x250] sm:$0xff]
        %v600 = vld [vmem:[#allocation7 + $0x258] sm:$0xff]
        %v601 = vld [vmem:[#allocation7 + $0x260] sm:$0xff]
        %v602 = vld [vmem:[#allocation7 + $0x268] sm:$0xff]
        %v603 = vld [vmem:[#allocation7 + $0x270] sm:$0xff]
        %v604 = vld [vmem:[#allocation7 + $0x278] sm:$0xff]
        %v605 = vld [vmem:[#allocation7 + $0x280] sm:$0xff]
        %v606 = vld [vmem:[#allocation7 + $0x288] sm:$0xff]
        %v607 = vld [vmem:[#allocation7 + $0x290] sm:$0xff]
        %v608 = vld [vmem:[#allocation7 + $0x298] sm:$0xff]
        %v609 = vld [vmem:[#allocation7 + $0x2a0] sm:$0xff]
        %v610 = vld [vmem:[#allocation7 + $0x2a8] sm:$0xff]
        %v611 = vld [vmem:[#allocation7 + $0x2b0] sm:$0xff]
        %v612 = vld [vmem:[#allocation7 + $0x2b8] sm:$0xff]
        %v613 = vld [vmem:[#allocation7 + $0x2c0] sm:$0xff]
        %v614 = vld [vmem:[#allocation7 + $0x2c8] sm:$0xff]
        %v615 = vld [vmem:[#allocation7 + $0x2d0] sm:$0xff]
        %v616 = vld [vmem:[#allocation7 + $0x2d8] sm:$0xff]
        %v617 = vld [vmem:[#allocation7 + $0x2e0] sm:$0xff]
        %v618 = vld [vmem:[#allocation7 + $0x2e8] sm:$0xff]
        %v619 = vld [vmem:[#allocation7 + $0x2f0] sm:$0xff]
        %v620 = vld [vmem:[#allocation7 + $0x2f8] sm:$0xff]
        %v621 = vld [vmem:[#allocation7 + $0x300] sm:$0xff]
        %v622 = vld [vmem:[#allocation7 + $0x308] sm:$0xff]
        %v623 = vld [vmem:[#allocation7 + $0x310] sm:$0xff]
        %v624 = vld [vmem:[#allocation7 + $0x318] sm:$0xff]
        %v625 = vld [vmem:[#allocation7 + $0x320] sm:$0xff]
        %v626 = vld [vmem:[#allocation7 + $0x328] sm:$0xff]
        %v627 = vld [vmem:[#allocation7 + $0x330] sm:$0xff]
        %v628 = vld [vmem:[#allocation7 + $0x338] sm:$0xff]
        %v629 = vld [vmem:[#allocation7 + $0x340] sm:$0xff]
        %v630 = vld [vmem:[#allocation7 + $0x348] sm:$0xff]
        %v631 = vld [vmem:[#allocation7 + $0x350] sm:$0xff]
        %v632 = vld [vmem:[#allocation7 + $0x358] sm:$0xff]
        %v633 = vld [vmem:[#allocation7 + $0x360] sm:$0xff]
        %v634 = vld [vmem:[#allocation7 + $0x368] sm:$0xff]
        %v635 = vld [vmem:[#allocation7 + $0x370] sm:$0xff]
        %v636 = vld [vmem:[#allocation7 + $0x378] sm:$0xff]
        %v637 = vld [vmem:[#allocation7 + $0x380] sm:$0xff]
        %v638 = vld [vmem:[#allocation7 + $0x388] sm:$0xff]
        %v639 = vld [vmem:[#allocation7 + $0x390] sm:$0xff]
        %v640 = vld [vmem:[#allocation7 + $0x398] sm:$0xff]
        %v641 = vld [vmem:[#allocation7 + $0x3a0] sm:$0xff]
        %v642 = vld [vmem:[#allocation7 + $0x3a8] sm:$0xff]
        %v643 = vld [vmem:[#allocation7 + $0x3b0] sm:$0xff]
        %v644 = vld [vmem:[#allocation7 + $0x3b8] sm:$0xff]
        %v645 = vld [vmem:[#allocation7 + $0x3c0] sm:$0xff]
        %v646 = vld [vmem:[#allocation7 + $0x3c8] sm:$0xff]
        %v647 = vld [vmem:[#allocation7 + $0x3d0] sm:$0xff]
        %v648 = vld [vmem:[#allocation7 + $0x3d8] sm:$0xff]
        %v649 = vld [vmem:[#allocation7 + $0x3e0] sm:$0xff]
        %v650 = vld [vmem:[#allocation7 + $0x3e8] sm:$0xff]
        %v651 = vld [vmem:[#allocation7 + $0x3f0] sm:$0xff]
        %v652 = vld [vmem:[#allocation7 + $0x3f8] sm:$0xff]
        %v781 = vunpack.c.l.b16 %v397
        %v782 = vunpack.c.h.b16 %v397
        %v783 = vunpack.c.l.b16 %v398
        %v784 = vunpack.c.h.b16 %v398
        %v785 = vunpack.c.l.b16 %v399
        %v786 = vunpack.c.h.b16 %v399
        %v787 = vunpack.c.l.b16 %v400
        %v788 = vunpack.c.h.b16 %v400
        %v789 = vunpack.c.l.b16 %v401
        %v790 = vunpack.c.h.b16 %v401
        %v791 = vunpack.c.l.b16 %v402
        %v792 = vunpack.c.h.b16 %v402
        %v793 = vunpack.c.l.b16 %v403
        %v794 = vunpack.c.h.b16 %v403
        %v795 = vunpack.c.l.b16 %v404
        %v796 = vunpack.c.h.b16 %v404
        %v797 = vunpack.c.l.b16 %v405
        %v798 = vunpack.c.h.b16 %v405
        %v799 = vunpack.c.l.b16 %v406
        %v800 = vunpack.c.h.b16 %v406
        %v801 = vunpack.c.l.b16 %v407
        %v802 = vunpack.c.h.b16 %v407
        %v803 = vunpack.c.l.b16 %v408
        %v804 = vunpack.c.h.b16 %v408
        %v805 = vunpack.c.l.b16 %v409
        %v806 = vunpack.c.h.b16 %v409
        %v807 = vunpack.c.l.b16 %v410
        %v808 = vunpack.c.h.b16 %v410
        %v809 = vunpack.c.l.b16 %v411
        %v810 = vunpack.c.h.b16 %v411
        %v811 = vunpack.c.l.b16 %v412
        %v812 = vunpack.c.h.b16 %v412
        %v813 = vunpack.c.l.b16 %v413
        %v814 = vunpack.c.h.b16 %v413
        %v815 = vunpack.c.l.b16 %v414
        %v816 = vunpack.c.h.b16 %v414
        %v817 = vunpack.c.l.b16 %v415
        %v818 = vunpack.c.h.b16 %v415
        %v819 = vunpack.c.l.b16 %v416
        %v820 = vunpack.c.h.b16 %v416
        %v821 = vunpack.c.l.b16 %v417
        %v822 = vunpack.c.h.b16 %v417
        %v823 = vunpack.c.l.b16 %v418
        %v824 = vunpack.c.h.b16 %v418
        %v825 = vunpack.c.l.b16 %v419
        %v826 = vunpack.c.h.b16 %v419
        %v827 = vunpack.c.l.b16 %v420
        %v828 = vunpack.c.h.b16 %v420
        %v829 = vunpack.c.l.b16 %v421
        %v830 = vunpack.c.h.b16 %v421
        %v831 = vunpack.c.l.b16 %v422
        %v832 = vunpack.c.h.b16 %v422
        %v833 = vunpack.c.l.b16 %v423
        %v834 = vunpack.c.h.b16 %v423
        %v835 = vunpack.c.l.b16 %v424
        %v836 = vunpack.c.h.b16 %v424
        %v837 = vunpack.c.l.b16 %v425
        %v838 = vunpack.c.h.b16 %v425
        %v839 = vunpack.c.l.b16 %v426
        %v840 = vunpack.c.h.b16 %v426
        %v841 = vunpack.c.l.b16 %v427
        %v842 = vunpack.c.h.b16 %v427
        %v843 = vunpack.c.l.b16 %v428
        %v844 = vunpack.c.h.b16 %v428
        %v845 = vunpack.c.l.b16 %v429
        %v846 = vunpack.c.h.b16 %v429
        %v847 = vunpack.c.l.b16 %v430
        %v848 = vunpack.c.h.b16 %v430
        %v849 = vunpack.c.l.b16 %v431
        %v850 = vunpack.c.h.b16 %v431
        %v851 = vunpack.c.l.b16 %v432
        %v852 = vunpack.c.h.b16 %v432
        %v853 = vunpack.c.l.b16 %v433
        %v854 = vunpack.c.h.b16 %v433
        %v855 = vunpack.c.l.b16 %v434
        %v856 = vunpack.c.h.b16 %v434
        %v857 = vunpack.c.l.b16 %v435
        %v858 = vunpack.c.h.b16 %v435
        %v859 = vunpack.c.l.b16 %v436
        %v860 = vunpack.c.h.b16 %v436
        %v861 = vunpack.c.l.b16 %v437
        %v862 = vunpack.c.h.b16 %v437
        %v863 = vunpack.c.l.b16 %v438
        %v864 = vunpack.c.h.b16 %v438
        %v865 = vunpack.c.l.b16 %v439
        %v866 = vunpack.c.h.b16 %v439
        %v867 = vunpack.c.l.b16 %v440
        %v868 = vunpack.c.h.b16 %v440
        %v869 = vunpack.c.l.b16 %v441
        %v870 = vunpack.c.h.b16 %v441
        %v871 = vunpack.c.l.b16 %v442
        %v872 = vunpack.c.h.b16 %v442
        %v873 = vunpack.c.l.b16 %v443
        %v874 = vunpack.c.h.b16 %v443
        %v875 = vunpack.c.l.b16 %v444
        %v876 = vunpack.c.h.b16 %v444
        %v877 = vunpack.c.l.b16 %v445
        %v878 = vunpack.c.h.b16 %v445
        %v879 = vunpack.c.l.b16 %v446
        %v880 = vunpack.c.h.b16 %v446
        %v881 = vunpack.c.l.b16 %v447
        %v882 = vunpack.c.h.b16 %v447
        %v883 = vunpack.c.l.b16 %v448
        %v884 = vunpack.c.h.b16 %v448
        %v885 = vunpack.c.l.b16 %v449
        %v886 = vunpack.c.h.b16 %v449
        %v887 = vunpack.c.l.b16 %v450
        %v888 = vunpack.c.h.b16 %v450
        %v889 = vunpack.c.l.b16 %v451
        %v890 = vunpack.c.h.b16 %v451
        %v891 = vunpack.c.l.b16 %v452
        %v892 = vunpack.c.h.b16 %v452
        %v893 = vunpack.c.l.b16 %v453
        %v894 = vunpack.c.h.b16 %v453
        %v895 = vunpack.c.l.b16 %v454
        %v896 = vunpack.c.h.b16 %v454
        %v897 = vunpack.c.l.b16 %v455
        %v898 = vunpack.c.h.b16 %v455
        %v899 = vunpack.c.l.b16 %v456
        %v900 = vunpack.c.h.b16 %v456
        %v901 = vunpack.c.l.b16 %v457
        %v902 = vunpack.c.h.b16 %v457
        %v903 = vunpack.c.l.b16 %v458
        %v904 = vunpack.c.h.b16 %v458
        %v905 = vunpack.c.l.b16 %v459
        %v906 = vunpack.c.h.b16 %v459
        %v907 = vunpack.c.l.b16 %v460
        %v908 = vunpack.c.h.b16 %v460
        %v909 = vunpack.c.l.b16 %v461
        %v910 = vunpack.c.h.b16 %v461
        %v911 = vunpack.c.l.b16 %v462
        %v912 = vunpack.c.h.b16 %v462
        %v913 = vunpack.c.l.b16 %v463
        %v914 = vunpack.c.h.b16 %v463
        %v915 = vunpack.c.l.b16 %v464
        %v916 = vunpack.c.h.b16 %v464
        %v917 = vunpack.c.l.b16 %v465
        %v918 = vunpack.c.h.b16 %v465
        %v919 = vunpack.c.l.b16 %v466
        %v920 = vunpack.c.h.b16 %v466
        %v921 = vunpack.c.l.b16 %v467
        %v922 = vunpack.c.h.b16 %v467
        %v923 = vunpack.c.l.b16 %v468
        %v924 = vunpack.c.h.b16 %v468
        %v925 = vunpack.c.l.b16 %v469
        %v926 = vunpack.c.h.b16 %v469
        %v927 = vunpack.c.l.b16 %v470
        %v928 = vunpack.c.h.b16 %v470
        %v929 = vunpack.c.l.b16 %v471
        %v930 = vunpack.c.h.b16 %v471
        %v931 = vunpack.c.l.b16 %v472
        %v932 = vunpack.c.h.b16 %v472
        %v933 = vunpack.c.l.b16 %v473
        %v934 = vunpack.c.h.b16 %v473
        %v935 = vunpack.c.l.b16 %v474
        %v936 = vunpack.c.h.b16 %v474
        %v937 = vunpack.c.l.b16 %v475
        %v938 = vunpack.c.h.b16 %v475
        %v939 = vunpack.c.l.b16 %v476
        %v940 = vunpack.c.h.b16 %v476
        %v941 = vunpack.c.l.b16 %v477
        %v942 = vunpack.c.h.b16 %v477
        %v943 = vunpack.c.l.b16 %v478
        %v944 = vunpack.c.h.b16 %v478
        %v945 = vunpack.c.l.b16 %v479
        %v946 = vunpack.c.h.b16 %v479
        %v947 = vunpack.c.l.b16 %v480
        %v948 = vunpack.c.h.b16 %v480
        %v949 = vunpack.c.l.b16 %v481
        %v950 = vunpack.c.h.b16 %v481
        %v951 = vunpack.c.l.b16 %v482
        %v952 = vunpack.c.h.b16 %v482
        %v953 = vunpack.c.l.b16 %v483
        %v954 = vunpack.c.h.b16 %v483
        %v955 = vunpack.c.l.b16 %v484
        %v956 = vunpack.c.h.b16 %v484
        %v957 = vunpack.c.l.b16 %v485
        %v958 = vunpack.c.h.b16 %v485
        %v959 = vunpack.c.l.b16 %v486
        %v960 = vunpack.c.h.b16 %v486
        %v961 = vunpack.c.l.b16 %v487
        %v962 = vunpack.c.h.b16 %v487
        %v963 = vunpack.c.l.b16 %v488
        %v964 = vunpack.c.h.b16 %v488
        %v965 = vunpack.c.l.b16 %v489
        %v966 = vunpack.c.h.b16 %v489
        %v967 = vunpack.c.l.b16 %v490
        %v968 = vunpack.c.h.b16 %v490
        %v969 = vunpack.c.l.b16 %v491
        %v970 = vunpack.c.h.b16 %v491
        %v971 = vunpack.c.l.b16 %v492
        %v972 = vunpack.c.h.b16 %v492
        %v973 = vunpack.c.l.b16 %v493
        %v974 = vunpack.c.h.b16 %v493
        %v975 = vunpack.c.l.b16 %v494
        %v976 = vunpack.c.h.b16 %v494
        %v977 = vunpack.c.l.b16 %v495
        %v978 = vunpack.c.h.b16 %v495
        %v979 = vunpack.c.l.b16 %v496
        %v980 = vunpack.c.h.b16 %v496
        %v981 = vunpack.c.l.b16 %v497
        %v982 = vunpack.c.h.b16 %v497
        %v983 = vunpack.c.l.b16 %v498
        %v984 = vunpack.c.h.b16 %v498
        %v985 = vunpack.c.l.b16 %v499
        %v986 = vunpack.c.h.b16 %v499
        %v987 = vunpack.c.l.b16 %v500
        %v988 = vunpack.c.h.b16 %v500
        %v989 = vunpack.c.l.b16 %v501
        %v990 = vunpack.c.h.b16 %v501
        %v991 = vunpack.c.l.b16 %v502
        %v992 = vunpack.c.h.b16 %v502
        %v993 = vunpack.c.l.b16 %v503
        %v994 = vunpack.c.h.b16 %v503
        %v995 = vunpack.c.l.b16 %v504
        %v996 = vunpack.c.h.b16 %v504
        %v997 = vunpack.c.l.b16 %v505
        %v998 = vunpack.c.h.b16 %v505
        %v999 = vunpack.c.l.b16 %v506
        %v1000 = vunpack.c.h.b16 %v506
        %v1001 = vunpack.c.l.b16 %v507
        %v1002 = vunpack.c.h.b16 %v507
        %v1003 = vunpack.c.l.b16 %v508
        %v1004 = vunpack.c.h.b16 %v508
        %v1005 = vunpack.c.l.b16 %v509
        %v1006 = vunpack.c.h.b16 %v509
        %v1007 = vunpack.c.l.b16 %v510
        %v1008 = vunpack.c.h.b16 %v510
        %v1009 = vunpack.c.l.b16 %v511
        %v1010 = vunpack.c.h.b16 %v511
        %v1011 = vunpack.c.l.b16 %v512
        %v1012 = vunpack.c.h.b16 %v512
        %v1013 = vunpack.c.l.b16 %v513
        %v1014 = vunpack.c.h.b16 %v513
        %v1015 = vunpack.c.l.b16 %v514
        %v1016 = vunpack.c.h.b16 %v514
        %v1017 = vunpack.c.l.b16 %v515
        %v1018 = vunpack.c.h.b16 %v515
        %v1019 = vunpack.c.l.b16 %v516
        %v1020 = vunpack.c.h.b16 %v516
        %v1021 = vunpack.c.l.b16 %v517
        %v1022 = vunpack.c.h.b16 %v517
        %v1023 = vunpack.c.l.b16 %v518
        %v1024 = vunpack.c.h.b16 %v518
        %v1025 = vunpack.c.l.b16 %v519
        %v1026 = vunpack.c.h.b16 %v519
        %v1027 = vunpack.c.l.b16 %v520
        %v1028 = vunpack.c.h.b16 %v520
        %v1029 = vunpack.c.l.b16 %v521
        %v1030 = vunpack.c.h.b16 %v521
        %v1031 = vunpack.c.l.b16 %v522
        %v1032 = vunpack.c.h.b16 %v522
        %v1033 = vunpack.c.l.b16 %v523
        %v1034 = vunpack.c.h.b16 %v523
        %v1035 = vunpack.c.l.b16 %v524
        %v1036 = vunpack.c.h.b16 %v524
        %v1037 = vpack.c.b16 %v789, %v781
        %v1038 = vpack.c.b16 %v790, %v782
        %v1039 = vpack.c.b16 %v791, %v783
        %v1040 = vpack.c.b16 %v792, %v784
        %v1041 = vpack.c.b16 %v793, %v785
        %v1042 = vpack.c.b16 %v794, %v786
        %v1043 = vpack.c.b16 %v795, %v787
        %v1044 = vpack.c.b16 %v796, %v788
        %v1045 = vpack.c.b16 %v805, %v797
        %v1046 = vpack.c.b16 %v806, %v798
        %v1047 = vpack.c.b16 %v807, %v799
        %v1048 = vpack.c.b16 %v808, %v800
        %v1049 = vpack.c.b16 %v809, %v801
        %v1050 = vpack.c.b16 %v810, %v802
        %v1051 = vpack.c.b16 %v811, %v803
        %v1052 = vpack.c.b16 %v812, %v804
        %v1053 = vpack.c.b16 %v821, %v813
        %v1054 = vpack.c.b16 %v822, %v814
        %v1055 = vpack.c.b16 %v823, %v815
        %v1056 = vpack.c.b16 %v824, %v816
        %v1057 = vpack.c.b16 %v825, %v817
        %v1058 = vpack.c.b16 %v826, %v818
        %v1059 = vpack.c.b16 %v827, %v819
        %v1060 = vpack.c.b16 %v828, %v820
        %v1061 = vpack.c.b16 %v837, %v829
        %v1062 = vpack.c.b16 %v838, %v830
        %v1063 = vpack.c.b16 %v839, %v831
        %v1064 = vpack.c.b16 %v840, %v832
        %v1065 = vpack.c.b16 %v841, %v833
        %v1066 = vpack.c.b16 %v842, %v834
        %v1067 = vpack.c.b16 %v843, %v835
        %v1068 = vpack.c.b16 %v844, %v836
        %v1069 = vpack.c.b16 %v853, %v845
        %v1070 = vpack.c.b16 %v854, %v846
        %v1071 = vpack.c.b16 %v855, %v847
        %v1072 = vpack.c.b16 %v856, %v848
        %v1073 = vpack.c.b16 %v857, %v849
        %v1074 = vpack.c.b16 %v858, %v850
        %v1075 = vpack.c.b16 %v859, %v851
        %v1076 = vpack.c.b16 %v860, %v852
        %v1077 = vpack.c.b16 %v869, %v861
        %v1078 = vpack.c.b16 %v870, %v862
        %v1079 = vpack.c.b16 %v871, %v863
        %v1080 = vpack.c.b16 %v872, %v864
        %v1081 = vpack.c.b16 %v873, %v865
        %v1082 = vpack.c.b16 %v874, %v866
        %v1083 = vpack.c.b16 %v875, %v867
        %v1084 = vpack.c.b16 %v876, %v868
        %v1085 = vpack.c.b16 %v885, %v877
        %v1086 = vpack.c.b16 %v886, %v878
        %v1087 = vpack.c.b16 %v887, %v879
        %v1088 = vpack.c.b16 %v888, %v880
        %v1089 = vpack.c.b16 %v889, %v881
        %v1090 = vpack.c.b16 %v890, %v882
        %v1091 = vpack.c.b16 %v891, %v883
        %v1092 = vpack.c.b16 %v892, %v884
        %v1093 = vpack.c.b16 %v901, %v893
        %v1094 = vpack.c.b16 %v902, %v894
        %v1095 = vpack.c.b16 %v903, %v895
        %v1096 = vpack.c.b16 %v904, %v896
        %v1097 = vpack.c.b16 %v905, %v897
        %v1098 = vpack.c.b16 %v906, %v898
        %v1099 = vpack.c.b16 %v907, %v899
        %v1100 = vpack.c.b16 %v908, %v900
        %v1101 = vpack.c.b16 %v917, %v909
        %v1102 = vpack.c.b16 %v918, %v910
        %v1103 = vpack.c.b16 %v919, %v911
        %v1104 = vpack.c.b16 %v920, %v912
        %v1105 = vpack.c.b16 %v921, %v913
        %v1106 = vpack.c.b16 %v922, %v914
        %v1107 = vpack.c.b16 %v923, %v915
        %v1108 = vpack.c.b16 %v924, %v916
        %v1109 = vpack.c.b16 %v933, %v925
        %v1110 = vpack.c.b16 %v934, %v926
        %v1111 = vpack.c.b16 %v935, %v927
        %v1112 = vpack.c.b16 %v936, %v928
        %v1113 = vpack.c.b16 %v937, %v929
        %v1114 = vpack.c.b16 %v938, %v930
        %v1115 = vpack.c.b16 %v939, %v931
        %v1116 = vpack.c.b16 %v940, %v932
        %v1117 = vpack.c.b16 %v949, %v941
        %v1118 = vpack.c.b16 %v950, %v942
        %v1119 = vpack.c.b16 %v951, %v943
        %v1120 = vpack.c.b16 %v952, %v944
        %v1121 = vpack.c.b16 %v953, %v945
        %v1122 = vpack.c.b16 %v954, %v946
        %v1123 = vpack.c.b16 %v955, %v947
        %v1124 = vpack.c.b16 %v956, %v948
        %v1125 = vpack.c.b16 %v965, %v957
        %v1126 = vpack.c.b16 %v966, %v958
        %v1127 = vpack.c.b16 %v967, %v959
        %v1128 = vpack.c.b16 %v968, %v960
        %v1129 = vpack.c.b16 %v969, %v961
        %v1130 = vpack.c.b16 %v970, %v962
        %v1131 = vpack.c.b16 %v971, %v963
        %v1132 = vpack.c.b16 %v972, %v964
        %v1133 = vpack.c.b16 %v981, %v973
        %v1134 = vpack.c.b16 %v982, %v974
        %v1135 = vpack.c.b16 %v983, %v975
        %v1136 = vpack.c.b16 %v984, %v976
        %v1137 = vpack.c.b16 %v985, %v977
        %v1138 = vpack.c.b16 %v986, %v978
        %v1139 = vpack.c.b16 %v987, %v979
        %v1140 = vpack.c.b16 %v988, %v980
        %v1141 = vpack.c.b16 %v997, %v989
        %v1142 = vpack.c.b16 %v998, %v990
        %v1143 = vpack.c.b16 %v999, %v991
        %v1144 = vpack.c.b16 %v1000, %v992
        %v1145 = vpack.c.b16 %v1001, %v993
        %v1146 = vpack.c.b16 %v1002, %v994
        %v1147 = vpack.c.b16 %v1003, %v995
        %v1148 = vpack.c.b16 %v1004, %v996
        %v1149 = vpack.c.b16 %v1013, %v1005
        %v1150 = vpack.c.b16 %v1014, %v1006
        %v1151 = vpack.c.b16 %v1015, %v1007
        %v1152 = vpack.c.b16 %v1016, %v1008
        %v1153 = vpack.c.b16 %v1017, %v1009
        %v1154 = vpack.c.b16 %v1018, %v1010
        %v1155 = vpack.c.b16 %v1019, %v1011
        %v1156 = vpack.c.b16 %v1020, %v1012
        %v1157 = vpack.c.b16 %v1029, %v1021
        %v1158 = vpack.c.b16 %v1030, %v1022
        %v1159 = vpack.c.b16 %v1031, %v1023
        %v1160 = vpack.c.b16 %v1032, %v1024
        %v1161 = vpack.c.b16 %v1033, %v1025
        %v1162 = vpack.c.b16 %v1034, %v1026
        %v1163 = vpack.c.b16 %v1035, %v1027
        %v1164 = vpack.c.b16 %v1036, %v1028
        %1293 = vmatprep.subr.bf16.mxu0 %v1094
        %1294 = vmatpush1.bf16.msra.mxu0 %v1093
        %1295 = vmatprep.subr.bf16.mxu0 %v1086
        %1296 = vmatpush1.bf16.msra.mxu0 %v1085
        %1297 = vmatprep.subr.bf16.mxu0 %v1078
        %1298 = vmatpush1.bf16.msra.mxu0 %v1077
        %1299 = vmatprep.subr.bf16.mxu0 %v1070
        %1300 = vmatpush1.bf16.msra.mxu0 %v1069
        %1301 = vmatprep.subr.bf16.mxu0 %v1062
        %1302 = vmatpush1.bf16.msra.mxu0 %v1061
        %1303 = vmatprep.subr.bf16.mxu0 %v1054
        %1304 = vmatpush1.bf16.msra.mxu0 %v1053
        %1305 = vmatprep.subr.bf16.mxu0 %v1046
        %1306 = vmatpush1.bf16.msra.mxu0 %v1045
        %1307 = vmatprep.subr.bf16.mxu0 %v1038
        %1308 = vmatpush1.bf16.msra.mxu0 %v1037
        %1309 = vmatprep.subr.bf16.mxu0 %v1158
        %1310 = vmatpush2.bf16.msra.mxu0 %v1157
        %1311 = vmatprep.subr.bf16.mxu0 %v1150
        %1312 = vmatpush2.bf16.msra.mxu0 %v1149
        %1313 = vmatprep.subr.bf16.mxu0 %v1142
        %1314 = vmatpush2.bf16.msra.mxu0 %v1141
        %1315 = vmatprep.subr.bf16.mxu0 %v1134
        %1316 = vmatpush2.bf16.msra.mxu0 %v1133
        %1317 = vmatprep.subr.bf16.mxu0 %v1126
        %1318 = vmatpush2.bf16.msra.mxu0 %v1125
        %1319 = vmatprep.subr.bf16.mxu0 %v1118
        %1320 = vmatpush2.bf16.msra.mxu0 %v1117
        %1321 = vmatprep.subr.bf16.mxu0 %v1110
        %1322 = vmatpush2.bf16.msra.mxu0 %v1109
        %1323 = vmatprep.subr.bf16.mxu0 %v1102
        %1324 = vmatpush2.bf16.msra.mxu0 %v1101
        %1325 = vmatprep.mubr.bf16.mxu0 %v366
        %1326 = vmatmul.mubr.bf16.gmra.mxu0 %v365
        %v1327 = vpop.f32.mrf.mxu0
        %v1328 = vadd.f32 0.0, %v1327
        %v1329 = vpop.f32.mrf.mxu0
        %v1330 = vadd.f32 0.0, %v1329
        %v1331 = vpop.f32.mrf.mxu0
        %v1332 = vadd.f32 0.0, %v1331
        %v1333 = vpop.f32.mrf.mxu0
        %v1334 = vadd.f32 0.0, %v1333
        %1335 = vmatprep.mubr.bf16.mxu0 %v368
        %1336 = vmatmul.mubr.bf16.gmra.mxu0 %v367
        %v1337 = vpop.f32.mrf.mxu0
        %v1338 = vadd.f32 0.0, %v1337
        %v1339 = vpop.f32.mrf.mxu0
        %v1340 = vadd.f32 0.0, %v1339
        %v1341 = vpop.f32.mrf.mxu0
        %v1342 = vadd.f32 0.0, %v1341
        %v1343 = vpop.f32.mrf.mxu0
        %v1344 = vadd.f32 0.0, %v1343
        %1345 = vmatprep.mubr.bf16.mxu0 %v370
        %1346 = vmatmul.mubr.bf16.gmra.mxu0 %v369
        %v1347 = vpop.f32.mrf.mxu0
        %v1348 = vadd.f32 0.0, %v1347
        %v1349 = vpop.f32.mrf.mxu0
        %v1350 = vadd.f32 0.0, %v1349
        %v1351 = vpop.f32.mrf.mxu0
        %v1352 = vadd.f32 0.0, %v1351
        %v1353 = vpop.f32.mrf.mxu0
        %v1354 = vadd.f32 0.0, %v1353
        %1355 = vmatprep.mubr.bf16.mxu0 %v372
        %1356 = vmatmul.mubr.bf16.gmra.mxu0 %v371
        %v1357 = vpop.f32.mrf.mxu0
        %v1358 = vadd.f32 0.0, %v1357
        %v1359 = vpop.f32.mrf.mxu0
        %v1360 = vadd.f32 0.0, %v1359
        %v1361 = vpop.f32.mrf.mxu0
        %v1362 = vadd.f32 0.0, %v1361
        %v1363 = vpop.f32.mrf.mxu0
        %v1364 = vadd.f32 0.0, %v1363
        %1365 = vmatprep.mubr.bf16.mxu0 %v374
        %1366 = vmatmul.mubr.bf16.gmra.mxu0 %v373
        %v1367 = vpop.f32.mrf.mxu0
        %v1368 = vadd.f32 0.0, %v1367
        %v1369 = vpop.f32.mrf.mxu0
        %v1370 = vadd.f32 0.0, %v1369
        %v1371 = vpop.f32.mrf.mxu0
        %v1372 = vadd.f32 0.0, %v1371
        %v1373 = vpop.f32.mrf.mxu0
        %v1374 = vadd.f32 0.0, %v1373
        %1375 = vmatprep.mubr.bf16.mxu0 %v376
        %1376 = vmatmul.mubr.bf16.gmra.mxu0 %v375
        %v1377 = vpop.f32.mrf.mxu0
        %v1378 = vadd.f32 0.0, %v1377
        %v1379 = vpop.f32.mrf.mxu0
        %v1380 = vadd.f32 0.0, %v1379
        %v1381 = vpop.f32.mrf.mxu0
        %v1382 = vadd.f32 0.0, %v1381
        %v1383 = vpop.f32.mrf.mxu0
        %v1384 = vadd.f32 0.0, %v1383
        %1385 = vmatprep.mubr.bf16.mxu0 %v378
        %1386 = vmatmul.mubr.bf16.gmra.mxu0 %v377
        %v1387 = vpop.f32.mrf.mxu0
        %v1388 = vadd.f32 0.0, %v1387
        %v1389 = vpop.f32.mrf.mxu0
        %v1390 = vadd.f32 0.0, %v1389
        %v1391 = vpop.f32.mrf.mxu0
        %v1392 = vadd.f32 0.0, %v1391
        %v1393 = vpop.f32.mrf.mxu0
        %v1394 = vadd.f32 0.0, %v1393
        %1395 = vmatprep.mubr.bf16.mxu0 %v380
        %1396 = vmatmul.mubr.bf16.gmra.mxu0 %v379
        %v1397 = vpop.f32.mrf.mxu0
        %v1398 = vadd.f32 0.0, %v1397
        %v1399 = vpop.f32.mrf.mxu0
        %v1400 = vadd.f32 0.0, %v1399
        %v1401 = vpop.f32.mrf.mxu0
        %v1402 = vadd.f32 0.0, %v1401
        %v1403 = vpop.f32.mrf.mxu0
        %v1404 = vadd.f32 0.0, %v1403
        %1405 = vmatprep.mubr.bf16.mxu0 %v382
        %1406 = vmatmul.mubr.bf16.gmra.mxu0 %v381
        %v1407 = vpop.f32.mrf.mxu0
        %v1408 = vadd.f32 0.0, %v1407
        %v1409 = vpop.f32.mrf.mxu0
        %v1410 = vadd.f32 0.0, %v1409
        %v1411 = vpop.f32.mrf.mxu0
        %v1412 = vadd.f32 0.0, %v1411
        %v1413 = vpop.f32.mrf.mxu0
        %v1414 = vadd.f32 0.0, %v1413
        %1415 = vmatprep.mubr.bf16.mxu0 %v384
        %1416 = vmatmul.mubr.bf16.gmra.mxu0 %v383
        %v1417 = vpop.f32.mrf.mxu0
        %v1418 = vadd.f32 0.0, %v1417
        %v1419 = vpop.f32.mrf.mxu0
        %v1420 = vadd.f32 0.0, %v1419
        %v1421 = vpop.f32.mrf.mxu0
        %v1422 = vadd.f32 0.0, %v1421
        %v1423 = vpop.f32.mrf.mxu0
        %v1424 = vadd.f32 0.0, %v1423
        %1425 = vmatprep.mubr.bf16.mxu0 %v386
        %1426 = vmatmul.mubr.bf16.gmra.mxu0 %v385
        %v1427 = vpop.f32.mrf.mxu0
        %v1428 = vadd.f32 0.0, %v1427
        %v1429 = vpop.f32.mrf.mxu0
        %v1430 = vadd.f32 0.0, %v1429
        %v1431 = vpop.f32.mrf.mxu0
        %v1432 = vadd.f32 0.0, %v1431
        %v1433 = vpop.f32.mrf.mxu0
        %v1434 = vadd.f32 0.0, %v1433
        %1435 = vmatprep.mubr.bf16.mxu0 %v388
        %1436 = vmatmul.mubr.bf16.gmra.mxu0 %v387
        %v1437 = vpop.f32.mrf.mxu0
        %v1438 = vadd.f32 0.0, %v1437
        %v1439 = vpop.f32.mrf.mxu0
        %v1440 = vadd.f32 0.0, %v1439
        %v1441 = vpop.f32.mrf.mxu0
        %v1442 = vadd.f32 0.0, %v1441
        %v1443 = vpop.f32.mrf.mxu0
        %v1444 = vadd.f32 0.0, %v1443
        %1445 = vmatprep.mubr.bf16.mxu0 %v390
        %1446 = vmatmul.mubr.bf16.gmra.mxu0 %v389
        %v1447 = vpop.f32.mrf.mxu0
        %v1448 = vadd.f32 0.0, %v1447
        %v1449 = vpop.f32.mrf.mxu0
        %v1450 = vadd.f32 0.0, %v1449
        %v1451 = vpop.f32.mrf.mxu0
        %v1452 = vadd.f32 0.0, %v1451
        %v1453 = vpop.f32.mrf.mxu0
        %v1454 = vadd.f32 0.0, %v1453
        %1455 = vmatprep.mubr.bf16.mxu0 %v392
        %1456 = vmatmul.mubr.bf16.gmra.mxu0 %v391
        %v1457 = vpop.f32.mrf.mxu0
        %v1458 = vadd.f32 0.0, %v1457
        %v1459 = vpop.f32.mrf.mxu0
        %v1460 = vadd.f32 0.0, %v1459
        %v1461 = vpop.f32.mrf.mxu0
        %v1462 = vadd.f32 0.0, %v1461
        %v1463 = vpop.f32.mrf.mxu0
        %v1464 = vadd.f32 0.0, %v1463
        %1465 = vmatprep.mubr.bf16.mxu0 %v394
        %1466 = vmatmul.mubr.bf16.gmra.mxu0 %v393
        %v1467 = vpop.f32.mrf.mxu0
        %v1468 = vadd.f32 0.0, %v1467
        %v1469 = vpop.f32.mrf.mxu0
        %v1470 = vadd.f32 0.0, %v1469
        %v1471 = vpop.f32.mrf.mxu0
        %v1472 = vadd.f32 0.0, %v1471
        %v1473 = vpop.f32.mrf.mxu0
        %v1474 = vadd.f32 0.0, %v1473
        %1475 = vmatprep.mubr.bf16.mxu0 %v396
        %1476 = vmatmul.mubr.bf16.gmra.mxu0 %v395
        %v1477 = vpop.f32.mrf.mxu0
        %v1478 = vadd.f32 0.0, %v1477
        %v1479 = vpop.f32.mrf.mxu0
        %v1480 = vadd.f32 0.0, %v1479
        %v1481 = vpop.f32.mrf.mxu0
        %v1482 = vadd.f32 0.0, %v1481
        %v1483 = vpop.f32.mrf.mxu0
        %v1484 = vadd.f32 0.0, %v1483
        %1485 = vdwg.mxu0
        %1486 = vmatprep.subr.bf16.mxu0 %v1096
        %1487 = vmatpush1.bf16.msra.mxu0 %v1095
        %1488 = vmatprep.subr.bf16.mxu0 %v1088
        %1489 = vmatpush1.bf16.msra.mxu0 %v1087
        %1490 = vmatprep.subr.bf16.mxu0 %v1080
        %1491 = vmatpush1.bf16.msra.mxu0 %v1079
        %1492 = vmatprep.subr.bf16.mxu0 %v1072
        %1493 = vmatpush1.bf16.msra.mxu0 %v1071
        %1494 = vmatprep.subr.bf16.mxu0 %v1064
        %1495 = vmatpush1.bf16.msra.mxu0 %v1063
        %1496 = vmatprep.subr.bf16.mxu0 %v1056
        %1497 = vmatpush1.bf16.msra.mxu0 %v1055
        %1498 = vmatprep.subr.bf16.mxu0 %v1048
        %1499 = vmatpush1.bf16.msra.mxu0 %v1047
        %1500 = vmatprep.subr.bf16.mxu0 %v1040
        %1501 = vmatpush1.bf16.msra.mxu0 %v1039
        %1502 = vmatprep.subr.bf16.mxu0 %v1160
        %1503 = vmatpush2.bf16.msra.mxu0 %v1159
        %1504 = vmatprep.subr.bf16.mxu0 %v1152
        %1505 = vmatpush2.bf16.msra.mxu0 %v1151
        %1506 = vmatprep.subr.bf16.mxu0 %v1144
        %1507 = vmatpush2.bf16.msra.mxu0 %v1143
        %1508 = vmatprep.subr.bf16.mxu0 %v1136
        %1509 = vmatpush2.bf16.msra.mxu0 %v1135
        %1510 = vmatprep.subr.bf16.mxu0 %v1128
        %1511 = vmatpush2.bf16.msra.mxu0 %v1127
        %1512 = vmatprep.subr.bf16.mxu0 %v1120
        %1513 = vmatpush2.bf16.msra.mxu0 %v1119
        %1514 = vmatprep.subr.bf16.mxu0 %v1112
        %1515 = vmatpush2.bf16.msra.mxu0 %v1111
        %1516 = vmatprep.subr.bf16.mxu0 %v1104
        %1517 = vmatpush2.bf16.msra.mxu0 %v1103
        %1518 = vmatprep.mubr.bf16.mxu0 %v366
        %1519 = vmatmul.mubr.bf16.gmra.mxu0 %v365
        %v1520 = vpop.f32.mrf.mxu0
        %v1521 = vadd.f32 0.0, %v1520
        %v1522 = vpop.f32.mrf.mxu0
        %v1523 = vadd.f32 0.0, %v1522
        %v1524 = vpop.f32.mrf.mxu0
        %v1525 = vadd.f32 0.0, %v1524
        %v1526 = vpop.f32.mrf.mxu0
        %v1527 = vadd.f32 0.0, %v1526
        %1528 = vmatprep.mubr.bf16.mxu0 %v368
        %1529 = vmatmul.mubr.bf16.gmra.mxu0 %v367
        %v1530 = vpop.f32.mrf.mxu0
        %v1531 = vadd.f32 0.0, %v1530
        %v1532 = vpop.f32.mrf.mxu0
        %v1533 = vadd.f32 0.0, %v1532
        %v1534 = vpop.f32.mrf.mxu0
        %v1535 = vadd.f32 0.0, %v1534
        %v1536 = vpop.f32.mrf.mxu0
        %v1537 = vadd.f32 0.0, %v1536
        %1538 = vmatprep.mubr.bf16.mxu0 %v370
        %1539 = vmatmul.mubr.bf16.gmra.mxu0 %v369
        %v1540 = vpop.f32.mrf.mxu0
        %v1541 = vadd.f32 0.0, %v1540
        %v1542 = vpop.f32.mrf.mxu0
        %v1543 = vadd.f32 0.0, %v1542
        %v1544 = vpop.f32.mrf.mxu0
        %v1545 = vadd.f32 0.0, %v1544
        %v1546 = vpop.f32.mrf.mxu0
        %v1547 = vadd.f32 0.0, %v1546
        %1548 = vmatprep.mubr.bf16.mxu0 %v372
        %1549 = vmatmul.mubr.bf16.gmra.mxu0 %v371
        %v1550 = vpop.f32.mrf.mxu0
        %v1551 = vadd.f32 0.0, %v1550
        %v1552 = vpop.f32.mrf.mxu0
        %v1553 = vadd.f32 0.0, %v1552
        %v1554 = vpop.f32.mrf.mxu0
        %v1555 = vadd.f32 0.0, %v1554
        %v1556 = vpop.f32.mrf.mxu0
        %v1557 = vadd.f32 0.0, %v1556
        %1558 = vmatprep.mubr.bf16.mxu0 %v374
        %1559 = vmatmul.mubr.bf16.gmra.mxu0 %v373
        %v1560 = vpop.f32.mrf.mxu0
        %v1561 = vadd.f32 0.0, %v1560
        %v1562 = vpop.f32.mrf.mxu0
        %v1563 = vadd.f32 0.0, %v1562
        %v1564 = vpop.f32.mrf.mxu0
        %v1565 = vadd.f32 0.0, %v1564
        %v1566 = vpop.f32.mrf.mxu0
        %v1567 = vadd.f32 0.0, %v1566
        %1568 = vmatprep.mubr.bf16.mxu0 %v376
        %1569 = vmatmul.mubr.bf16.gmra.mxu0 %v375
        %v1570 = vpop.f32.mrf.mxu0
        %v1571 = vadd.f32 0.0, %v1570
        %v1572 = vpop.f32.mrf.mxu0
        %v1573 = vadd.f32 0.0, %v1572
        %v1574 = vpop.f32.mrf.mxu0
        %v1575 = vadd.f32 0.0, %v1574
        %v1576 = vpop.f32.mrf.mxu0
        %v1577 = vadd.f32 0.0, %v1576
        %1578 = vmatprep.mubr.bf16.mxu0 %v378
        %1579 = vmatmul.mubr.bf16.gmra.mxu0 %v377
        %v1580 = vpop.f32.mrf.mxu0
        %v1581 = vadd.f32 0.0, %v1580
        %v1582 = vpop.f32.mrf.mxu0
        %v1583 = vadd.f32 0.0, %v1582
        %v1584 = vpop.f32.mrf.mxu0
        %v1585 = vadd.f32 0.0, %v1584
        %v1586 = vpop.f32.mrf.mxu0
        %v1587 = vadd.f32 0.0, %v1586
        %1588 = vmatprep.mubr.bf16.mxu0 %v380
        %1589 = vmatmul.mubr.bf16.gmra.mxu0 %v379
        %v1590 = vpop.f32.mrf.mxu0
        %v1591 = vadd.f32 0.0, %v1590
        %v1592 = vpop.f32.mrf.mxu0
        %v1593 = vadd.f32 0.0, %v1592
        %v1594 = vpop.f32.mrf.mxu0
        %v1595 = vadd.f32 0.0, %v1594
        %v1596 = vpop.f32.mrf.mxu0
        %v1597 = vadd.f32 0.0, %v1596
        %1598 = vmatprep.mubr.bf16.mxu0 %v382
        %1599 = vmatmul.mubr.bf16.gmra.mxu0 %v381
        %v1600 = vpop.f32.mrf.mxu0
        %v1601 = vadd.f32 0.0, %v1600
        %v1602 = vpop.f32.mrf.mxu0
        %v1603 = vadd.f32 0.0, %v1602
        %v1604 = vpop.f32.mrf.mxu0
        %v1605 = vadd.f32 0.0, %v1604
        %v1606 = vpop.f32.mrf.mxu0
        %v1607 = vadd.f32 0.0, %v1606
        %1608 = vmatprep.mubr.bf16.mxu0 %v384
        %1609 = vmatmul.mubr.bf16.gmra.mxu0 %v383
        %v1610 = vpop.f32.mrf.mxu0
        %v1611 = vadd.f32 0.0, %v1610
        %v1612 = vpop.f32.mrf.mxu0
        %v1613 = vadd.f32 0.0, %v1612
        %v1614 = vpop.f32.mrf.mxu0
        %v1615 = vadd.f32 0.0, %v1614
        %v1616 = vpop.f32.mrf.mxu0
        %v1617 = vadd.f32 0.0, %v1616
        %1618 = vmatprep.mubr.bf16.mxu0 %v386
        %1619 = vmatmul.mubr.bf16.gmra.mxu0 %v385
        %v1620 = vpop.f32.mrf.mxu0
        %v1621 = vadd.f32 0.0, %v1620
        %v1622 = vpop.f32.mrf.mxu0
        %v1623 = vadd.f32 0.0, %v1622
        %v1624 = vpop.f32.mrf.mxu0
        %v1625 = vadd.f32 0.0, %v1624
        %v1626 = vpop.f32.mrf.mxu0
        %v1627 = vadd.f32 0.0, %v1626
        %1628 = vmatprep.mubr.bf16.mxu0 %v388
        %1629 = vmatmul.mubr.bf16.gmra.mxu0 %v387
        %v1630 = vpop.f32.mrf.mxu0
        %v1631 = vadd.f32 0.0, %v1630
        %v1632 = vpop.f32.mrf.mxu0
        %v1633 = vadd.f32 0.0, %v1632
        %v1634 = vpop.f32.mrf.mxu0
        %v1635 = vadd.f32 0.0, %v1634
        %v1636 = vpop.f32.mrf.mxu0
        %v1637 = vadd.f32 0.0, %v1636
        %1638 = vmatprep.mubr.bf16.mxu0 %v390
        %1639 = vmatmul.mubr.bf16.gmra.mxu0 %v389
        %v1640 = vpop.f32.mrf.mxu0
        %v1641 = vadd.f32 0.0, %v1640
        %v1642 = vpop.f32.mrf.mxu0
        %v1643 = vadd.f32 0.0, %v1642
        %v1644 = vpop.f32.mrf.mxu0
        %v1645 = vadd.f32 0.0, %v1644
        %v1646 = vpop.f32.mrf.mxu0
        %v1647 = vadd.f32 0.0, %v1646
        %1648 = vmatprep.mubr.bf16.mxu0 %v392
        %1649 = vmatmul.mubr.bf16.gmra.mxu0 %v391
        %v1650 = vpop.f32.mrf.mxu0
        %v1651 = vadd.f32 0.0, %v1650
        %v1652 = vpop.f32.mrf.mxu0
        %v1653 = vadd.f32 0.0, %v1652
        %v1654 = vpop.f32.mrf.mxu0
        %v1655 = vadd.f32 0.0, %v1654
        %v1656 = vpop.f32.mrf.mxu0
        %v1657 = vadd.f32 0.0, %v1656
        %1658 = vmatprep.mubr.bf16.mxu0 %v394
        %1659 = vmatmul.mubr.bf16.gmra.mxu0 %v393
        %v1660 = vpop.f32.mrf.mxu0
        %v1661 = vadd.f32 0.0, %v1660
        %v1662 = vpop.f32.mrf.mxu0
        %v1663 = vadd.f32 0.0, %v1662
        %v1664 = vpop.f32.mrf.mxu0
        %v1665 = vadd.f32 0.0, %v1664
        %v1666 = vpop.f32.mrf.mxu0
        %v1667 = vadd.f32 0.0, %v1666
        %1668 = vmatprep.mubr.bf16.mxu0 %v396
        %1669 = vmatmul.mubr.bf16.gmra.mxu0 %v395
        %v1670 = vpop.f32.mrf.mxu0
        %v1671 = vadd.f32 0.0, %v1670
        %v1672 = vpop.f32.mrf.mxu0
        %v1673 = vadd.f32 0.0, %v1672
        %v1674 = vpop.f32.mrf.mxu0
        %v1675 = vadd.f32 0.0, %v1674
        %v1676 = vpop.f32.mrf.mxu0
        %v1677 = vadd.f32 0.0, %v1676
        %1678 = vdwg.mxu0
        %1679 = vmatprep.subr.bf16.mxu0 %v1098
        %1680 = vmatpush1.bf16.msra.mxu0 %v1097
        %1681 = vmatprep.subr.bf16.mxu0 %v1090
        %1682 = vmatpush1.bf16.msra.mxu0 %v1089
        %1683 = vmatprep.subr.bf16.mxu0 %v1082
        %1684 = vmatpush1.bf16.msra.mxu0 %v1081
        %1685 = vmatprep.subr.bf16.mxu0 %v1074
        %1686 = vmatpush1.bf16.msra.mxu0 %v1073
        %1687 = vmatprep.subr.bf16.mxu0 %v1066
        %1688 = vmatpush1.bf16.msra.mxu0 %v1065
        %1689 = vmatprep.subr.bf16.mxu0 %v1058
        %1690 = vmatpush1.bf16.msra.mxu0 %v1057
        %1691 = vmatprep.subr.bf16.mxu0 %v1050
        %1692 = vmatpush1.bf16.msra.mxu0 %v1049
        %1693 = vmatprep.subr.bf16.mxu0 %v1042
        %1694 = vmatpush1.bf16.msra.mxu0 %v1041
        %1695 = vmatprep.subr.bf16.mxu0 %v1162
        %1696 = vmatpush2.bf16.msra.mxu0 %v1161
        %1697 = vmatprep.subr.bf16.mxu0 %v1154
        %1698 = vmatpush2.bf16.msra.mxu0 %v1153
        %1699 = vmatprep.subr.bf16.mxu0 %v1146
        %1700 = vmatpush2.bf16.msra.mxu0 %v1145
        %1701 = vmatprep.subr.bf16.mxu0 %v1138
        %1702 = vmatpush2.bf16.msra.mxu0 %v1137
        %1703 = vmatprep.subr.bf16.mxu0 %v1130
        %1704 = vmatpush2.bf16.msra.mxu0 %v1129
        %1705 = vmatprep.subr.bf16.mxu0 %v1122
        %1706 = vmatpush2.bf16.msra.mxu0 %v1121
        %1707 = vmatprep.subr.bf16.mxu0 %v1114
        %1708 = vmatpush2.bf16.msra.mxu0 %v1113
        %1709 = vmatprep.subr.bf16.mxu0 %v1106
        %1710 = vmatpush2.bf16.msra.mxu0 %v1105
        %1711 = vmatprep.mubr.bf16.mxu0 %v366
        %1712 = vmatmul.mubr.bf16.gmra.mxu0 %v365
        %v1713 = vpop.f32.mrf.mxu0
        %v1714 = vadd.f32 0.0, %v1713
        %v1715 = vpop.f32.mrf.mxu0
        %v1716 = vadd.f32 0.0, %v1715
        %v1717 = vpop.f32.mrf.mxu0
        %v1718 = vadd.f32 0.0, %v1717
        %v1719 = vpop.f32.mrf.mxu0
        %v1720 = vadd.f32 0.0, %v1719
        %1721 = vmatprep.mubr.bf16.mxu0 %v368
        %1722 = vmatmul.mubr.bf16.gmra.mxu0 %v367
        %v1723 = vpop.f32.mrf.mxu0
        %v1724 = vadd.f32 0.0, %v1723
        %v1725 = vpop.f32.mrf.mxu0
        %v1726 = vadd.f32 0.0, %v1725
        %v1727 = vpop.f32.mrf.mxu0
        %v1728 = vadd.f32 0.0, %v1727
        %v1729 = vpop.f32.mrf.mxu0
        %v1730 = vadd.f32 0.0, %v1729
        %1731 = vmatprep.mubr.bf16.mxu0 %v370
        %1732 = vmatmul.mubr.bf16.gmra.mxu0 %v369
        %v1733 = vpop.f32.mrf.mxu0
        %v1734 = vadd.f32 0.0, %v1733
        %v1735 = vpop.f32.mrf.mxu0
        %v1736 = vadd.f32 0.0, %v1735
        %v1737 = vpop.f32.mrf.mxu0
        %v1738 = vadd.f32 0.0, %v1737
        %v1739 = vpop.f32.mrf.mxu0
        %v1740 = vadd.f32 0.0, %v1739
        %1741 = vmatprep.mubr.bf16.mxu0 %v372
        %1742 = vmatmul.mubr.bf16.gmra.mxu0 %v371
        %v1743 = vpop.f32.mrf.mxu0
        %v1744 = vadd.f32 0.0, %v1743
        %v1745 = vpop.f32.mrf.mxu0
        %v1746 = vadd.f32 0.0, %v1745
        %v1747 = vpop.f32.mrf.mxu0
        %v1748 = vadd.f32 0.0, %v1747
        %v1749 = vpop.f32.mrf.mxu0
        %v1750 = vadd.f32 0.0, %v1749
        %1751 = vmatprep.mubr.bf16.mxu0 %v374
        %1752 = vmatmul.mubr.bf16.gmra.mxu0 %v373
        %v1753 = vpop.f32.mrf.mxu0
        %v1754 = vadd.f32 0.0, %v1753
        %v1755 = vpop.f32.mrf.mxu0
        %v1756 = vadd.f32 0.0, %v1755
        %v1757 = vpop.f32.mrf.mxu0
        %v1758 = vadd.f32 0.0, %v1757
        %v1759 = vpop.f32.mrf.mxu0
        %v1760 = vadd.f32 0.0, %v1759
        %1761 = vmatprep.mubr.bf16.mxu0 %v376
        %1762 = vmatmul.mubr.bf16.gmra.mxu0 %v375
        %v1763 = vpop.f32.mrf.mxu0
        %v1764 = vadd.f32 0.0, %v1763
        %v1765 = vpop.f32.mrf.mxu0
        %v1766 = vadd.f32 0.0, %v1765
        %v1767 = vpop.f32.mrf.mxu0
        %v1768 = vadd.f32 0.0, %v1767
        %v1769 = vpop.f32.mrf.mxu0
        %v1770 = vadd.f32 0.0, %v1769
        %1771 = vmatprep.mubr.bf16.mxu0 %v378
        %1772 = vmatmul.mubr.bf16.gmra.mxu0 %v377
        %v1773 = vpop.f32.mrf.mxu0
        %v1774 = vadd.f32 0.0, %v1773
        %v1775 = vpop.f32.mrf.mxu0
        %v1776 = vadd.f32 0.0, %v1775
        %v1777 = vpop.f32.mrf.mxu0
        %v1778 = vadd.f32 0.0, %v1777
        %v1779 = vpop.f32.mrf.mxu0
        %v1780 = vadd.f32 0.0, %v1779
        %1781 = vmatprep.mubr.bf16.mxu0 %v380
        %1782 = vmatmul.mubr.bf16.gmra.mxu0 %v379
        %v1783 = vpop.f32.mrf.mxu0
        %v1784 = vadd.f32 0.0, %v1783
        %v1785 = vpop.f32.mrf.mxu0
        %v1786 = vadd.f32 0.0, %v1785
        %v1787 = vpop.f32.mrf.mxu0
        %v1788 = vadd.f32 0.0, %v1787
        %v1789 = vpop.f32.mrf.mxu0
        %v1790 = vadd.f32 0.0, %v1789
        %1791 = vmatprep.mubr.bf16.mxu0 %v382
        %1792 = vmatmul.mubr.bf16.gmra.mxu0 %v381
        %v1793 = vpop.f32.mrf.mxu0
        %v1794 = vadd.f32 0.0, %v1793
        %v1795 = vpop.f32.mrf.mxu0
        %v1796 = vadd.f32 0.0, %v1795
        %v1797 = vpop.f32.mrf.mxu0
        %v1798 = vadd.f32 0.0, %v1797
        %v1799 = vpop.f32.mrf.mxu0
        %v1800 = vadd.f32 0.0, %v1799
        %1801 = vmatprep.mubr.bf16.mxu0 %v384
        %1802 = vmatmul.mubr.bf16.gmra.mxu0 %v383
        %v1803 = vpop.f32.mrf.mxu0
        %v1804 = vadd.f32 0.0, %v1803
        %v1805 = vpop.f32.mrf.mxu0
        %v1806 = vadd.f32 0.0, %v1805
        %v1807 = vpop.f32.mrf.mxu0
        %v1808 = vadd.f32 0.0, %v1807
        %v1809 = vpop.f32.mrf.mxu0
        %v1810 = vadd.f32 0.0, %v1809
        %1811 = vmatprep.mubr.bf16.mxu0 %v386
        %1812 = vmatmul.mubr.bf16.gmra.mxu0 %v385
        %v1813 = vpop.f32.mrf.mxu0
        %v1814 = vadd.f32 0.0, %v1813
        %v1815 = vpop.f32.mrf.mxu0
        %v1816 = vadd.f32 0.0, %v1815
        %v1817 = vpop.f32.mrf.mxu0
        %v1818 = vadd.f32 0.0, %v1817
        %v1819 = vpop.f32.mrf.mxu0
        %v1820 = vadd.f32 0.0, %v1819
        %1821 = vmatprep.mubr.bf16.mxu0 %v388
        %1822 = vmatmul.mubr.bf16.gmra.mxu0 %v387
        %v1823 = vpop.f32.mrf.mxu0
        %v1824 = vadd.f32 0.0, %v1823
        %v1825 = vpop.f32.mrf.mxu0
        %v1826 = vadd.f32 0.0, %v1825
        %v1827 = vpop.f32.mrf.mxu0
        %v1828 = vadd.f32 0.0, %v1827
        %v1829 = vpop.f32.mrf.mxu0
        %v1830 = vadd.f32 0.0, %v1829
        %1831 = vmatprep.mubr.bf16.mxu0 %v390
        %1832 = vmatmul.mubr.bf16.gmra.mxu0 %v389
        %v1833 = vpop.f32.mrf.mxu0
        %v1834 = vadd.f32 0.0, %v1833
        %v1835 = vpop.f32.mrf.mxu0
        %v1836 = vadd.f32 0.0, %v1835
        %v1837 = vpop.f32.mrf.mxu0
        %v1838 = vadd.f32 0.0, %v1837
        %v1839 = vpop.f32.mrf.mxu0
        %v1840 = vadd.f32 0.0, %v1839
        %1841 = vmatprep.mubr.bf16.mxu0 %v392
        %1842 = vmatmul.mubr.bf16.gmra.mxu0 %v391
        %v1843 = vpop.f32.mrf.mxu0
        %v1844 = vadd.f32 0.0, %v1843
        %v1845 = vpop.f32.mrf.mxu0
        %v1846 = vadd.f32 0.0, %v1845
        %v1847 = vpop.f32.mrf.mxu0
        %v1848 = vadd.f32 0.0, %v1847
        %v1849 = vpop.f32.mrf.mxu0
        %v1850 = vadd.f32 0.0, %v1849
        %1851 = vmatprep.mubr.bf16.mxu0 %v394
        %1852 = vmatmul.mubr.bf16.gmra.mxu0 %v393
        %v1853 = vpop.f32.mrf.mxu0
        %v1854 = vadd.f32 0.0, %v1853
        %v1855 = vpop.f32.mrf.mxu0
        %v1856 = vadd.f32 0.0, %v1855
        %v1857 = vpop.f32.mrf.mxu0
        %v1858 = vadd.f32 0.0, %v1857
        %v1859 = vpop.f32.mrf.mxu0
        %v1860 = vadd.f32 0.0, %v1859
        %1861 = vmatprep.mubr.bf16.mxu0 %v396
        %1862 = vmatmul.mubr.bf16.gmra.mxu0 %v395
        %v1863 = vpop.f32.mrf.mxu0
        %v1864 = vadd.f32 0.0, %v1863
        %v1865 = vpop.f32.mrf.mxu0
        %v1866 = vadd.f32 0.0, %v1865
        %v1867 = vpop.f32.mrf.mxu0
        %v1868 = vadd.f32 0.0, %v1867
        %v1869 = vpop.f32.mrf.mxu0
        %v1870 = vadd.f32 0.0, %v1869
        %1871 = vdwg.mxu0
        %1872 = vmatprep.subr.bf16.mxu0 %v1100
        %1873 = vmatpush1.bf16.msra.mxu0 %v1099
        %1874 = vmatprep.subr.bf16.mxu0 %v1092
        %1875 = vmatpush1.bf16.msra.mxu0 %v1091
        %1876 = vmatprep.subr.bf16.mxu0 %v1084
        %1877 = vmatpush1.bf16.msra.mxu0 %v1083
        %1878 = vmatprep.subr.bf16.mxu0 %v1076
        %1879 = vmatpush1.bf16.msra.mxu0 %v1075
        %1880 = vmatprep.subr.bf16.mxu0 %v1068
        %1881 = vmatpush1.bf16.msra.mxu0 %v1067
        %1882 = vmatprep.subr.bf16.mxu0 %v1060
        %1883 = vmatpush1.bf16.msra.mxu0 %v1059
        %1884 = vmatprep.subr.bf16.mxu0 %v1052
        %1885 = vmatpush1.bf16.msra.mxu0 %v1051
        %1886 = vmatprep.subr.bf16.mxu0 %v1044
        %1887 = vmatpush1.bf16.msra.mxu0 %v1043
        %1888 = vmatprep.subr.bf16.mxu0 %v1164
        %1889 = vmatpush2.bf16.msra.mxu0 %v1163
        %1890 = vmatprep.subr.bf16.mxu0 %v1156
        %1891 = vmatpush2.bf16.msra.mxu0 %v1155
        %1892 = vmatprep.subr.bf16.mxu0 %v1148
        %1893 = vmatpush2.bf16.msra.mxu0 %v1147
        %1894 = vmatprep.subr.bf16.mxu0 %v1140
        %1895 = vmatpush2.bf16.msra.mxu0 %v1139
        %1896 = vmatprep.subr.bf16.mxu0 %v1132
        %1897 = vmatpush2.bf16.msra.mxu0 %v1131
        %1898 = vmatprep.subr.bf16.mxu0 %v1124
        %1899 = vmatpush2.bf16.msra.mxu0 %v1123
        %1900 = vmatprep.subr.bf16.mxu0 %v1116
        %1901 = vmatpush2.bf16.msra.mxu0 %v1115
        %1902 = vmatprep.subr.bf16.mxu0 %v1108
        %1903 = vmatpush2.bf16.msra.mxu0 %v1107
        %1904 = vmatprep.mubr.bf16.mxu0 %v366
        %1905 = vmatmul.mubr.bf16.gmra.mxu0 %v365
        %v1906 = vpop.f32.mrf.mxu0
        %v1907 = vadd.f32 0.0, %v1906
        %v1908 = vpop.f32.mrf.mxu0
        %v1909 = vadd.f32 0.0, %v1908
        %v1910 = vpop.f32.mrf.mxu0
        %v1911 = vadd.f32 0.0, %v1910
        %v1912 = vpop.f32.mrf.mxu0
        %v1913 = vadd.f32 0.0, %v1912
        %1914 = vmatprep.mubr.bf16.mxu0 %v368
        %1915 = vmatmul.mubr.bf16.gmra.mxu0 %v367
        %v1916 = vpop.f32.mrf.mxu0
        %v1917 = vadd.f32 0.0, %v1916
        %v1918 = vpop.f32.mrf.mxu0
        %v1919 = vadd.f32 0.0, %v1918
        %v1920 = vpop.f32.mrf.mxu0
        %v1921 = vadd.f32 0.0, %v1920
        %v1922 = vpop.f32.mrf.mxu0
        %v1923 = vadd.f32 0.0, %v1922
        %1924 = vmatprep.mubr.bf16.mxu0 %v370
        %1925 = vmatmul.mubr.bf16.gmra.mxu0 %v369
        %v1926 = vpop.f32.mrf.mxu0
        %v1927 = vadd.f32 0.0, %v1926
        %v1928 = vpop.f32.mrf.mxu0
        %v1929 = vadd.f32 0.0, %v1928
        %v1930 = vpop.f32.mrf.mxu0
        %v1931 = vadd.f32 0.0, %v1930
        %v1932 = vpop.f32.mrf.mxu0
        %v1933 = vadd.f32 0.0, %v1932
        %1934 = vmatprep.mubr.bf16.mxu0 %v372
        %1935 = vmatmul.mubr.bf16.gmra.mxu0 %v371
        %v1936 = vpop.f32.mrf.mxu0
        %v1937 = vadd.f32 0.0, %v1936
        %v1938 = vpop.f32.mrf.mxu0
        %v1939 = vadd.f32 0.0, %v1938
        %v1940 = vpop.f32.mrf.mxu0
        %v1941 = vadd.f32 0.0, %v1940
        %v1942 = vpop.f32.mrf.mxu0
        %v1943 = vadd.f32 0.0, %v1942
        %1944 = vmatprep.mubr.bf16.mxu0 %v374
        %1945 = vmatmul.mubr.bf16.gmra.mxu0 %v373
        %v1946 = vpop.f32.mrf.mxu0
        %v1947 = vadd.f32 0.0, %v1946
        %v1948 = vpop.f32.mrf.mxu0
        %v1949 = vadd.f32 0.0, %v1948
        %v1950 = vpop.f32.mrf.mxu0
        %v1951 = vadd.f32 0.0, %v1950
        %v1952 = vpop.f32.mrf.mxu0
        %v1953 = vadd.f32 0.0, %v1952
        %1954 = vmatprep.mubr.bf16.mxu0 %v376
        %1955 = vmatmul.mubr.bf16.gmra.mxu0 %v375
        %v1956 = vpop.f32.mrf.mxu0
        %v1957 = vadd.f32 0.0, %v1956
        %v1958 = vpop.f32.mrf.mxu0
        %v1959 = vadd.f32 0.0, %v1958
        %v1960 = vpop.f32.mrf.mxu0
        %v1961 = vadd.f32 0.0, %v1960
        %v1962 = vpop.f32.mrf.mxu0
        %v1963 = vadd.f32 0.0, %v1962
        %1964 = vmatprep.mubr.bf16.mxu0 %v378
        %1965 = vmatmul.mubr.bf16.gmra.mxu0 %v377
        %v1966 = vpop.f32.mrf.mxu0
        %v1967 = vadd.f32 0.0, %v1966
        %v1968 = vpop.f32.mrf.mxu0
        %v1969 = vadd.f32 0.0, %v1968
        %v1970 = vpop.f32.mrf.mxu0
        %v1971 = vadd.f32 0.0, %v1970
        %v1972 = vpop.f32.mrf.mxu0
        %v1973 = vadd.f32 0.0, %v1972
        %1974 = vmatprep.mubr.bf16.mxu0 %v380
        %1975 = vmatmul.mubr.bf16.gmra.mxu0 %v379
        %v1976 = vpop.f32.mrf.mxu0
        %v1977 = vadd.f32 0.0, %v1976
        %v1978 = vpop.f32.mrf.mxu0
        %v1979 = vadd.f32 0.0, %v1978
        %v1980 = vpop.f32.mrf.mxu0
        %v1981 = vadd.f32 0.0, %v1980
        %v1982 = vpop.f32.mrf.mxu0
        %v1983 = vadd.f32 0.0, %v1982
        %1984 = vmatprep.mubr.bf16.mxu0 %v382
        %1985 = vmatmul.mubr.bf16.gmra.mxu0 %v381
        %v1986 = vpop.f32.mrf.mxu0
        %v1987 = vadd.f32 0.0, %v1986
        %v1988 = vpop.f32.mrf.mxu0
        %v1989 = vadd.f32 0.0, %v1988
        %v1990 = vpop.f32.mrf.mxu0
        %v1991 = vadd.f32 0.0, %v1990
        %v1992 = vpop.f32.mrf.mxu0
        %v1993 = vadd.f32 0.0, %v1992
        %1994 = vmatprep.mubr.bf16.mxu0 %v384
        %1995 = vmatmul.mubr.bf16.gmra.mxu0 %v383
        %v1996 = vpop.f32.mrf.mxu0
        %v1997 = vadd.f32 0.0, %v1996
        %v1998 = vpop.f32.mrf.mxu0
        %v1999 = vadd.f32 0.0, %v1998
        %v2000 = vpop.f32.mrf.mxu0
        %v2001 = vadd.f32 0.0, %v2000
        %v2002 = vpop.f32.mrf.mxu0
        %v2003 = vadd.f32 0.0, %v2002
        %2004 = vmatprep.mubr.bf16.mxu0 %v386
        %2005 = vmatmul.mubr.bf16.gmra.mxu0 %v385
        %v2006 = vpop.f32.mrf.mxu0
        %v2007 = vadd.f32 0.0, %v2006
        %v2008 = vpop.f32.mrf.mxu0
        %v2009 = vadd.f32 0.0, %v2008
        %v2010 = vpop.f32.mrf.mxu0
        %v2011 = vadd.f32 0.0, %v2010
        %v2012 = vpop.f32.mrf.mxu0
        %v2013 = vadd.f32 0.0, %v2012
        %2014 = vmatprep.mubr.bf16.mxu0 %v388
        %2015 = vmatmul.mubr.bf16.gmra.mxu0 %v387
        %v2016 = vpop.f32.mrf.mxu0
        %v2017 = vadd.f32 0.0, %v2016
        %v2018 = vpop.f32.mrf.mxu0
        %v2019 = vadd.f32 0.0, %v2018
        %v2020 = vpop.f32.mrf.mxu0
        %v2021 = vadd.f32 0.0, %v2020
        %v2022 = vpop.f32.mrf.mxu0
        %v2023 = vadd.f32 0.0, %v2022
        %2024 = vmatprep.mubr.bf16.mxu0 %v390
        %2025 = vmatmul.mubr.bf16.gmra.mxu0 %v389
        %v2026 = vpop.f32.mrf.mxu0
        %v2027 = vadd.f32 0.0, %v2026
        %v2028 = vpop.f32.mrf.mxu0
        %v2029 = vadd.f32 0.0, %v2028
        %v2030 = vpop.f32.mrf.mxu0
        %v2031 = vadd.f32 0.0, %v2030
        %v2032 = vpop.f32.mrf.mxu0
        %v2033 = vadd.f32 0.0, %v2032
        %2034 = vmatprep.mubr.bf16.mxu0 %v392
        %2035 = vmatmul.mubr.bf16.gmra.mxu0 %v391
        %v2036 = vpop.f32.mrf.mxu0
        %v2037 = vadd.f32 0.0, %v2036
        %v2038 = vpop.f32.mrf.mxu0
        %v2039 = vadd.f32 0.0, %v2038
        %v2040 = vpop.f32.mrf.mxu0
        %v2041 = vadd.f32 0.0, %v2040
        %v2042 = vpop.f32.mrf.mxu0
        %v2043 = vadd.f32 0.0, %v2042
        %2044 = vmatprep.mubr.bf16.mxu0 %v394
        %2045 = vmatmul.mubr.bf16.gmra.mxu0 %v393
        %v2046 = vpop.f32.mrf.mxu0
        %v2047 = vadd.f32 0.0, %v2046
        %v2048 = vpop.f32.mrf.mxu0
        %v2049 = vadd.f32 0.0, %v2048
        %v2050 = vpop.f32.mrf.mxu0
        %v2051 = vadd.f32 0.0, %v2050
        %v2052 = vpop.f32.mrf.mxu0
        %v2053 = vadd.f32 0.0, %v2052
        %2054 = vmatprep.mubr.bf16.mxu0 %v396
        %2055 = vmatmul.mubr.bf16.gmra.mxu0 %v395
        %v2056 = vpop.f32.mrf.mxu0
        %v2057 = vadd.f32 0.0, %v2056
        %v2058 = vpop.f32.mrf.mxu0
        %v2059 = vadd.f32 0.0, %v2058
        %v2060 = vpop.f32.mrf.mxu0
        %v2061 = vadd.f32 0.0, %v2060
        %v2062 = vpop.f32.mrf.mxu0
        %v2063 = vadd.f32 0.0, %v2062
        %2064 = vdwg.mxu0
        %v2065 = vmax.f32 %v1328, 0.0
        %v2066 = vmax.f32 %v1330, 0.0
        %v2067 = vmax.f32 %v1521, 0.0
        %v2068 = vmax.f32 %v1523, 0.0
        %v2069 = vmax.f32 %v1714, 0.0
        %v2070 = vmax.f32 %v1716, 0.0
        %v2071 = vmax.f32 %v1907, 0.0
        %v2072 = vmax.f32 %v1909, 0.0
        %v2073 = vmax.f32 %v1332, 0.0
        %v2074 = vmax.f32 %v1334, 0.0
        %v2075 = vmax.f32 %v1525, 0.0
        %v2076 = vmax.f32 %v1527, 0.0
        %v2077 = vmax.f32 %v1718, 0.0
        %v2078 = vmax.f32 %v1720, 0.0
        %v2079 = vmax.f32 %v1911, 0.0
        %v2080 = vmax.f32 %v1913, 0.0
        %v2081 = vmax.f32 %v1338, 0.0
        %v2082 = vmax.f32 %v1340, 0.0
        %v2083 = vmax.f32 %v1531, 0.0
        %v2084 = vmax.f32 %v1533, 0.0
        %v2085 = vmax.f32 %v1724, 0.0
        %v2086 = vmax.f32 %v1726, 0.0
        %v2087 = vmax.f32 %v1917, 0.0
        %v2088 = vmax.f32 %v1919, 0.0
        %v2089 = vmax.f32 %v1342, 0.0
        %v2090 = vmax.f32 %v1344, 0.0
        %v2091 = vmax.f32 %v1535, 0.0
        %v2092 = vmax.f32 %v1537, 0.0
        %v2093 = vmax.f32 %v1728, 0.0
        %v2094 = vmax.f32 %v1730, 0.0
        %v2095 = vmax.f32 %v1921, 0.0
        %v2096 = vmax.f32 %v1923, 0.0
        %v2097 = vmax.f32 %v1348, 0.0
        %v2098 = vmax.f32 %v1350, 0.0
        %v2099 = vmax.f32 %v1541, 0.0
        %v2100 = vmax.f32 %v1543, 0.0
        %v2101 = vmax.f32 %v1734, 0.0
        %v2102 = vmax.f32 %v1736, 0.0
        %v2103 = vmax.f32 %v1927, 0.0
        %v2104 = vmax.f32 %v1929, 0.0
        %v2105 = vmax.f32 %v1352, 0.0
        %v2106 = vmax.f32 %v1354, 0.0
        %v2107 = vmax.f32 %v1545, 0.0
        %v2108 = vmax.f32 %v1547, 0.0
        %v2109 = vmax.f32 %v1738, 0.0
        %v2110 = vmax.f32 %v1740, 0.0
        %v2111 = vmax.f32 %v1931, 0.0
        %v2112 = vmax.f32 %v1933, 0.0
        %v2113 = vmax.f32 %v1358, 0.0
        %v2114 = vmax.f32 %v1360, 0.0
        %v2115 = vmax.f32 %v1551, 0.0
        %v2116 = vmax.f32 %v1553, 0.0
        %v2117 = vmax.f32 %v1744, 0.0
        %v2118 = vmax.f32 %v1746, 0.0
        %v2119 = vmax.f32 %v1937, 0.0
        %v2120 = vmax.f32 %v1939, 0.0
        %v2121 = vmax.f32 %v1362, 0.0
        %v2122 = vmax.f32 %v1364, 0.0
        %v2123 = vmax.f32 %v1555, 0.0
        %v2124 = vmax.f32 %v1557, 0.0
        %v2125 = vmax.f32 %v1748, 0.0
        %v2126 = vmax.f32 %v1750, 0.0
        %v2127 = vmax.f32 %v1941, 0.0
        %v2128 = vmax.f32 %v1943, 0.0
        %v2129 = vmax.f32 %v1368, 0.0
        %v2130 = vmax.f32 %v1370, 0.0
        %v2131 = vmax.f32 %v1561, 0.0
        %v2132 = vmax.f32 %v1563, 0.0
        %v2133 = vmax.f32 %v1754, 0.0
        %v2134 = vmax.f32 %v1756, 0.0
        %v2135 = vmax.f32 %v1947, 0.0
        %v2136 = vmax.f32 %v1949, 0.0
        %v2137 = vmax.f32 %v1372, 0.0
        %v2138 = vmax.f32 %v1374, 0.0
        %v2139 = vmax.f32 %v1565, 0.0
        %v2140 = vmax.f32 %v1567, 0.0
        %v2141 = vmax.f32 %v1758, 0.0
        %v2142 = vmax.f32 %v1760, 0.0
        %v2143 = vmax.f32 %v1951, 0.0
        %v2144 = vmax.f32 %v1953, 0.0
        %v2145 = vmax.f32 %v1378, 0.0
        %v2146 = vmax.f32 %v1380, 0.0
        %v2147 = vmax.f32 %v1571, 0.0
        %v2148 = vmax.f32 %v1573, 0.0
        %v2149 = vmax.f32 %v1764, 0.0
        %v2150 = vmax.f32 %v1766, 0.0
        %v2151 = vmax.f32 %v1957, 0.0
        %v2152 = vmax.f32 %v1959, 0.0
        %v2153 = vmax.f32 %v1382, 0.0
        %v2154 = vmax.f32 %v1384, 0.0
        %v2155 = vmax.f32 %v1575, 0.0
        %v2156 = vmax.f32 %v1577, 0.0
        %v2157 = vmax.f32 %v1768, 0.0
        %v2158 = vmax.f32 %v1770, 0.0
        %v2159 = vmax.f32 %v1961, 0.0
        %v2160 = vmax.f32 %v1963, 0.0
        %v2161 = vmax.f32 %v1388, 0.0
        %v2162 = vmax.f32 %v1390, 0.0
        %v2163 = vmax.f32 %v1581, 0.0
        %v2164 = vmax.f32 %v1583, 0.0
        %v2165 = vmax.f32 %v1774, 0.0
        %v2166 = vmax.f32 %v1776, 0.0
        %v2167 = vmax.f32 %v1967, 0.0
        %v2168 = vmax.f32 %v1969, 0.0
        %v2169 = vmax.f32 %v1392, 0.0
        %v2170 = vmax.f32 %v1394, 0.0
        %v2171 = vmax.f32 %v1585, 0.0
        %v2172 = vmax.f32 %v1587, 0.0
        %v2173 = vmax.f32 %v1778, 0.0
        %v2174 = vmax.f32 %v1780, 0.0
        %v2175 = vmax.f32 %v1971, 0.0
        %v2176 = vmax.f32 %v1973, 0.0
        %v2177 = vmax.f32 %v1398, 0.0
        %v2178 = vmax.f32 %v1400, 0.0
        %v2179 = vmax.f32 %v1591, 0.0
        %v2180 = vmax.f32 %v1593, 0.0
        %v2181 = vmax.f32 %v1784, 0.0
        %v2182 = vmax.f32 %v1786, 0.0
        %v2183 = vmax.f32 %v1977, 0.0
        %v2184 = vmax.f32 %v1979, 0.0
        %v2185 = vmax.f32 %v1402, 0.0
        %v2186 = vmax.f32 %v1404, 0.0
        %v2187 = vmax.f32 %v1595, 0.0
        %v2188 = vmax.f32 %v1597, 0.0
        %v2189 = vmax.f32 %v1788, 0.0
        %v2190 = vmax.f32 %v1790, 0.0
        %v2191 = vmax.f32 %v1981, 0.0
        %v2192 = vmax.f32 %v1983, 0.0
        %v2193 = vmax.f32 %v1408, 0.0
        %v2194 = vmax.f32 %v1410, 0.0
        %v2195 = vmax.f32 %v1601, 0.0
        %v2196 = vmax.f32 %v1603, 0.0
        %v2197 = vmax.f32 %v1794, 0.0
        %v2198 = vmax.f32 %v1796, 0.0
        %v2199 = vmax.f32 %v1987, 0.0
        %v2200 = vmax.f32 %v1989, 0.0
        %v2201 = vmax.f32 %v1412, 0.0
        %v2202 = vmax.f32 %v1414, 0.0
        %v2203 = vmax.f32 %v1605, 0.0
        %v2204 = vmax.f32 %v1607, 0.0
        %v2205 = vmax.f32 %v1798, 0.0
        %v2206 = vmax.f32 %v1800, 0.0
        %v2207 = vmax.f32 %v1991, 0.0
        %v2208 = vmax.f32 %v1993, 0.0
        %v2209 = vmax.f32 %v1418, 0.0
        %v2210 = vmax.f32 %v1420, 0.0
        %v2211 = vmax.f32 %v1611, 0.0
        %v2212 = vmax.f32 %v1613, 0.0
        %v2213 = vmax.f32 %v1804, 0.0
        %v2214 = vmax.f32 %v1806, 0.0
        %v2215 = vmax.f32 %v1997, 0.0
        %v2216 = vmax.f32 %v1999, 0.0
        %v2217 = vmax.f32 %v1422, 0.0
        %v2218 = vmax.f32 %v1424, 0.0
        %v2219 = vmax.f32 %v1615, 0.0
        %v2220 = vmax.f32 %v1617, 0.0
        %v2221 = vmax.f32 %v1808, 0.0
        %v2222 = vmax.f32 %v1810, 0.0
        %v2223 = vmax.f32 %v2001, 0.0
        %v2224 = vmax.f32 %v2003, 0.0
        %v2225 = vmax.f32 %v1428, 0.0
        %v2226 = vmax.f32 %v1430, 0.0
        %v2227 = vmax.f32 %v1621, 0.0
        %v2228 = vmax.f32 %v1623, 0.0
        %v2229 = vmax.f32 %v1814, 0.0
        %v2230 = vmax.f32 %v1816, 0.0
        %v2231 = vmax.f32 %v2007, 0.0
        %v2232 = vmax.f32 %v2009, 0.0
        %v2233 = vmax.f32 %v1432, 0.0
        %v2234 = vmax.f32 %v1434, 0.0
        %v2235 = vmax.f32 %v1625, 0.0
        %v2236 = vmax.f32 %v1627, 0.0
        %v2237 = vmax.f32 %v1818, 0.0
        %v2238 = vmax.f32 %v1820, 0.0
        %v2239 = vmax.f32 %v2011, 0.0
        %v2240 = vmax.f32 %v2013, 0.0
        %v2241 = vmax.f32 %v1438, 0.0
        %v2242 = vmax.f32 %v1440, 0.0
        %v2243 = vmax.f32 %v1631, 0.0
        %v2244 = vmax.f32 %v1633, 0.0
        %v2245 = vmax.f32 %v1824, 0.0
        %v2246 = vmax.f32 %v1826, 0.0
        %v2247 = vmax.f32 %v2017, 0.0
        %v2248 = vmax.f32 %v2019, 0.0
        %v2249 = vmax.f32 %v1442, 0.0
        %v2250 = vmax.f32 %v1444, 0.0
        %v2251 = vmax.f32 %v1635, 0.0
        %v2252 = vmax.f32 %v1637, 0.0
        %v2253 = vmax.f32 %v1828, 0.0
        %v2254 = vmax.f32 %v1830, 0.0
        %v2255 = vmax.f32 %v2021, 0.0
        %v2256 = vmax.f32 %v2023, 0.0
        %v2257 = vmax.f32 %v1448, 0.0
        %v2258 = vmax.f32 %v1450, 0.0
        %v2259 = vmax.f32 %v1641, 0.0
        %v2260 = vmax.f32 %v1643, 0.0
        %v2261 = vmax.f32 %v1834, 0.0
        %v2262 = vmax.f32 %v1836, 0.0
        %v2263 = vmax.f32 %v2027, 0.0
        %v2264 = vmax.f32 %v2029, 0.0
        %v2265 = vmax.f32 %v1452, 0.0
        %v2266 = vmax.f32 %v1454, 0.0
        %v2267 = vmax.f32 %v1645, 0.0
        %v2268 = vmax.f32 %v1647, 0.0
        %v2269 = vmax.f32 %v1838, 0.0
        %v2270 = vmax.f32 %v1840, 0.0
        %v2271 = vmax.f32 %v2031, 0.0
        %v2272 = vmax.f32 %v2033, 0.0
        %v2273 = vmax.f32 %v1458, 0.0
        %v2274 = vmax.f32 %v1460, 0.0
        %v2275 = vmax.f32 %v1651, 0.0
        %v2276 = vmax.f32 %v1653, 0.0
        %v2277 = vmax.f32 %v1844, 0.0
        %v2278 = vmax.f32 %v1846, 0.0
        %v2279 = vmax.f32 %v2037, 0.0
        %v2280 = vmax.f32 %v2039, 0.0
        %v2281 = vmax.f32 %v1462, 0.0
        %v2282 = vmax.f32 %v1464, 0.0
        %v2283 = vmax.f32 %v1655, 0.0
        %v2284 = vmax.f32 %v1657, 0.0
        %v2285 = vmax.f32 %v1848, 0.0
        %v2286 = vmax.f32 %v1850, 0.0
        %v2287 = vmax.f32 %v2041, 0.0
        %v2288 = vmax.f32 %v2043, 0.0
        %v2289 = vmax.f32 %v1468, 0.0
        %v2290 = vmax.f32 %v1470, 0.0
        %v2291 = vmax.f32 %v1661, 0.0
        %v2292 = vmax.f32 %v1663, 0.0
        %v2293 = vmax.f32 %v1854, 0.0
        %v2294 = vmax.f32 %v1856, 0.0
        %v2295 = vmax.f32 %v2047, 0.0
        %v2296 = vmax.f32 %v2049, 0.0
        %v2297 = vmax.f32 %v1472, 0.0
        %v2298 = vmax.f32 %v1474, 0.0
        %v2299 = vmax.f32 %v1665, 0.0
        %v2300 = vmax.f32 %v1667, 0.0
        %v2301 = vmax.f32 %v1858, 0.0
        %v2302 = vmax.f32 %v1860, 0.0
        %v2303 = vmax.f32 %v2051, 0.0
        %v2304 = vmax.f32 %v2053, 0.0
        %v2305 = vmax.f32 %v1478, 0.0
        %v2306 = vmax.f32 %v1480, 0.0
        %v2307 = vmax.f32 %v1671, 0.0
        %v2308 = vmax.f32 %v1673, 0.0
        %v2309 = vmax.f32 %v1864, 0.0
        %v2310 = vmax.f32 %v1866, 0.0
        %v2311 = vmax.f32 %v2057, 0.0
        %v2312 = vmax.f32 %v2059, 0.0
        %v2313 = vmax.f32 %v1482, 0.0
        %v2314 = vmax.f32 %v1484, 0.0
        %v2315 = vmax.f32 %v1675, 0.0
        %v2316 = vmax.f32 %v1677, 0.0
        %v2317 = vmax.f32 %v1868, 0.0
        %v2318 = vmax.f32 %v1870, 0.0
        %v2319 = vmax.f32 %v2061, 0.0
        %v2320 = vmax.f32 %v2063, 0.0
        %v2321 = vmul.f32 %v2065, %v2065
        %v2322 = vmul.f32 %v2066, %v2066
        %v2323 = vmul.f32 %v2067, %v2067
        %v2324 = vmul.f32 %v2068, %v2068
        %v2325 = vmul.f32 %v2069, %v2069
        %v2326 = vmul.f32 %v2070, %v2070
        %v2327 = vmul.f32 %v2071, %v2071
        %v2328 = vmul.f32 %v2072, %v2072
        %v2329 = vmul.f32 %v2073, %v2073
        %v2330 = vmul.f32 %v2074, %v2074
        %v2331 = vmul.f32 %v2075, %v2075
        %v2332 = vmul.f32 %v2076, %v2076
        %v2333 = vmul.f32 %v2077, %v2077
        %v2334 = vmul.f32 %v2078, %v2078
        %v2335 = vmul.f32 %v2079, %v2079
        %v2336 = vmul.f32 %v2080, %v2080
        %v2337 = vmul.f32 %v2081, %v2081
        %v2338 = vmul.f32 %v2082, %v2082
        %v2339 = vmul.f32 %v2083, %v2083
        %v2340 = vmul.f32 %v2084, %v2084
        %v2341 = vmul.f32 %v2085, %v2085
        %v2342 = vmul.f32 %v2086, %v2086
        %v2343 = vmul.f32 %v2087, %v2087
        %v2344 = vmul.f32 %v2088, %v2088
        %v2345 = vmul.f32 %v2089, %v2089
        %v2346 = vmul.f32 %v2090, %v2090
        %v2347 = vmul.f32 %v2091, %v2091
        %v2348 = vmul.f32 %v2092, %v2092
        %v2349 = vmul.f32 %v2093, %v2093
        %v2350 = vmul.f32 %v2094, %v2094
        %v2351 = vmul.f32 %v2095, %v2095
        %v2352 = vmul.f32 %v2096, %v2096
        %v2353 = vmul.f32 %v2097, %v2097
        %v2354 = vmul.f32 %v2098, %v2098
        %v2355 = vmul.f32 %v2099, %v2099
        %v2356 = vmul.f32 %v2100, %v2100
        %v2357 = vmul.f32 %v2101, %v2101
        %v2358 = vmul.f32 %v2102, %v2102
        %v2359 = vmul.f32 %v2103, %v2103
        %v2360 = vmul.f32 %v2104, %v2104
        %v2361 = vmul.f32 %v2105, %v2105
        %v2362 = vmul.f32 %v2106, %v2106
        %v2363 = vmul.f32 %v2107, %v2107
        %v2364 = vmul.f32 %v2108, %v2108
        %v2365 = vmul.f32 %v2109, %v2109
        %v2366 = vmul.f32 %v2110, %v2110
        %v2367 = vmul.f32 %v2111, %v2111
        %v2368 = vmul.f32 %v2112, %v2112
        %v2369 = vmul.f32 %v2113, %v2113
        %v2370 = vmul.f32 %v2114, %v2114
        %v2371 = vmul.f32 %v2115, %v2115
        %v2372 = vmul.f32 %v2116, %v2116
        %v2373 = vmul.f32 %v2117, %v2117
        %v2374 = vmul.f32 %v2118, %v2118
        %v2375 = vmul.f32 %v2119, %v2119
        %v2376 = vmul.f32 %v2120, %v2120
        %v2377 = vmul.f32 %v2121, %v2121
        %v2378 = vmul.f32 %v2122, %v2122
        %v2379 = vmul.f32 %v2123, %v2123
        %v2380 = vmul.f32 %v2124, %v2124
        %v2381 = vmul.f32 %v2125, %v2125
        %v2382 = vmul.f32 %v2126, %v2126
        %v2383 = vmul.f32 %v2127, %v2127
        %v2384 = vmul.f32 %v2128, %v2128
        %v2385 = vmul.f32 %v2129, %v2129
        %v2386 = vmul.f32 %v2130, %v2130
        %v2387 = vmul.f32 %v2131, %v2131
        %v2388 = vmul.f32 %v2132, %v2132
        %v2389 = vmul.f32 %v2133, %v2133
        %v2390 = vmul.f32 %v2134, %v2134
        %v2391 = vmul.f32 %v2135, %v2135
        %v2392 = vmul.f32 %v2136, %v2136
        %v2393 = vmul.f32 %v2137, %v2137
        %v2394 = vmul.f32 %v2138, %v2138
        %v2395 = vmul.f32 %v2139, %v2139
        %v2396 = vmul.f32 %v2140, %v2140
        %v2397 = vmul.f32 %v2141, %v2141
        %v2398 = vmul.f32 %v2142, %v2142
        %v2399 = vmul.f32 %v2143, %v2143
        %v2400 = vmul.f32 %v2144, %v2144
        %v2401 = vmul.f32 %v2145, %v2145
        %v2402 = vmul.f32 %v2146, %v2146
        %v2403 = vmul.f32 %v2147, %v2147
        %v2404 = vmul.f32 %v2148, %v2148
        %v2405 = vmul.f32 %v2149, %v2149
        %v2406 = vmul.f32 %v2150, %v2150
        %v2407 = vmul.f32 %v2151, %v2151
        %v2408 = vmul.f32 %v2152, %v2152
        %v2409 = vmul.f32 %v2153, %v2153
        %v2410 = vmul.f32 %v2154, %v2154
        %v2411 = vmul.f32 %v2155, %v2155
        %v2412 = vmul.f32 %v2156, %v2156
        %v2413 = vmul.f32 %v2157, %v2157
        %v2414 = vmul.f32 %v2158, %v2158
        %v2415 = vmul.f32 %v2159, %v2159
        %v2416 = vmul.f32 %v2160, %v2160
        %v2417 = vmul.f32 %v2161, %v2161
        %v2418 = vmul.f32 %v2162, %v2162
        %v2419 = vmul.f32 %v2163, %v2163
        %v2420 = vmul.f32 %v2164, %v2164
        %v2421 = vmul.f32 %v2165, %v2165
        %v2422 = vmul.f32 %v2166, %v2166
        %v2423 = vmul.f32 %v2167, %v2167
        %v2424 = vmul.f32 %v2168, %v2168
        %v2425 = vmul.f32 %v2169, %v2169
        %v2426 = vmul.f32 %v2170, %v2170
        %v2427 = vmul.f32 %v2171, %v2171
        %v2428 = vmul.f32 %v2172, %v2172
        %v2429 = vmul.f32 %v2173, %v2173
        %v2430 = vmul.f32 %v2174, %v2174
        %v2431 = vmul.f32 %v2175, %v2175
        %v2432 = vmul.f32 %v2176, %v2176
        %v2433 = vmul.f32 %v2177, %v2177
        %v2434 = vmul.f32 %v2178, %v2178
        %v2435 = vmul.f32 %v2179, %v2179
        %v2436 = vmul.f32 %v2180, %v2180
        %v2437 = vmul.f32 %v2181, %v2181
        %v2438 = vmul.f32 %v2182, %v2182
        %v2439 = vmul.f32 %v2183, %v2183
        %v2440 = vmul.f32 %v2184, %v2184
        %v2441 = vmul.f32 %v2185, %v2185
        %v2442 = vmul.f32 %v2186, %v2186
        %v2443 = vmul.f32 %v2187, %v2187
        %v2444 = vmul.f32 %v2188, %v2188
        %v2445 = vmul.f32 %v2189, %v2189
        %v2446 = vmul.f32 %v2190, %v2190
        %v2447 = vmul.f32 %v2191, %v2191
        %v2448 = vmul.f32 %v2192, %v2192
        %v2449 = vmul.f32 %v2193, %v2193
        %v2450 = vmul.f32 %v2194, %v2194
        %v2451 = vmul.f32 %v2195, %v2195
        %v2452 = vmul.f32 %v2196, %v2196
        %v2453 = vmul.f32 %v2197, %v2197
        %v2454 = vmul.f32 %v2198, %v2198
        %v2455 = vmul.f32 %v2199, %v2199
        %v2456 = vmul.f32 %v2200, %v2200
        %v2457 = vmul.f32 %v2201, %v2201
        %v2458 = vmul.f32 %v2202, %v2202
        %v2459 = vmul.f32 %v2203, %v2203
        %v2460 = vmul.f32 %v2204, %v2204
        %v2461 = vmul.f32 %v2205, %v2205
        %v2462 = vmul.f32 %v2206, %v2206
        %v2463 = vmul.f32 %v2207, %v2207
        %v2464 = vmul.f32 %v2208, %v2208
        %v2465 = vmul.f32 %v2209, %v2209
        %v2466 = vmul.f32 %v2210, %v2210
        %v2467 = vmul.f32 %v2211, %v2211
        %v2468 = vmul.f32 %v2212, %v2212
        %v2469 = vmul.f32 %v2213, %v2213
        %v2470 = vmul.f32 %v2214, %v2214
        %v2471 = vmul.f32 %v2215, %v2215
        %v2472 = vmul.f32 %v2216, %v2216
        %v2473 = vmul.f32 %v2217, %v2217
        %v2474 = vmul.f32 %v2218, %v2218
        %v2475 = vmul.f32 %v2219, %v2219
        %v2476 = vmul.f32 %v2220, %v2220
        %v2477 = vmul.f32 %v2221, %v2221
        %v2478 = vmul.f32 %v2222, %v2222
        %v2479 = vmul.f32 %v2223, %v2223
        %v2480 = vmul.f32 %v2224, %v2224
        %v2481 = vmul.f32 %v2225, %v2225
        %v2482 = vmul.f32 %v2226, %v2226
        %v2483 = vmul.f32 %v2227, %v2227
        %v2484 = vmul.f32 %v2228, %v2228
        %v2485 = vmul.f32 %v2229, %v2229
        %v2486 = vmul.f32 %v2230, %v2230
        %v2487 = vmul.f32 %v2231, %v2231
        %v2488 = vmul.f32 %v2232, %v2232
        %v2489 = vmul.f32 %v2233, %v2233
        %v2490 = vmul.f32 %v2234, %v2234
        %v2491 = vmul.f32 %v2235, %v2235
        %v2492 = vmul.f32 %v2236, %v2236
        %v2493 = vmul.f32 %v2237, %v2237
        %v2494 = vmul.f32 %v2238, %v2238
        %v2495 = vmul.f32 %v2239, %v2239
        %v2496 = vmul.f32 %v2240, %v2240
        %v2497 = vmul.f32 %v2241, %v2241
        %v2498 = vmul.f32 %v2242, %v2242
        %v2499 = vmul.f32 %v2243, %v2243
        %v2500 = vmul.f32 %v2244, %v2244
        %v2501 = vmul.f32 %v2245, %v2245
        %v2502 = vmul.f32 %v2246, %v2246
        %v2503 = vmul.f32 %v2247, %v2247
        %v2504 = vmul.f32 %v2248, %v2248
        %v2505 = vmul.f32 %v2249, %v2249
        %v2506 = vmul.f32 %v2250, %v2250
        %v2507 = vmul.f32 %v2251, %v2251
        %v2508 = vmul.f32 %v2252, %v2252
        %v2509 = vmul.f32 %v2253, %v2253
        %v2510 = vmul.f32 %v2254, %v2254
        %v2511 = vmul.f32 %v2255, %v2255
        %v2512 = vmul.f32 %v2256, %v2256
        %v2513 = vmul.f32 %v2257, %v2257
        %v2514 = vmul.f32 %v2258, %v2258
        %v2515 = vmul.f32 %v2259, %v2259
        %v2516 = vmul.f32 %v2260, %v2260
        %v2517 = vmul.f32 %v2261, %v2261
        %v2518 = vmul.f32 %v2262, %v2262
        %v2519 = vmul.f32 %v2263, %v2263
        %v2520 = vmul.f32 %v2264, %v2264
        %v2521 = vmul.f32 %v2265, %v2265
        %v2522 = vmul.f32 %v2266, %v2266
        %v2523 = vmul.f32 %v2267, %v2267
        %v2524 = vmul.f32 %v2268, %v2268
        %v2525 = vmul.f32 %v2269, %v2269
        %v2526 = vmul.f32 %v2270, %v2270
        %v2527 = vmul.f32 %v2271, %v2271
        %v2528 = vmul.f32 %v2272, %v2272
        %v2529 = vmul.f32 %v2273, %v2273
        %v2530 = vmul.f32 %v2274, %v2274
        %v2531 = vmul.f32 %v2275, %v2275
        %v2532 = vmul.f32 %v2276, %v2276
        %v2533 = vmul.f32 %v2277, %v2277
        %v2534 = vmul.f32 %v2278, %v2278
        %v2535 = vmul.f32 %v2279, %v2279
        %v2536 = vmul.f32 %v2280, %v2280
        %v2537 = vmul.f32 %v2281, %v2281
        %v2538 = vmul.f32 %v2282, %v2282
        %v2539 = vmul.f32 %v2283, %v2283
        %v2540 = vmul.f32 %v2284, %v2284
        %v2541 = vmul.f32 %v2285, %v2285
        %v2542 = vmul.f32 %v2286, %v2286
        %v2543 = vmul.f32 %v2287, %v2287
        %v2544 = vmul.f32 %v2288, %v2288
        %v2545 = vmul.f32 %v2289, %v2289
        %v2546 = vmul.f32 %v2290, %v2290
        %v2547 = vmul.f32 %v2291, %v2291
        %v2548 = vmul.f32 %v2292, %v2292
        %v2549 = vmul.f32 %v2293, %v2293
        %v2550 = vmul.f32 %v2294, %v2294
        %v2551 = vmul.f32 %v2295, %v2295
        %v2552 = vmul.f32 %v2296, %v2296
        %v2553 = vmul.f32 %v2297, %v2297
        %v2554 = vmul.f32 %v2298, %v2298
        %v2555 = vmul.f32 %v2299, %v2299
        %v2556 = vmul.f32 %v2300, %v2300
        %v2557 = vmul.f32 %v2301, %v2301
        %v2558 = vmul.f32 %v2302, %v2302
        %v2559 = vmul.f32 %v2303, %v2303
        %v2560 = vmul.f32 %v2304, %v2304
        %v2561 = vmul.f32 %v2305, %v2305
        %v2562 = vmul.f32 %v2306, %v2306
        %v2563 = vmul.f32 %v2307, %v2307
        %v2564 = vmul.f32 %v2308, %v2308
        %v2565 = vmul.f32 %v2309, %v2309
        %v2566 = vmul.f32 %v2310, %v2310
        %v2567 = vmul.f32 %v2311, %v2311
        %v2568 = vmul.f32 %v2312, %v2312
        %v2569 = vmul.f32 %v2313, %v2313
        %v2570 = vmul.f32 %v2314, %v2314
        %v2571 = vmul.f32 %v2315, %v2315
        %v2572 = vmul.f32 %v2316, %v2316
        %v2573 = vmul.f32 %v2317, %v2317
        %v2574 = vmul.f32 %v2318, %v2318
        %v2575 = vmul.f32 %v2319, %v2319
        %v2576 = vmul.f32 %v2320, %v2320
        %v2577 = vld [vmem:[%s230] sm:$0xff]
        %v2578 = vld [vmem:[%s230 + $0x8] sm:$0xff]
        %v2579 = vld [vmem:[%s230 + $0x10] sm:$0xff]
        %v2580 = vld [vmem:[%s230 + $0x18] sm:$0xff]
        %v2581 = vld [vmem:[%s230 + $0x20] sm:$0xff]
        %v2582 = vld [vmem:[%s230 + $0x28] sm:$0xff]
        %v2583 = vld [vmem:[%s230 + $0x30] sm:$0xff]
        %v2584 = vld [vmem:[%s230 + $0x38] sm:$0xff]
        %v2585 = vld [vmem:[%s230 + $0x40] sm:$0xff]
        %v2586 = vld [vmem:[%s230 + $0x48] sm:$0xff]
        %v2587 = vld [vmem:[%s230 + $0x50] sm:$0xff]
        %v2588 = vld [vmem:[%s230 + $0x58] sm:$0xff]
        %v2589 = vld [vmem:[%s230 + $0x60] sm:$0xff]
        %v2590 = vld [vmem:[%s230 + $0x68] sm:$0xff]
        %v2591 = vld [vmem:[%s230 + $0x70] sm:$0xff]
        %v2592 = vld [vmem:[%s230 + $0x78] sm:$0xff]
        %v2593 = vld [vmem:[%s230 + $0x80] sm:$0xff]
        %v2594 = vld [vmem:[%s230 + $0x88] sm:$0xff]
        %v2595 = vld [vmem:[%s230 + $0x90] sm:$0xff]
        %v2596 = vld [vmem:[%s230 + $0x98] sm:$0xff]
        %v2597 = vld [vmem:[%s230 + $0xa0] sm:$0xff]
        %v2598 = vld [vmem:[%s230 + $0xa8] sm:$0xff]
        %v2599 = vld [vmem:[%s230 + $0xb0] sm:$0xff]
        %v2600 = vld [vmem:[%s230 + $0xb8] sm:$0xff]
        %v2601 = vld [vmem:[%s230 + $0xc0] sm:$0xff]
        %v2602 = vld [vmem:[%s230 + $0xc8] sm:$0xff]
        %v2603 = vld [vmem:[%s230 + $0xd0] sm:$0xff]
        %v2604 = vld [vmem:[%s230 + $0xd8] sm:$0xff]
        %v2605 = vld [vmem:[%s230 + $0xe0] sm:$0xff]
        %v2606 = vld [vmem:[%s230 + $0xe8] sm:$0xff]
        %v2607 = vld [vmem:[%s230 + $0xf0] sm:$0xff]
        %v2608 = vld [vmem:[%s230 + $0xf8] sm:$0xff]
        %v2609 = vld [vmem:[%s230 + $0x100] sm:$0xff]
        %v2610 = vld [vmem:[%s230 + $0x108] sm:$0xff]
        %v2611 = vld [vmem:[%s230 + $0x110] sm:$0xff]
        %v2612 = vld [vmem:[%s230 + $0x118] sm:$0xff]
        %v2613 = vld [vmem:[%s230 + $0x120] sm:$0xff]
        %v2614 = vld [vmem:[%s230 + $0x128] sm:$0xff]
        %v2615 = vld [vmem:[%s230 + $0x130] sm:$0xff]
        %v2616 = vld [vmem:[%s230 + $0x138] sm:$0xff]
        %v2617 = vld [vmem:[%s230 + $0x140] sm:$0xff]
        %v2618 = vld [vmem:[%s230 + $0x148] sm:$0xff]
        %v2619 = vld [vmem:[%s230 + $0x150] sm:$0xff]
        %v2620 = vld [vmem:[%s230 + $0x158] sm:$0xff]
        %v2621 = vld [vmem:[%s230 + $0x160] sm:$0xff]
        %v2622 = vld [vmem:[%s230 + $0x168] sm:$0xff]
        %v2623 = vld [vmem:[%s230 + $0x170] sm:$0xff]
        %v2624 = vld [vmem:[%s230 + $0x178] sm:$0xff]
        %v2625 = vld [vmem:[%s230 + $0x180] sm:$0xff]
        %v2626 = vld [vmem:[%s230 + $0x188] sm:$0xff]
        %v2627 = vld [vmem:[%s230 + $0x190] sm:$0xff]
        %v2628 = vld [vmem:[%s230 + $0x198] sm:$0xff]
        %v2629 = vld [vmem:[%s230 + $0x1a0] sm:$0xff]
        %v2630 = vld [vmem:[%s230 + $0x1a8] sm:$0xff]
        %v2631 = vld [vmem:[%s230 + $0x1b0] sm:$0xff]
        %v2632 = vld [vmem:[%s230 + $0x1b8] sm:$0xff]
        %v2633 = vld [vmem:[%s230 + $0x1c0] sm:$0xff]
        %v2634 = vld [vmem:[%s230 + $0x1c8] sm:$0xff]
        %v2635 = vld [vmem:[%s230 + $0x1d0] sm:$0xff]
        %v2636 = vld [vmem:[%s230 + $0x1d8] sm:$0xff]
        %v2637 = vld [vmem:[%s230 + $0x1e0] sm:$0xff]
        %v2638 = vld [vmem:[%s230 + $0x1e8] sm:$0xff]
        %v2639 = vld [vmem:[%s230 + $0x1f0] sm:$0xff]
        %v2640 = vld [vmem:[%s230 + $0x1f8] sm:$0xff]
        %v2641 = vpack.c.bf16 %v2329, %v2321
        %v2642 = vpack.c.bf16 %v2330, %v2322
        %v2643 = vpack.c.bf16 %v2331, %v2323
        %v2644 = vpack.c.bf16 %v2332, %v2324
        %v2645 = vpack.c.bf16 %v2333, %v2325
        %v2646 = vpack.c.bf16 %v2334, %v2326
        %v2647 = vpack.c.bf16 %v2335, %v2327
        %v2648 = vpack.c.bf16 %v2336, %v2328
        %v2649 = vpack.c.bf16 %v2345, %v2337
        %v2650 = vpack.c.bf16 %v2346, %v2338
        %v2651 = vpack.c.bf16 %v2347, %v2339
        %v2652 = vpack.c.bf16 %v2348, %v2340
        %v2653 = vpack.c.bf16 %v2349, %v2341
        %v2654 = vpack.c.bf16 %v2350, %v2342
        %v2655 = vpack.c.bf16 %v2351, %v2343
        %v2656 = vpack.c.bf16 %v2352, %v2344
        %v2657 = vpack.c.bf16 %v2361, %v2353
        %v2658 = vpack.c.bf16 %v2362, %v2354
        %v2659 = vpack.c.bf16 %v2363, %v2355
        %v2660 = vpack.c.bf16 %v2364, %v2356
        %v2661 = vpack.c.bf16 %v2365, %v2357
        %v2662 = vpack.c.bf16 %v2366, %v2358
        %v2663 = vpack.c.bf16 %v2367, %v2359
        %v2664 = vpack.c.bf16 %v2368, %v2360
        %v2665 = vpack.c.bf16 %v2377, %v2369
        %v2666 = vpack.c.bf16 %v2378, %v2370
        %v2667 = vpack.c.bf16 %v2379, %v2371
        %v2668 = vpack.c.bf16 %v2380, %v2372
        %v2669 = vpack.c.bf16 %v2381, %v2373
        %v2670 = vpack.c.bf16 %v2382, %v2374
        %v2671 = vpack.c.bf16 %v2383, %v2375
        %v2672 = vpack.c.bf16 %v2384, %v2376
        %v2673 = vpack.c.bf16 %v2393, %v2385
        %v2674 = vpack.c.bf16 %v2394, %v2386
        %v2675 = vpack.c.bf16 %v2395, %v2387
        %v2676 = vpack.c.bf16 %v2396, %v2388
        %v2677 = vpack.c.bf16 %v2397, %v2389
        %v2678 = vpack.c.bf16 %v2398, %v2390
        %v2679 = vpack.c.bf16 %v2399, %v2391
        %v2680 = vpack.c.bf16 %v2400, %v2392
        %v2681 = vpack.c.bf16 %v2409, %v2401
        %v2682 = vpack.c.bf16 %v2410, %v2402
        %v2683 = vpack.c.bf16 %v2411, %v2403
        %v2684 = vpack.c.bf16 %v2412, %v2404
        %v2685 = vpack.c.bf16 %v2413, %v2405
        %v2686 = vpack.c.bf16 %v2414, %v2406
        %v2687 = vpack.c.bf16 %v2415, %v2407
        %v2688 = vpack.c.bf16 %v2416, %v2408
        %v2689 = vpack.c.bf16 %v2425, %v2417
        %v2690 = vpack.c.bf16 %v2426, %v2418
        %v2691 = vpack.c.bf16 %v2427, %v2419
        %v2692 = vpack.c.bf16 %v2428, %v2420
        %v2693 = vpack.c.bf16 %v2429, %v2421
        %v2694 = vpack.c.bf16 %v2430, %v2422
        %v2695 = vpack.c.bf16 %v2431, %v2423
        %v2696 = vpack.c.bf16 %v2432, %v2424
        %v2697 = vpack.c.bf16 %v2441, %v2433
        %v2698 = vpack.c.bf16 %v2442, %v2434
        %v2699 = vpack.c.bf16 %v2443, %v2435
        %v2700 = vpack.c.bf16 %v2444, %v2436
        %v2701 = vpack.c.bf16 %v2445, %v2437
        %v2702 = vpack.c.bf16 %v2446, %v2438
        %v2703 = vpack.c.bf16 %v2447, %v2439
        %v2704 = vpack.c.bf16 %v2448, %v2440
        %v2705 = vpack.c.bf16 %v2457, %v2449
        %v2706 = vpack.c.bf16 %v2458, %v2450
        %v2707 = vpack.c.bf16 %v2459, %v2451
        %v2708 = vpack.c.bf16 %v2460, %v2452
        %v2709 = vpack.c.bf16 %v2461, %v2453
        %v2710 = vpack.c.bf16 %v2462, %v2454
        %v2711 = vpack.c.bf16 %v2463, %v2455
        %v2712 = vpack.c.bf16 %v2464, %v2456
        %v2713 = vpack.c.bf16 %v2473, %v2465
        %v2714 = vpack.c.bf16 %v2474, %v2466
        %v2715 = vpack.c.bf16 %v2475, %v2467
        %v2716 = vpack.c.bf16 %v2476, %v2468
        %v2717 = vpack.c.bf16 %v2477, %v2469
        %v2718 = vpack.c.bf16 %v2478, %v2470
        %v2719 = vpack.c.bf16 %v2479, %v2471
        %v2720 = vpack.c.bf16 %v2480, %v2472
        %v2721 = vpack.c.bf16 %v2489, %v2481
        %v2722 = vpack.c.bf16 %v2490, %v2482
        %v2723 = vpack.c.bf16 %v2491, %v2483
        %v2724 = vpack.c.bf16 %v2492, %v2484
        %v2725 = vpack.c.bf16 %v2493, %v2485
        %v2726 = vpack.c.bf16 %v2494, %v2486
        %v2727 = vpack.c.bf16 %v2495, %v2487
        %v2728 = vpack.c.bf16 %v2496, %v2488
        %v2729 = vpack.c.bf16 %v2505, %v2497
        %v2730 = vpack.c.bf16 %v2506, %v2498
        %v2731 = vpack.c.bf16 %v2507, %v2499
        %v2732 = vpack.c.bf16 %v2508, %v2500
        %v2733 = vpack.c.bf16 %v2509, %v2501
        %v2734 = vpack.c.bf16 %v2510, %v2502
        %v2735 = vpack.c.bf16 %v2511, %v2503
        %v2736 = vpack.c.bf16 %v2512, %v2504
        %v2737 = vpack.c.bf16 %v2521, %v2513
        %v2738 = vpack.c.bf16 %v2522, %v2514
        %v2739 = vpack.c.bf16 %v2523, %v2515
        %v2740 = vpack.c.bf16 %v2524, %v2516
        %v2741 = vpack.c.bf16 %v2525, %v2517
        %v2742 = vpack.c.bf16 %v2526, %v2518
        %v2743 = vpack.c.bf16 %v2527, %v2519
        %v2744 = vpack.c.bf16 %v2528, %v2520
        %v2745 = vpack.c.bf16 %v2537, %v2529
        %v2746 = vpack.c.bf16 %v2538, %v2530
        %v2747 = vpack.c.bf16 %v2539, %v2531
        %v2748 = vpack.c.bf16 %v2540, %v2532
        %v2749 = vpack.c.bf16 %v2541, %v2533
        %v2750 = vpack.c.bf16 %v2542, %v2534
        %v2751 = vpack.c.bf16 %v2543, %v2535
        %v2752 = vpack.c.bf16 %v2544, %v2536
        %v2753 = vpack.c.bf16 %v2553, %v2545
        %v2754 = vpack.c.bf16 %v2554, %v2546
        %v2755 = vpack.c.bf16 %v2555, %v2547
        %v2756 = vpack.c.bf16 %v2556, %v2548
        %v2757 = vpack.c.bf16 %v2557, %v2549
        %v2758 = vpack.c.bf16 %v2558, %v2550
        %v2759 = vpack.c.bf16 %v2559, %v2551
        %v2760 = vpack.c.bf16 %v2560, %v2552
        %v2761 = vpack.c.bf16 %v2569, %v2561
        %v2762 = vpack.c.bf16 %v2570, %v2562
        %v2763 = vpack.c.bf16 %v2571, %v2563
        %v2764 = vpack.c.bf16 %v2572, %v2564
        %v2765 = vpack.c.bf16 %v2573, %v2565
        %v2766 = vpack.c.bf16 %v2574, %v2566
        %v2767 = vpack.c.bf16 %v2575, %v2567
        %v2768 = vpack.c.bf16 %v2576, %v2568
        %v2897 = vunpack.c.l.b16 %v525
        %v2898 = vunpack.c.h.b16 %v525
        %v2899 = vunpack.c.l.b16 %v526
        %v2900 = vunpack.c.h.b16 %v526
        %v2901 = vunpack.c.l.b16 %v527
        %v2902 = vunpack.c.h.b16 %v527
        %v2903 = vunpack.c.l.b16 %v528
        %v2904 = vunpack.c.h.b16 %v528
        %v2905 = vunpack.c.l.b16 %v529
        %v2906 = vunpack.c.h.b16 %v529
        %v2907 = vunpack.c.l.b16 %v530
        %v2908 = vunpack.c.h.b16 %v530
        %v2909 = vunpack.c.l.b16 %v531
        %v2910 = vunpack.c.h.b16 %v531
        %v2911 = vunpack.c.l.b16 %v532
        %v2912 = vunpack.c.h.b16 %v532
        %v2913 = vunpack.c.l.b16 %v533
        %v2914 = vunpack.c.h.b16 %v533
        %v2915 = vunpack.c.l.b16 %v534
        %v2916 = vunpack.c.h.b16 %v534
        %v2917 = vunpack.c.l.b16 %v535
        %v2918 = vunpack.c.h.b16 %v535
        %v2919 = vunpack.c.l.b16 %v536
        %v2920 = vunpack.c.h.b16 %v536
        %v2921 = vunpack.c.l.b16 %v537
        %v2922 = vunpack.c.h.b16 %v537
        %v2923 = vunpack.c.l.b16 %v538
        %v2924 = vunpack.c.h.b16 %v538
        %v2925 = vunpack.c.l.b16 %v539
        %v2926 = vunpack.c.h.b16 %v539
        %v2927 = vunpack.c.l.b16 %v540
        %v2928 = vunpack.c.h.b16 %v540
        %v2929 = vunpack.c.l.b16 %v541
        %v2930 = vunpack.c.h.b16 %v541
        %v2931 = vunpack.c.l.b16 %v542
        %v2932 = vunpack.c.h.b16 %v542
        %v2933 = vunpack.c.l.b16 %v543
        %v2934 = vunpack.c.h.b16 %v543
        %v2935 = vunpack.c.l.b16 %v544
        %v2936 = vunpack.c.h.b16 %v544
        %v2937 = vunpack.c.l.b16 %v545
        %v2938 = vunpack.c.h.b16 %v545
        %v2939 = vunpack.c.l.b16 %v546
        %v2940 = vunpack.c.h.b16 %v546
        %v2941 = vunpack.c.l.b16 %v547
        %v2942 = vunpack.c.h.b16 %v547
        %v2943 = vunpack.c.l.b16 %v548
        %v2944 = vunpack.c.h.b16 %v548
        %v2945 = vunpack.c.l.b16 %v549
        %v2946 = vunpack.c.h.b16 %v549
        %v2947 = vunpack.c.l.b16 %v550
        %v2948 = vunpack.c.h.b16 %v550
        %v2949 = vunpack.c.l.b16 %v551
        %v2950 = vunpack.c.h.b16 %v551
        %v2951 = vunpack.c.l.b16 %v552
        %v2952 = vunpack.c.h.b16 %v552
        %v2953 = vunpack.c.l.b16 %v553
        %v2954 = vunpack.c.h.b16 %v553
        %v2955 = vunpack.c.l.b16 %v554
        %v2956 = vunpack.c.h.b16 %v554
        %v2957 = vunpack.c.l.b16 %v555
        %v2958 = vunpack.c.h.b16 %v555
        %v2959 = vunpack.c.l.b16 %v556
        %v2960 = vunpack.c.h.b16 %v556
        %v2961 = vunpack.c.l.b16 %v557
        %v2962 = vunpack.c.h.b16 %v557
        %v2963 = vunpack.c.l.b16 %v558
        %v2964 = vunpack.c.h.b16 %v558
        %v2965 = vunpack.c.l.b16 %v559
        %v2966 = vunpack.c.h.b16 %v559
        %v2967 = vunpack.c.l.b16 %v560
        %v2968 = vunpack.c.h.b16 %v560
        %v2969 = vunpack.c.l.b16 %v561
        %v2970 = vunpack.c.h.b16 %v561
        %v2971 = vunpack.c.l.b16 %v562
        %v2972 = vunpack.c.h.b16 %v562
        %v2973 = vunpack.c.l.b16 %v563
        %v2974 = vunpack.c.h.b16 %v563
        %v2975 = vunpack.c.l.b16 %v564
        %v2976 = vunpack.c.h.b16 %v564
        %v2977 = vunpack.c.l.b16 %v565
        %v2978 = vunpack.c.h.b16 %v565
        %v2979 = vunpack.c.l.b16 %v566
        %v2980 = vunpack.c.h.b16 %v566
        %v2981 = vunpack.c.l.b16 %v567
        %v2982 = vunpack.c.h.b16 %v567
        %v2983 = vunpack.c.l.b16 %v568
        %v2984 = vunpack.c.h.b16 %v568
        %v2985 = vunpack.c.l.b16 %v569
        %v2986 = vunpack.c.h.b16 %v569
        %v2987 = vunpack.c.l.b16 %v570
        %v2988 = vunpack.c.h.b16 %v570
        %v2989 = vunpack.c.l.b16 %v571
        %v2990 = vunpack.c.h.b16 %v571
        %v2991 = vunpack.c.l.b16 %v572
        %v2992 = vunpack.c.h.b16 %v572
        %v2993 = vunpack.c.l.b16 %v573
        %v2994 = vunpack.c.h.b16 %v573
        %v2995 = vunpack.c.l.b16 %v574
        %v2996 = vunpack.c.h.b16 %v574
        %v2997 = vunpack.c.l.b16 %v575
        %v2998 = vunpack.c.h.b16 %v575
        %v2999 = vunpack.c.l.b16 %v576
        %v3000 = vunpack.c.h.b16 %v576
        %v3001 = vunpack.c.l.b16 %v577
        %v3002 = vunpack.c.h.b16 %v577
        %v3003 = vunpack.c.l.b16 %v578
        %v3004 = vunpack.c.h.b16 %v578
        %v3005 = vunpack.c.l.b16 %v579
        %v3006 = vunpack.c.h.b16 %v579
        %v3007 = vunpack.c.l.b16 %v580
        %v3008 = vunpack.c.h.b16 %v580
        %v3009 = vunpack.c.l.b16 %v581
        %v3010 = vunpack.c.h.b16 %v581
        %v3011 = vunpack.c.l.b16 %v582
        %v3012 = vunpack.c.h.b16 %v582
        %v3013 = vunpack.c.l.b16 %v583
        %v3014 = vunpack.c.h.b16 %v583
        %v3015 = vunpack.c.l.b16 %v584
        %v3016 = vunpack.c.h.b16 %v584
        %v3017 = vunpack.c.l.b16 %v585
        %v3018 = vunpack.c.h.b16 %v585
        %v3019 = vunpack.c.l.b16 %v586
        %v3020 = vunpack.c.h.b16 %v586
        %v3021 = vunpack.c.l.b16 %v587
        %v3022 = vunpack.c.h.b16 %v587
        %v3023 = vunpack.c.l.b16 %v588
        %v3024 = vunpack.c.h.b16 %v588
        %v3025 = vunpack.c.l.b16 %v589
        %v3026 = vunpack.c.h.b16 %v589
        %v3027 = vunpack.c.l.b16 %v590
        %v3028 = vunpack.c.h.b16 %v590
        %v3029 = vunpack.c.l.b16 %v591
        %v3030 = vunpack.c.h.b16 %v591
        %v3031 = vunpack.c.l.b16 %v592
        %v3032 = vunpack.c.h.b16 %v592
        %v3033 = vunpack.c.l.b16 %v593
        %v3034 = vunpack.c.h.b16 %v593
        %v3035 = vunpack.c.l.b16 %v594
        %v3036 = vunpack.c.h.b16 %v594
        %v3037 = vunpack.c.l.b16 %v595
        %v3038 = vunpack.c.h.b16 %v595
        %v3039 = vunpack.c.l.b16 %v596
        %v3040 = vunpack.c.h.b16 %v596
        %v3041 = vunpack.c.l.b16 %v597
        %v3042 = vunpack.c.h.b16 %v597
        %v3043 = vunpack.c.l.b16 %v598
        %v3044 = vunpack.c.h.b16 %v598
        %v3045 = vunpack.c.l.b16 %v599
        %v3046 = vunpack.c.h.b16 %v599
        %v3047 = vunpack.c.l.b16 %v600
        %v3048 = vunpack.c.h.b16 %v600
        %v3049 = vunpack.c.l.b16 %v601
        %v3050 = vunpack.c.h.b16 %v601
        %v3051 = vunpack.c.l.b16 %v602
        %v3052 = vunpack.c.h.b16 %v602
        %v3053 = vunpack.c.l.b16 %v603
        %v3054 = vunpack.c.h.b16 %v603
        %v3055 = vunpack.c.l.b16 %v604
        %v3056 = vunpack.c.h.b16 %v604
        %v3057 = vunpack.c.l.b16 %v605
        %v3058 = vunpack.c.h.b16 %v605
        %v3059 = vunpack.c.l.b16 %v606
        %v3060 = vunpack.c.h.b16 %v606
        %v3061 = vunpack.c.l.b16 %v607
        %v3062 = vunpack.c.h.b16 %v607
        %v3063 = vunpack.c.l.b16 %v608
        %v3064 = vunpack.c.h.b16 %v608
        %v3065 = vunpack.c.l.b16 %v609
        %v3066 = vunpack.c.h.b16 %v609
        %v3067 = vunpack.c.l.b16 %v610
        %v3068 = vunpack.c.h.b16 %v610
        %v3069 = vunpack.c.l.b16 %v611
        %v3070 = vunpack.c.h.b16 %v611
        %v3071 = vunpack.c.l.b16 %v612
        %v3072 = vunpack.c.h.b16 %v612
        %v3073 = vunpack.c.l.b16 %v613
        %v3074 = vunpack.c.h.b16 %v613
        %v3075 = vunpack.c.l.b16 %v614
        %v3076 = vunpack.c.h.b16 %v614
        %v3077 = vunpack.c.l.b16 %v615
        %v3078 = vunpack.c.h.b16 %v615
        %v3079 = vunpack.c.l.b16 %v616
        %v3080 = vunpack.c.h.b16 %v616
        %v3081 = vunpack.c.l.b16 %v617
        %v3082 = vunpack.c.h.b16 %v617
        %v3083 = vunpack.c.l.b16 %v618
        %v3084 = vunpack.c.h.b16 %v618
        %v3085 = vunpack.c.l.b16 %v619
        %v3086 = vunpack.c.h.b16 %v619
        %v3087 = vunpack.c.l.b16 %v620
        %v3088 = vunpack.c.h.b16 %v620
        %v3089 = vunpack.c.l.b16 %v621
        %v3090 = vunpack.c.h.b16 %v621
        %v3091 = vunpack.c.l.b16 %v622
        %v3092 = vunpack.c.h.b16 %v622
        %v3093 = vunpack.c.l.b16 %v623
        %v3094 = vunpack.c.h.b16 %v623
        %v3095 = vunpack.c.l.b16 %v624
        %v3096 = vunpack.c.h.b16 %v624
        %v3097 = vunpack.c.l.b16 %v625
        %v3098 = vunpack.c.h.b16 %v625
        %v3099 = vunpack.c.l.b16 %v626
        %v3100 = vunpack.c.h.b16 %v626
        %v3101 = vunpack.c.l.b16 %v627
        %v3102 = vunpack.c.h.b16 %v627
        %v3103 = vunpack.c.l.b16 %v628
        %v3104 = vunpack.c.h.b16 %v628
        %v3105 = vunpack.c.l.b16 %v629
        %v3106 = vunpack.c.h.b16 %v629
        %v3107 = vunpack.c.l.b16 %v630
        %v3108 = vunpack.c.h.b16 %v630
        %v3109 = vunpack.c.l.b16 %v631
        %v3110 = vunpack.c.h.b16 %v631
        %v3111 = vunpack.c.l.b16 %v632
        %v3112 = vunpack.c.h.b16 %v632
        %v3113 = vunpack.c.l.b16 %v633
        %v3114 = vunpack.c.h.b16 %v633
        %v3115 = vunpack.c.l.b16 %v634
        %v3116 = vunpack.c.h.b16 %v634
        %v3117 = vunpack.c.l.b16 %v635
        %v3118 = vunpack.c.h.b16 %v635
        %v3119 = vunpack.c.l.b16 %v636
        %v3120 = vunpack.c.h.b16 %v636
        %v3121 = vunpack.c.l.b16 %v637
        %v3122 = vunpack.c.h.b16 %v637
        %v3123 = vunpack.c.l.b16 %v638
        %v3124 = vunpack.c.h.b16 %v638
        %v3125 = vunpack.c.l.b16 %v639
        %v3126 = vunpack.c.h.b16 %v639
        %v3127 = vunpack.c.l.b16 %v640
        %v3128 = vunpack.c.h.b16 %v640
        %v3129 = vunpack.c.l.b16 %v641
        %v3130 = vunpack.c.h.b16 %v641
        %v3131 = vunpack.c.l.b16 %v642
        %v3132 = vunpack.c.h.b16 %v642
        %v3133 = vunpack.c.l.b16 %v643
        %v3134 = vunpack.c.h.b16 %v643
        %v3135 = vunpack.c.l.b16 %v644
        %v3136 = vunpack.c.h.b16 %v644
        %v3137 = vunpack.c.l.b16 %v645
        %v3138 = vunpack.c.h.b16 %v645
        %v3139 = vunpack.c.l.b16 %v646
        %v3140 = vunpack.c.h.b16 %v646
        %v3141 = vunpack.c.l.b16 %v647
        %v3142 = vunpack.c.h.b16 %v647
        %v3143 = vunpack.c.l.b16 %v648
        %v3144 = vunpack.c.h.b16 %v648
        %v3145 = vunpack.c.l.b16 %v649
        %v3146 = vunpack.c.h.b16 %v649
        %v3147 = vunpack.c.l.b16 %v650
        %v3148 = vunpack.c.h.b16 %v650
        %v3149 = vunpack.c.l.b16 %v651
        %v3150 = vunpack.c.h.b16 %v651
        %v3151 = vunpack.c.l.b16 %v652
        %v3152 = vunpack.c.h.b16 %v652
        %v3153 = vpack.c.b16 %v2899, %v2897
        %v3154 = vpack.c.b16 %v2900, %v2898
        %v3155 = vpack.c.b16 %v2903, %v2901
        %v3156 = vpack.c.b16 %v2904, %v2902
        %v3157 = vpack.c.b16 %v2907, %v2905
        %v3158 = vpack.c.b16 %v2908, %v2906
        %v3159 = vpack.c.b16 %v2911, %v2909
        %v3160 = vpack.c.b16 %v2912, %v2910
        %v3161 = vpack.c.b16 %v2915, %v2913
        %v3162 = vpack.c.b16 %v2916, %v2914
        %v3163 = vpack.c.b16 %v2919, %v2917
        %v3164 = vpack.c.b16 %v2920, %v2918
        %v3165 = vpack.c.b16 %v2923, %v2921
        %v3166 = vpack.c.b16 %v2924, %v2922
        %v3167 = vpack.c.b16 %v2927, %v2925
        %v3168 = vpack.c.b16 %v2928, %v2926
        %v3169 = vpack.c.b16 %v2931, %v2929
        %v3170 = vpack.c.b16 %v2932, %v2930
        %v3171 = vpack.c.b16 %v2935, %v2933
        %v3172 = vpack.c.b16 %v2936, %v2934
        %v3173 = vpack.c.b16 %v2939, %v2937
        %v3174 = vpack.c.b16 %v2940, %v2938
        %v3175 = vpack.c.b16 %v2943, %v2941
        %v3176 = vpack.c.b16 %v2944, %v2942
        %v3177 = vpack.c.b16 %v2947, %v2945
        %v3178 = vpack.c.b16 %v2948, %v2946
        %v3179 = vpack.c.b16 %v2951, %v2949
        %v3180 = vpack.c.b16 %v2952, %v2950
        %v3181 = vpack.c.b16 %v2955, %v2953
        %v3182 = vpack.c.b16 %v2956, %v2954
        %v3183 = vpack.c.b16 %v2959, %v2957
        %v3184 = vpack.c.b16 %v2960, %v2958
        %v3185 = vpack.c.b16 %v2963, %v2961
        %v3186 = vpack.c.b16 %v2964, %v2962
        %v3187 = vpack.c.b16 %v2967, %v2965
        %v3188 = vpack.c.b16 %v2968, %v2966
        %v3189 = vpack.c.b16 %v2971, %v2969
        %v3190 = vpack.c.b16 %v2972, %v2970
        %v3191 = vpack.c.b16 %v2975, %v2973
        %v3192 = vpack.c.b16 %v2976, %v2974
        %v3193 = vpack.c.b16 %v2979, %v2977
        %v3194 = vpack.c.b16 %v2980, %v2978
        %v3195 = vpack.c.b16 %v2983, %v2981
        %v3196 = vpack.c.b16 %v2984, %v2982
        %v3197 = vpack.c.b16 %v2987, %v2985
        %v3198 = vpack.c.b16 %v2988, %v2986
        %v3199 = vpack.c.b16 %v2991, %v2989
        %v3200 = vpack.c.b16 %v2992, %v2990
        %v3201 = vpack.c.b16 %v2995, %v2993
        %v3202 = vpack.c.b16 %v2996, %v2994
        %v3203 = vpack.c.b16 %v2999, %v2997
        %v3204 = vpack.c.b16 %v3000, %v2998
        %v3205 = vpack.c.b16 %v3003, %v3001
        %v3206 = vpack.c.b16 %v3004, %v3002
        %v3207 = vpack.c.b16 %v3007, %v3005
        %v3208 = vpack.c.b16 %v3008, %v3006
        %v3209 = vpack.c.b16 %v3011, %v3009
        %v3210 = vpack.c.b16 %v3012, %v3010
        %v3211 = vpack.c.b16 %v3015, %v3013
        %v3212 = vpack.c.b16 %v3016, %v3014
        %v3213 = vpack.c.b16 %v3019, %v3017
        %v3214 = vpack.c.b16 %v3020, %v3018
        %v3215 = vpack.c.b16 %v3023, %v3021
        %v3216 = vpack.c.b16 %v3024, %v3022
        %v3217 = vpack.c.b16 %v3027, %v3025
        %v3218 = vpack.c.b16 %v3028, %v3026
        %v3219 = vpack.c.b16 %v3031, %v3029
        %v3220 = vpack.c.b16 %v3032, %v3030
        %v3221 = vpack.c.b16 %v3035, %v3033
        %v3222 = vpack.c.b16 %v3036, %v3034
        %v3223 = vpack.c.b16 %v3039, %v3037
        %v3224 = vpack.c.b16 %v3040, %v3038
        %v3225 = vpack.c.b16 %v3043, %v3041
        %v3226 = vpack.c.b16 %v3044, %v3042
        %v3227 = vpack.c.b16 %v3047, %v3045
        %v3228 = vpack.c.b16 %v3048, %v3046
        %v3229 = vpack.c.b16 %v3051, %v3049
        %v3230 = vpack.c.b16 %v3052, %v3050
        %v3231 = vpack.c.b16 %v3055, %v3053
        %v3232 = vpack.c.b16 %v3056, %v3054
        %v3233 = vpack.c.b16 %v3059, %v3057
        %v3234 = vpack.c.b16 %v3060, %v3058
        %v3235 = vpack.c.b16 %v3063, %v3061
        %v3236 = vpack.c.b16 %v3064, %v3062
        %v3237 = vpack.c.b16 %v3067, %v3065
        %v3238 = vpack.c.b16 %v3068, %v3066
        %v3239 = vpack.c.b16 %v3071, %v3069
        %v3240 = vpack.c.b16 %v3072, %v3070
        %v3241 = vpack.c.b16 %v3075, %v3073
        %v3242 = vpack.c.b16 %v3076, %v3074
        %v3243 = vpack.c.b16 %v3079, %v3077
        %v3244 = vpack.c.b16 %v3080, %v3078
        %v3245 = vpack.c.b16 %v3083, %v3081
        %v3246 = vpack.c.b16 %v3084, %v3082
        %v3247 = vpack.c.b16 %v3087, %v3085
        %v3248 = vpack.c.b16 %v3088, %v3086
        %v3249 = vpack.c.b16 %v3091, %v3089
        %v3250 = vpack.c.b16 %v3092, %v3090
        %v3251 = vpack.c.b16 %v3095, %v3093
        %v3252 = vpack.c.b16 %v3096, %v3094
        %v3253 = vpack.c.b16 %v3099, %v3097
        %v3254 = vpack.c.b16 %v3100, %v3098
        %v3255 = vpack.c.b16 %v3103, %v3101
        %v3256 = vpack.c.b16 %v3104, %v3102
        %v3257 = vpack.c.b16 %v3107, %v3105
        %v3258 = vpack.c.b16 %v3108, %v3106
        %v3259 = vpack.c.b16 %v3111, %v3109
        %v3260 = vpack.c.b16 %v3112, %v3110
        %v3261 = vpack.c.b16 %v3115, %v3113
        %v3262 = vpack.c.b16 %v3116, %v3114
        %v3263 = vpack.c.b16 %v3119, %v3117
        %v3264 = vpack.c.b16 %v3120, %v3118
        %v3265 = vpack.c.b16 %v3123, %v3121
        %v3266 = vpack.c.b16 %v3124, %v3122
        %v3267 = vpack.c.b16 %v3127, %v3125
        %v3268 = vpack.c.b16 %v3128, %v3126
        %v3269 = vpack.c.b16 %v3131, %v3129
        %v3270 = vpack.c.b16 %v3132, %v3130
        %v3271 = vpack.c.b16 %v3135, %v3133
        %v3272 = vpack.c.b16 %v3136, %v3134
        %v3273 = vpack.c.b16 %v3139, %v3137
        %v3274 = vpack.c.b16 %v3140, %v3138
        %v3275 = vpack.c.b16 %v3143, %v3141
        %v3276 = vpack.c.b16 %v3144, %v3142
        %v3277 = vpack.c.b16 %v3147, %v3145
        %v3278 = vpack.c.b16 %v3148, %v3146
        %v3279 = vpack.c.b16 %v3151, %v3149
        %v3280 = vpack.c.b16 %v3152, %v3150
        %3409 = vmatprep.subr.bf16.mxu0 %v3168
        %3410 = vmatpush1.bf16.msra.mxu0 %v3167
        %3411 = vmatprep.subr.bf16.mxu0 %v3166
        %3412 = vmatpush1.bf16.msra.mxu0 %v3165
        %3413 = vmatprep.subr.bf16.mxu0 %v3164
        %3414 = vmatpush1.bf16.msra.mxu0 %v3163
        %3415 = vmatprep.subr.bf16.mxu0 %v3162
        %3416 = vmatpush1.bf16.msra.mxu0 %v3161
        %3417 = vmatprep.subr.bf16.mxu0 %v3160
        %3418 = vmatpush1.bf16.msra.mxu0 %v3159
        %3419 = vmatprep.subr.bf16.mxu0 %v3158
        %3420 = vmatpush1.bf16.msra.mxu0 %v3157
        %3421 = vmatprep.subr.bf16.mxu0 %v3156
        %3422 = vmatpush1.bf16.msra.mxu0 %v3155
        %3423 = vmatprep.subr.bf16.mxu0 %v3154
        %3424 = vmatpush1.bf16.msra.mxu0 %v3153
        %3425 = vmatprep.subr.bf16.mxu0 %v3184
        %3426 = vmatpush2.bf16.msra.mxu0 %v3183
        %3427 = vmatprep.subr.bf16.mxu0 %v3182
        %3428 = vmatpush2.bf16.msra.mxu0 %v3181
        %3429 = vmatprep.subr.bf16.mxu0 %v3180
        %3430 = vmatpush2.bf16.msra.mxu0 %v3179
        %3431 = vmatprep.subr.bf16.mxu0 %v3178
        %3432 = vmatpush2.bf16.msra.mxu0 %v3177
        %3433 = vmatprep.subr.bf16.mxu0 %v3176
        %3434 = vmatpush2.bf16.msra.mxu0 %v3175
        %3435 = vmatprep.subr.bf16.mxu0 %v3174
        %3436 = vmatpush2.bf16.msra.mxu0 %v3173
        %3437 = vmatprep.subr.bf16.mxu0 %v3172
        %3438 = vmatpush2.bf16.msra.mxu0 %v3171
        %3439 = vmatprep.subr.bf16.mxu0 %v3170
        %3440 = vmatpush2.bf16.msra.mxu0 %v3169
        %3441 = vmatprep.mubr.bf16.mxu0 %v2642
        %3442 = vmatmul.mubr.bf16.gmra.mxu0 %v2641
        %v3443 = vpop.f32.mrf.mxu0
        %v3444 = vadd.f32 0.0, %v3443
        %v3445 = vpop.f32.mrf.mxu0
        %v3446 = vadd.f32 0.0, %v3445
        %v3447 = vpop.f32.mrf.mxu0
        %v3448 = vadd.f32 0.0, %v3447
        %v3449 = vpop.f32.mrf.mxu0
        %v3450 = vadd.f32 0.0, %v3449
        %3451 = vmatprep.mubr.bf16.mxu0 %v2650
        %3452 = vmatmul.mubr.bf16.gmra.mxu0 %v2649
        %v3453 = vpop.f32.mrf.mxu0
        %v3454 = vadd.f32 0.0, %v3453
        %v3455 = vpop.f32.mrf.mxu0
        %v3456 = vadd.f32 0.0, %v3455
        %v3457 = vpop.f32.mrf.mxu0
        %v3458 = vadd.f32 0.0, %v3457
        %v3459 = vpop.f32.mrf.mxu0
        %v3460 = vadd.f32 0.0, %v3459
        %3461 = vmatprep.mubr.bf16.mxu0 %v2658
        %3462 = vmatmul.mubr.bf16.gmra.mxu0 %v2657
        %v3463 = vpop.f32.mrf.mxu0
        %v3464 = vadd.f32 0.0, %v3463
        %v3465 = vpop.f32.mrf.mxu0
        %v3466 = vadd.f32 0.0, %v3465
        %v3467 = vpop.f32.mrf.mxu0
        %v3468 = vadd.f32 0.0, %v3467
        %v3469 = vpop.f32.mrf.mxu0
        %v3470 = vadd.f32 0.0, %v3469
        %3471 = vmatprep.mubr.bf16.mxu0 %v2666
        %3472 = vmatmul.mubr.bf16.gmra.mxu0 %v2665
        %v3473 = vpop.f32.mrf.mxu0
        %v3474 = vadd.f32 0.0, %v3473
        %v3475 = vpop.f32.mrf.mxu0
        %v3476 = vadd.f32 0.0, %v3475
        %v3477 = vpop.f32.mrf.mxu0
        %v3478 = vadd.f32 0.0, %v3477
        %v3479 = vpop.f32.mrf.mxu0
        %v3480 = vadd.f32 0.0, %v3479
        %3481 = vmatprep.mubr.bf16.mxu0 %v2674
        %3482 = vmatmul.mubr.bf16.gmra.mxu0 %v2673
        %v3483 = vpop.f32.mrf.mxu0
        %v3484 = vadd.f32 0.0, %v3483
        %v3485 = vpop.f32.mrf.mxu0
        %v3486 = vadd.f32 0.0, %v3485
        %v3487 = vpop.f32.mrf.mxu0
        %v3488 = vadd.f32 0.0, %v3487
        %v3489 = vpop.f32.mrf.mxu0
        %v3490 = vadd.f32 0.0, %v3489
        %3491 = vmatprep.mubr.bf16.mxu0 %v2682
        %3492 = vmatmul.mubr.bf16.gmra.mxu0 %v2681
        %v3493 = vpop.f32.mrf.mxu0
        %v3494 = vadd.f32 0.0, %v3493
        %v3495 = vpop.f32.mrf.mxu0
        %v3496 = vadd.f32 0.0, %v3495
        %v3497 = vpop.f32.mrf.mxu0
        %v3498 = vadd.f32 0.0, %v3497
        %v3499 = vpop.f32.mrf.mxu0
        %v3500 = vadd.f32 0.0, %v3499
        %3501 = vmatprep.mubr.bf16.mxu0 %v2690
        %3502 = vmatmul.mubr.bf16.gmra.mxu0 %v2689
        %v3503 = vpop.f32.mrf.mxu0
        %v3504 = vadd.f32 0.0, %v3503
        %v3505 = vpop.f32.mrf.mxu0
        %v3506 = vadd.f32 0.0, %v3505
        %v3507 = vpop.f32.mrf.mxu0
        %v3508 = vadd.f32 0.0, %v3507
        %v3509 = vpop.f32.mrf.mxu0
        %v3510 = vadd.f32 0.0, %v3509
        %3511 = vmatprep.mubr.bf16.mxu0 %v2698
        %3512 = vmatmul.mubr.bf16.gmra.mxu0 %v2697
        %v3513 = vpop.f32.mrf.mxu0
        %v3514 = vadd.f32 0.0, %v3513
        %v3515 = vpop.f32.mrf.mxu0
        %v3516 = vadd.f32 0.0, %v3515
        %v3517 = vpop.f32.mrf.mxu0
        %v3518 = vadd.f32 0.0, %v3517
        %v3519 = vpop.f32.mrf.mxu0
        %v3520 = vadd.f32 0.0, %v3519
        %3521 = vmatprep.mubr.bf16.mxu0 %v2706
        %3522 = vmatmul.mubr.bf16.gmra.mxu0 %v2705
        %v3523 = vpop.f32.mrf.mxu0
        %v3524 = vadd.f32 0.0, %v3523
        %v3525 = vpop.f32.mrf.mxu0
        %v3526 = vadd.f32 0.0, %v3525
        %v3527 = vpop.f32.mrf.mxu0
        %v3528 = vadd.f32 0.0, %v3527
        %v3529 = vpop.f32.mrf.mxu0
        %v3530 = vadd.f32 0.0, %v3529
        %3531 = vmatprep.mubr.bf16.mxu0 %v2714
        %3532 = vmatmul.mubr.bf16.gmra.mxu0 %v2713
        %v3533 = vpop.f32.mrf.mxu0
        %v3534 = vadd.f32 0.0, %v3533
        %v3535 = vpop.f32.mrf.mxu0
        %v3536 = vadd.f32 0.0, %v3535
        %v3537 = vpop.f32.mrf.mxu0
        %v3538 = vadd.f32 0.0, %v3537
        %v3539 = vpop.f32.mrf.mxu0
        %v3540 = vadd.f32 0.0, %v3539
        %3541 = vmatprep.mubr.bf16.mxu0 %v2722
        %3542 = vmatmul.mubr.bf16.gmra.mxu0 %v2721
        %v3543 = vpop.f32.mrf.mxu0
        %v3544 = vadd.f32 0.0, %v3543
        %v3545 = vpop.f32.mrf.mxu0
        %v3546 = vadd.f32 0.0, %v3545
        %v3547 = vpop.f32.mrf.mxu0
        %v3548 = vadd.f32 0.0, %v3547
        %v3549 = vpop.f32.mrf.mxu0
        %v3550 = vadd.f32 0.0, %v3549
        %3551 = vmatprep.mubr.bf16.mxu0 %v2730
        %3552 = vmatmul.mubr.bf16.gmra.mxu0 %v2729
        %v3553 = vpop.f32.mrf.mxu0
        %v3554 = vadd.f32 0.0, %v3553
        %v3555 = vpop.f32.mrf.mxu0
        %v3556 = vadd.f32 0.0, %v3555
        %v3557 = vpop.f32.mrf.mxu0
        %v3558 = vadd.f32 0.0, %v3557
        %v3559 = vpop.f32.mrf.mxu0
        %v3560 = vadd.f32 0.0, %v3559
        %3561 = vmatprep.mubr.bf16.mxu0 %v2738
        %3562 = vmatmul.mubr.bf16.gmra.mxu0 %v2737
        %v3563 = vpop.f32.mrf.mxu0
        %v3564 = vadd.f32 0.0, %v3563
        %v3565 = vpop.f32.mrf.mxu0
        %v3566 = vadd.f32 0.0, %v3565
        %v3567 = vpop.f32.mrf.mxu0
        %v3568 = vadd.f32 0.0, %v3567
        %v3569 = vpop.f32.mrf.mxu0
        %v3570 = vadd.f32 0.0, %v3569
        %3571 = vmatprep.mubr.bf16.mxu0 %v2746
        %3572 = vmatmul.mubr.bf16.gmra.mxu0 %v2745
        %v3573 = vpop.f32.mrf.mxu0
        %v3574 = vadd.f32 0.0, %v3573
        %v3575 = vpop.f32.mrf.mxu0
        %v3576 = vadd.f32 0.0, %v3575
        %v3577 = vpop.f32.mrf.mxu0
        %v3578 = vadd.f32 0.0, %v3577
        %v3579 = vpop.f32.mrf.mxu0
        %v3580 = vadd.f32 0.0, %v3579
        %3581 = vmatprep.mubr.bf16.mxu0 %v2754
        %3582 = vmatmul.mubr.bf16.gmra.mxu0 %v2753
        %v3583 = vpop.f32.mrf.mxu0
        %v3584 = vadd.f32 0.0, %v3583
        %v3585 = vpop.f32.mrf.mxu0
        %v3586 = vadd.f32 0.0, %v3585
        %v3587 = vpop.f32.mrf.mxu0
        %v3588 = vadd.f32 0.0, %v3587
        %v3589 = vpop.f32.mrf.mxu0
        %v3590 = vadd.f32 0.0, %v3589
        %3591 = vmatprep.mubr.bf16.mxu0 %v2762
        %3592 = vmatmul.mubr.bf16.gmra.mxu0 %v2761
        %v3593 = vpop.f32.mrf.mxu0
        %v3594 = vadd.f32 0.0, %v3593
        %v3595 = vpop.f32.mrf.mxu0
        %v3596 = vadd.f32 0.0, %v3595
        %v3597 = vpop.f32.mrf.mxu0
        %v3598 = vadd.f32 0.0, %v3597
        %v3599 = vpop.f32.mrf.mxu0
        %v3600 = vadd.f32 0.0, %v3599
        %3601 = vdwg.mxu0
        %3602 = vmatprep.subr.bf16.mxu0 %v3200
        %3603 = vmatpush1.bf16.msra.mxu0 %v3199
        %3604 = vmatprep.subr.bf16.mxu0 %v3198
        %3605 = vmatpush1.bf16.msra.mxu0 %v3197
        %3606 = vmatprep.subr.bf16.mxu0 %v3196
        %3607 = vmatpush1.bf16.msra.mxu0 %v3195
        %3608 = vmatprep.subr.bf16.mxu0 %v3194
        %3609 = vmatpush1.bf16.msra.mxu0 %v3193
        %3610 = vmatprep.subr.bf16.mxu0 %v3192
        %3611 = vmatpush1.bf16.msra.mxu0 %v3191
        %3612 = vmatprep.subr.bf16.mxu0 %v3190
        %3613 = vmatpush1.bf16.msra.mxu0 %v3189
        %3614 = vmatprep.subr.bf16.mxu0 %v3188
        %3615 = vmatpush1.bf16.msra.mxu0 %v3187
        %3616 = vmatprep.subr.bf16.mxu0 %v3186
        %3617 = vmatpush1.bf16.msra.mxu0 %v3185
        %3618 = vmatprep.subr.bf16.mxu0 %v3216
        %3619 = vmatpush2.bf16.msra.mxu0 %v3215
        %3620 = vmatprep.subr.bf16.mxu0 %v3214
        %3621 = vmatpush2.bf16.msra.mxu0 %v3213
        %3622 = vmatprep.subr.bf16.mxu0 %v3212
        %3623 = vmatpush2.bf16.msra.mxu0 %v3211
        %3624 = vmatprep.subr.bf16.mxu0 %v3210
        %3625 = vmatpush2.bf16.msra.mxu0 %v3209
        %3626 = vmatprep.subr.bf16.mxu0 %v3208
        %3627 = vmatpush2.bf16.msra.mxu0 %v3207
        %3628 = vmatprep.subr.bf16.mxu0 %v3206
        %3629 = vmatpush2.bf16.msra.mxu0 %v3205
        %3630 = vmatprep.subr.bf16.mxu0 %v3204
        %3631 = vmatpush2.bf16.msra.mxu0 %v3203
        %3632 = vmatprep.subr.bf16.mxu0 %v3202
        %3633 = vmatpush2.bf16.msra.mxu0 %v3201
        %3634 = vmatprep.mubr.bf16.mxu0 %v2644
        %3635 = vmatmul.mubr.bf16.gmra.mxu0 %v2643
        %v3636 = vpop.f32.mrf.mxu0
        %v3637 = vadd.f32 %v3444, %v3636
        %v3638 = vpop.f32.mrf.mxu0
        %v3639 = vadd.f32 %v3446, %v3638
        %v3640 = vpop.f32.mrf.mxu0
        %v3641 = vadd.f32 %v3448, %v3640
        %v3642 = vpop.f32.mrf.mxu0
        %v3643 = vadd.f32 %v3450, %v3642
        %3644 = vmatprep.mubr.bf16.mxu0 %v2652
        %3645 = vmatmul.mubr.bf16.gmra.mxu0 %v2651
        %v3646 = vpop.f32.mrf.mxu0
        %v3647 = vadd.f32 %v3454, %v3646
        %v3648 = vpop.f32.mrf.mxu0
        %v3649 = vadd.f32 %v3456, %v3648
        %v3650 = vpop.f32.mrf.mxu0
        %v3651 = vadd.f32 %v3458, %v3650
        %v3652 = vpop.f32.mrf.mxu0
        %v3653 = vadd.f32 %v3460, %v3652
        %3654 = vmatprep.mubr.bf16.mxu0 %v2660
        %3655 = vmatmul.mubr.bf16.gmra.mxu0 %v2659
        %v3656 = vpop.f32.mrf.mxu0
        %v3657 = vadd.f32 %v3464, %v3656
        %v3658 = vpop.f32.mrf.mxu0
        %v3659 = vadd.f32 %v3466, %v3658
        %v3660 = vpop.f32.mrf.mxu0
        %v3661 = vadd.f32 %v3468, %v3660
        %v3662 = vpop.f32.mrf.mxu0
        %v3663 = vadd.f32 %v3470, %v3662
        %3664 = vmatprep.mubr.bf16.mxu0 %v2668
        %3665 = vmatmul.mubr.bf16.gmra.mxu0 %v2667
        %v3666 = vpop.f32.mrf.mxu0
        %v3667 = vadd.f32 %v3474, %v3666
        %v3668 = vpop.f32.mrf.mxu0
        %v3669 = vadd.f32 %v3476, %v3668
        %v3670 = vpop.f32.mrf.mxu0
        %v3671 = vadd.f32 %v3478, %v3670
        %v3672 = vpop.f32.mrf.mxu0
        %v3673 = vadd.f32 %v3480, %v3672
        %3674 = vmatprep.mubr.bf16.mxu0 %v2676
        %3675 = vmatmul.mubr.bf16.gmra.mxu0 %v2675
        %v3676 = vpop.f32.mrf.mxu0
        %v3677 = vadd.f32 %v3484, %v3676
        %v3678 = vpop.f32.mrf.mxu0
        %v3679 = vadd.f32 %v3486, %v3678
        %v3680 = vpop.f32.mrf.mxu0
        %v3681 = vadd.f32 %v3488, %v3680
        %v3682 = vpop.f32.mrf.mxu0
        %v3683 = vadd.f32 %v3490, %v3682
        %3684 = vmatprep.mubr.bf16.mxu0 %v2684
        %3685 = vmatmul.mubr.bf16.gmra.mxu0 %v2683
        %v3686 = vpop.f32.mrf.mxu0
        %v3687 = vadd.f32 %v3494, %v3686
        %v3688 = vpop.f32.mrf.mxu0
        %v3689 = vadd.f32 %v3496, %v3688
        %v3690 = vpop.f32.mrf.mxu0
        %v3691 = vadd.f32 %v3498, %v3690
        %v3692 = vpop.f32.mrf.mxu0
        %v3693 = vadd.f32 %v3500, %v3692
        %3694 = vmatprep.mubr.bf16.mxu0 %v2692
        %3695 = vmatmul.mubr.bf16.gmra.mxu0 %v2691
        %v3696 = vpop.f32.mrf.mxu0
        %v3697 = vadd.f32 %v3504, %v3696
        %v3698 = vpop.f32.mrf.mxu0
        %v3699 = vadd.f32 %v3506, %v3698
        %v3700 = vpop.f32.mrf.mxu0
        %v3701 = vadd.f32 %v3508, %v3700
        %v3702 = vpop.f32.mrf.mxu0
        %v3703 = vadd.f32 %v3510, %v3702
        %3704 = vmatprep.mubr.bf16.mxu0 %v2700
        %3705 = vmatmul.mubr.bf16.gmra.mxu0 %v2699
        %v3706 = vpop.f32.mrf.mxu0
        %v3707 = vadd.f32 %v3514, %v3706
        %v3708 = vpop.f32.mrf.mxu0
        %v3709 = vadd.f32 %v3516, %v3708
        %v3710 = vpop.f32.mrf.mxu0
        %v3711 = vadd.f32 %v3518, %v3710
        %v3712 = vpop.f32.mrf.mxu0
        %v3713 = vadd.f32 %v3520, %v3712
        %3714 = vmatprep.mubr.bf16.mxu0 %v2708
        %3715 = vmatmul.mubr.bf16.gmra.mxu0 %v2707
        %v3716 = vpop.f32.mrf.mxu0
        %v3717 = vadd.f32 %v3524, %v3716
        %v3718 = vpop.f32.mrf.mxu0
        %v3719 = vadd.f32 %v3526, %v3718
        %v3720 = vpop.f32.mrf.mxu0
        %v3721 = vadd.f32 %v3528, %v3720
        %v3722 = vpop.f32.mrf.mxu0
        %v3723 = vadd.f32 %v3530, %v3722
        %3724 = vmatprep.mubr.bf16.mxu0 %v2716
        %3725 = vmatmul.mubr.bf16.gmra.mxu0 %v2715
        %v3726 = vpop.f32.mrf.mxu0
        %v3727 = vadd.f32 %v3534, %v3726
        %v3728 = vpop.f32.mrf.mxu0
        %v3729 = vadd.f32 %v3536, %v3728
        %v3730 = vpop.f32.mrf.mxu0
        %v3731 = vadd.f32 %v3538, %v3730
        %v3732 = vpop.f32.mrf.mxu0
        %v3733 = vadd.f32 %v3540, %v3732
        %3734 = vmatprep.mubr.bf16.mxu0 %v2724
        %3735 = vmatmul.mubr.bf16.gmra.mxu0 %v2723
        %v3736 = vpop.f32.mrf.mxu0
        %v3737 = vadd.f32 %v3544, %v3736
        %v3738 = vpop.f32.mrf.mxu0
        %v3739 = vadd.f32 %v3546, %v3738
        %v3740 = vpop.f32.mrf.mxu0
        %v3741 = vadd.f32 %v3548, %v3740
        %v3742 = vpop.f32.mrf.mxu0
        %v3743 = vadd.f32 %v3550, %v3742
        %3744 = vmatprep.mubr.bf16.mxu0 %v2732
        %3745 = vmatmul.mubr.bf16.gmra.mxu0 %v2731
        %v3746 = vpop.f32.mrf.mxu0
        %v3747 = vadd.f32 %v3554, %v3746
        %v3748 = vpop.f32.mrf.mxu0
        %v3749 = vadd.f32 %v3556, %v3748
        %v3750 = vpop.f32.mrf.mxu0
        %v3751 = vadd.f32 %v3558, %v3750
        %v3752 = vpop.f32.mrf.mxu0
        %v3753 = vadd.f32 %v3560, %v3752
        %3754 = vmatprep.mubr.bf16.mxu0 %v2740
        %3755 = vmatmul.mubr.bf16.gmra.mxu0 %v2739
        %v3756 = vpop.f32.mrf.mxu0
        %v3757 = vadd.f32 %v3564, %v3756
        %v3758 = vpop.f32.mrf.mxu0
        %v3759 = vadd.f32 %v3566, %v3758
        %v3760 = vpop.f32.mrf.mxu0
        %v3761 = vadd.f32 %v3568, %v3760
        %v3762 = vpop.f32.mrf.mxu0
        %v3763 = vadd.f32 %v3570, %v3762
        %3764 = vmatprep.mubr.bf16.mxu0 %v2748
        %3765 = vmatmul.mubr.bf16.gmra.mxu0 %v2747
        %v3766 = vpop.f32.mrf.mxu0
        %v3767 = vadd.f32 %v3574, %v3766
        %v3768 = vpop.f32.mrf.mxu0
        %v3769 = vadd.f32 %v3576, %v3768
        %v3770 = vpop.f32.mrf.mxu0
        %v3771 = vadd.f32 %v3578, %v3770
        %v3772 = vpop.f32.mrf.mxu0
        %v3773 = vadd.f32 %v3580, %v3772
        %3774 = vmatprep.mubr.bf16.mxu0 %v2756
        %3775 = vmatmul.mubr.bf16.gmra.mxu0 %v2755
        %v3776 = vpop.f32.mrf.mxu0
        %v3777 = vadd.f32 %v3584, %v3776
        %v3778 = vpop.f32.mrf.mxu0
        %v3779 = vadd.f32 %v3586, %v3778
        %v3780 = vpop.f32.mrf.mxu0
        %v3781 = vadd.f32 %v3588, %v3780
        %v3782 = vpop.f32.mrf.mxu0
        %v3783 = vadd.f32 %v3590, %v3782
        %3784 = vmatprep.mubr.bf16.mxu0 %v2764
        %3785 = vmatmul.mubr.bf16.gmra.mxu0 %v2763
        %v3786 = vpop.f32.mrf.mxu0
        %v3787 = vadd.f32 %v3594, %v3786
        %v3788 = vpop.f32.mrf.mxu0
        %v3789 = vadd.f32 %v3596, %v3788
        %v3790 = vpop.f32.mrf.mxu0
        %v3791 = vadd.f32 %v3598, %v3790
        %v3792 = vpop.f32.mrf.mxu0
        %v3793 = vadd.f32 %v3600, %v3792
        %3794 = vdwg.mxu0
        %3795 = vmatprep.subr.bf16.mxu0 %v3232
        %3796 = vmatpush1.bf16.msra.mxu0 %v3231
        %3797 = vmatprep.subr.bf16.mxu0 %v3230
        %3798 = vmatpush1.bf16.msra.mxu0 %v3229
        %3799 = vmatprep.subr.bf16.mxu0 %v3228
        %3800 = vmatpush1.bf16.msra.mxu0 %v3227
        %3801 = vmatprep.subr.bf16.mxu0 %v3226
        %3802 = vmatpush1.bf16.msra.mxu0 %v3225
        %3803 = vmatprep.subr.bf16.mxu0 %v3224
        %3804 = vmatpush1.bf16.msra.mxu0 %v3223
        %3805 = vmatprep.subr.bf16.mxu0 %v3222
        %3806 = vmatpush1.bf16.msra.mxu0 %v3221
        %3807 = vmatprep.subr.bf16.mxu0 %v3220
        %3808 = vmatpush1.bf16.msra.mxu0 %v3219
        %3809 = vmatprep.subr.bf16.mxu0 %v3218
        %3810 = vmatpush1.bf16.msra.mxu0 %v3217
        %3811 = vmatprep.subr.bf16.mxu0 %v3248
        %3812 = vmatpush2.bf16.msra.mxu0 %v3247
        %3813 = vmatprep.subr.bf16.mxu0 %v3246
        %3814 = vmatpush2.bf16.msra.mxu0 %v3245
        %3815 = vmatprep.subr.bf16.mxu0 %v3244
        %3816 = vmatpush2.bf16.msra.mxu0 %v3243
        %3817 = vmatprep.subr.bf16.mxu0 %v3242
        %3818 = vmatpush2.bf16.msra.mxu0 %v3241
        %3819 = vmatprep.subr.bf16.mxu0 %v3240
        %3820 = vmatpush2.bf16.msra.mxu0 %v3239
        %3821 = vmatprep.subr.bf16.mxu0 %v3238
        %3822 = vmatpush2.bf16.msra.mxu0 %v3237
        %3823 = vmatprep.subr.bf16.mxu0 %v3236
        %3824 = vmatpush2.bf16.msra.mxu0 %v3235
        %3825 = vmatprep.subr.bf16.mxu0 %v3234
        %3826 = vmatpush2.bf16.msra.mxu0 %v3233
        %3827 = vmatprep.mubr.bf16.mxu0 %v2646
        %3828 = vmatmul.mubr.bf16.gmra.mxu0 %v2645
        %v3829 = vpop.f32.mrf.mxu0
        %v3830 = vadd.f32 %v3637, %v3829
        %v3831 = vpop.f32.mrf.mxu0
        %v3832 = vadd.f32 %v3639, %v3831
        %v3833 = vpop.f32.mrf.mxu0
        %v3834 = vadd.f32 %v3641, %v3833
        %v3835 = vpop.f32.mrf.mxu0
        %v3836 = vadd.f32 %v3643, %v3835
        %3837 = vmatprep.mubr.bf16.mxu0 %v2654
        %3838 = vmatmul.mubr.bf16.gmra.mxu0 %v2653
        %v3839 = vpop.f32.mrf.mxu0
        %v3840 = vadd.f32 %v3647, %v3839
        %v3841 = vpop.f32.mrf.mxu0
        %v3842 = vadd.f32 %v3649, %v3841
        %v3843 = vpop.f32.mrf.mxu0
        %v3844 = vadd.f32 %v3651, %v3843
        %v3845 = vpop.f32.mrf.mxu0
        %v3846 = vadd.f32 %v3653, %v3845
        %3847 = vmatprep.mubr.bf16.mxu0 %v2662
        %3848 = vmatmul.mubr.bf16.gmra.mxu0 %v2661
        %v3849 = vpop.f32.mrf.mxu0
        %v3850 = vadd.f32 %v3657, %v3849
        %v3851 = vpop.f32.mrf.mxu0
        %v3852 = vadd.f32 %v3659, %v3851
        %v3853 = vpop.f32.mrf.mxu0
        %v3854 = vadd.f32 %v3661, %v3853
        %v3855 = vpop.f32.mrf.mxu0
        %v3856 = vadd.f32 %v3663, %v3855
        %3857 = vmatprep.mubr.bf16.mxu0 %v2670
        %3858 = vmatmul.mubr.bf16.gmra.mxu0 %v2669
        %v3859 = vpop.f32.mrf.mxu0
        %v3860 = vadd.f32 %v3667, %v3859
        %v3861 = vpop.f32.mrf.mxu0
        %v3862 = vadd.f32 %v3669, %v3861
        %v3863 = vpop.f32.mrf.mxu0
        %v3864 = vadd.f32 %v3671, %v3863
        %v3865 = vpop.f32.mrf.mxu0
        %v3866 = vadd.f32 %v3673, %v3865
        %3867 = vmatprep.mubr.bf16.mxu0 %v2678
        %3868 = vmatmul.mubr.bf16.gmra.mxu0 %v2677
        %v3869 = vpop.f32.mrf.mxu0
        %v3870 = vadd.f32 %v3677, %v3869
        %v3871 = vpop.f32.mrf.mxu0
        %v3872 = vadd.f32 %v3679, %v3871
        %v3873 = vpop.f32.mrf.mxu0
        %v3874 = vadd.f32 %v3681, %v3873
        %v3875 = vpop.f32.mrf.mxu0
        %v3876 = vadd.f32 %v3683, %v3875
        %3877 = vmatprep.mubr.bf16.mxu0 %v2686
        %3878 = vmatmul.mubr.bf16.gmra.mxu0 %v2685
        %v3879 = vpop.f32.mrf.mxu0
        %v3880 = vadd.f32 %v3687, %v3879
        %v3881 = vpop.f32.mrf.mxu0
        %v3882 = vadd.f32 %v3689, %v3881
        %v3883 = vpop.f32.mrf.mxu0
        %v3884 = vadd.f32 %v3691, %v3883
        %v3885 = vpop.f32.mrf.mxu0
        %v3886 = vadd.f32 %v3693, %v3885
        %3887 = vmatprep.mubr.bf16.mxu0 %v2694
        %3888 = vmatmul.mubr.bf16.gmra.mxu0 %v2693
        %v3889 = vpop.f32.mrf.mxu0
        %v3890 = vadd.f32 %v3697, %v3889
        %v3891 = vpop.f32.mrf.mxu0
        %v3892 = vadd.f32 %v3699, %v3891
        %v3893 = vpop.f32.mrf.mxu0
        %v3894 = vadd.f32 %v3701, %v3893
        %v3895 = vpop.f32.mrf.mxu0
        %v3896 = vadd.f32 %v3703, %v3895
        %3897 = vmatprep.mubr.bf16.mxu0 %v2702
        %3898 = vmatmul.mubr.bf16.gmra.mxu0 %v2701
        %v3899 = vpop.f32.mrf.mxu0
        %v3900 = vadd.f32 %v3707, %v3899
        %v3901 = vpop.f32.mrf.mxu0
        %v3902 = vadd.f32 %v3709, %v3901
        %v3903 = vpop.f32.mrf.mxu0
        %v3904 = vadd.f32 %v3711, %v3903
        %v3905 = vpop.f32.mrf.mxu0
        %v3906 = vadd.f32 %v3713, %v3905
        %3907 = vmatprep.mubr.bf16.mxu0 %v2710
        %3908 = vmatmul.mubr.bf16.gmra.mxu0 %v2709
        %v3909 = vpop.f32.mrf.mxu0
        %v3910 = vadd.f32 %v3717, %v3909
        %v3911 = vpop.f32.mrf.mxu0
        %v3912 = vadd.f32 %v3719, %v3911
        %v3913 = vpop.f32.mrf.mxu0
        %v3914 = vadd.f32 %v3721, %v3913
        %v3915 = vpop.f32.mrf.mxu0
        %v3916 = vadd.f32 %v3723, %v3915
        %3917 = vmatprep.mubr.bf16.mxu0 %v2718
        %3918 = vmatmul.mubr.bf16.gmra.mxu0 %v2717
        %v3919 = vpop.f32.mrf.mxu0
        %v3920 = vadd.f32 %v3727, %v3919
        %v3921 = vpop.f32.mrf.mxu0
        %v3922 = vadd.f32 %v3729, %v3921
        %v3923 = vpop.f32.mrf.mxu0
        %v3924 = vadd.f32 %v3731, %v3923
        %v3925 = vpop.f32.mrf.mxu0
        %v3926 = vadd.f32 %v3733, %v3925
        %3927 = vmatprep.mubr.bf16.mxu0 %v2726
        %3928 = vmatmul.mubr.bf16.gmra.mxu0 %v2725
        %v3929 = vpop.f32.mrf.mxu0
        %v3930 = vadd.f32 %v3737, %v3929
        %v3931 = vpop.f32.mrf.mxu0
        %v3932 = vadd.f32 %v3739, %v3931
        %v3933 = vpop.f32.mrf.mxu0
        %v3934 = vadd.f32 %v3741, %v3933
        %v3935 = vpop.f32.mrf.mxu0
        %v3936 = vadd.f32 %v3743, %v3935
        %3937 = vmatprep.mubr.bf16.mxu0 %v2734
        %3938 = vmatmul.mubr.bf16.gmra.mxu0 %v2733
        %v3939 = vpop.f32.mrf.mxu0
        %v3940 = vadd.f32 %v3747, %v3939
        %v3941 = vpop.f32.mrf.mxu0
        %v3942 = vadd.f32 %v3749, %v3941
        %v3943 = vpop.f32.mrf.mxu0
        %v3944 = vadd.f32 %v3751, %v3943
        %v3945 = vpop.f32.mrf.mxu0
        %v3946 = vadd.f32 %v3753, %v3945
        %3947 = vmatprep.mubr.bf16.mxu0 %v2742
        %3948 = vmatmul.mubr.bf16.gmra.mxu0 %v2741
        %v3949 = vpop.f32.mrf.mxu0
        %v3950 = vadd.f32 %v3757, %v3949
        %v3951 = vpop.f32.mrf.mxu0
        %v3952 = vadd.f32 %v3759, %v3951
        %v3953 = vpop.f32.mrf.mxu0
        %v3954 = vadd.f32 %v3761, %v3953
        %v3955 = vpop.f32.mrf.mxu0
        %v3956 = vadd.f32 %v3763, %v3955
        %3957 = vmatprep.mubr.bf16.mxu0 %v2750
        %3958 = vmatmul.mubr.bf16.gmra.mxu0 %v2749
        %v3959 = vpop.f32.mrf.mxu0
        %v3960 = vadd.f32 %v3767, %v3959
        %v3961 = vpop.f32.mrf.mxu0
        %v3962 = vadd.f32 %v3769, %v3961
        %v3963 = vpop.f32.mrf.mxu0
        %v3964 = vadd.f32 %v3771, %v3963
        %v3965 = vpop.f32.mrf.mxu0
        %v3966 = vadd.f32 %v3773, %v3965
        %3967 = vmatprep.mubr.bf16.mxu0 %v2758
        %3968 = vmatmul.mubr.bf16.gmra.mxu0 %v2757
        %v3969 = vpop.f32.mrf.mxu0
        %v3970 = vadd.f32 %v3777, %v3969
        %v3971 = vpop.f32.mrf.mxu0
        %v3972 = vadd.f32 %v3779, %v3971
        %v3973 = vpop.f32.mrf.mxu0
        %v3974 = vadd.f32 %v3781, %v3973
        %v3975 = vpop.f32.mrf.mxu0
        %v3976 = vadd.f32 %v3783, %v3975
        %3977 = vmatprep.mubr.bf16.mxu0 %v2766
        %3978 = vmatmul.mubr.bf16.gmra.mxu0 %v2765
        %v3979 = vpop.f32.mrf.mxu0
        %v3980 = vadd.f32 %v3787, %v3979
        %v3981 = vpop.f32.mrf.mxu0
        %v3982 = vadd.f32 %v3789, %v3981
        %v3983 = vpop.f32.mrf.mxu0
        %v3984 = vadd.f32 %v3791, %v3983
        %v3985 = vpop.f32.mrf.mxu0
        %v3986 = vadd.f32 %v3793, %v3985
        %3987 = vdwg.mxu0
        %3988 = vmatprep.subr.bf16.mxu0 %v3264
        %3989 = vmatpush1.bf16.msra.mxu0 %v3263
        %3990 = vmatprep.subr.bf16.mxu0 %v3262
        %3991 = vmatpush1.bf16.msra.mxu0 %v3261
        %3992 = vmatprep.subr.bf16.mxu0 %v3260
        %3993 = vmatpush1.bf16.msra.mxu0 %v3259
        %3994 = vmatprep.subr.bf16.mxu0 %v3258
        %3995 = vmatpush1.bf16.msra.mxu0 %v3257
        %3996 = vmatprep.subr.bf16.mxu0 %v3256
        %3997 = vmatpush1.bf16.msra.mxu0 %v3255
        %3998 = vmatprep.subr.bf16.mxu0 %v3254
        %3999 = vmatpush1.bf16.msra.mxu0 %v3253
        %4000 = vmatprep.subr.bf16.mxu0 %v3252
        %4001 = vmatpush1.bf16.msra.mxu0 %v3251
        %4002 = vmatprep.subr.bf16.mxu0 %v3250
        %4003 = vmatpush1.bf16.msra.mxu0 %v3249
        %4004 = vmatprep.subr.bf16.mxu0 %v3280
        %4005 = vmatpush2.bf16.msra.mxu0 %v3279
        %4006 = vmatprep.subr.bf16.mxu0 %v3278
        %4007 = vmatpush2.bf16.msra.mxu0 %v3277
        %4008 = vmatprep.subr.bf16.mxu0 %v3276
        %4009 = vmatpush2.bf16.msra.mxu0 %v3275
        %4010 = vmatprep.subr.bf16.mxu0 %v3274
        %4011 = vmatpush2.bf16.msra.mxu0 %v3273
        %4012 = vmatprep.subr.bf16.mxu0 %v3272
        %4013 = vmatpush2.bf16.msra.mxu0 %v3271
        %4014 = vmatprep.subr.bf16.mxu0 %v3270
        %4015 = vmatpush2.bf16.msra.mxu0 %v3269
        %4016 = vmatprep.subr.bf16.mxu0 %v3268
        %4017 = vmatpush2.bf16.msra.mxu0 %v3267
        %4018 = vmatprep.subr.bf16.mxu0 %v3266
        %4019 = vmatpush2.bf16.msra.mxu0 %v3265
        %4020 = vmatprep.mubr.bf16.mxu0 %v2648
        %4021 = vmatmul.mubr.bf16.gmra.mxu0 %v2647
        %v4022 = vpop.f32.mrf.mxu0
        %v4023 = vadd.f32 %v3830, %v4022
        %v4024 = vpop.f32.mrf.mxu0
        %v4025 = vadd.f32 %v3832, %v4024
        %v4026 = vpop.f32.mrf.mxu0
        %v4027 = vadd.f32 %v3834, %v4026
        %v4028 = vpop.f32.mrf.mxu0
        %v4029 = vadd.f32 %v3836, %v4028
        %4030 = vmatprep.mubr.bf16.mxu0 %v2656
        %4031 = vmatmul.mubr.bf16.gmra.mxu0 %v2655
        %v4032 = vpop.f32.mrf.mxu0
        %v4033 = vadd.f32 %v3840, %v4032
        %v4034 = vpop.f32.mrf.mxu0
        %v4035 = vadd.f32 %v3842, %v4034
        %v4036 = vpop.f32.mrf.mxu0
        %v4037 = vadd.f32 %v3844, %v4036
        %v4038 = vpop.f32.mrf.mxu0
        %v4039 = vadd.f32 %v3846, %v4038
        %4040 = vmatprep.mubr.bf16.mxu0 %v2664
        %4041 = vmatmul.mubr.bf16.gmra.mxu0 %v2663
        %v4042 = vpop.f32.mrf.mxu0
        %v4043 = vadd.f32 %v3850, %v4042
        %v4044 = vpop.f32.mrf.mxu0
        %v4045 = vadd.f32 %v3852, %v4044
        %v4046 = vpop.f32.mrf.mxu0
        %v4047 = vadd.f32 %v3854, %v4046
        %v4048 = vpop.f32.mrf.mxu0
        %v4049 = vadd.f32 %v3856, %v4048
        %4050 = vmatprep.mubr.bf16.mxu0 %v2672
        %4051 = vmatmul.mubr.bf16.gmra.mxu0 %v2671
        %v4052 = vpop.f32.mrf.mxu0
        %v4053 = vadd.f32 %v3860, %v4052
        %v4054 = vpop.f32.mrf.mxu0
        %v4055 = vadd.f32 %v3862, %v4054
        %v4056 = vpop.f32.mrf.mxu0
        %v4057 = vadd.f32 %v3864, %v4056
        %v4058 = vpop.f32.mrf.mxu0
        %v4059 = vadd.f32 %v3866, %v4058
        %4060 = vmatprep.mubr.bf16.mxu0 %v2680
        %4061 = vmatmul.mubr.bf16.gmra.mxu0 %v2679
        %v4062 = vpop.f32.mrf.mxu0
        %v4063 = vadd.f32 %v3870, %v4062
        %v4064 = vpop.f32.mrf.mxu0
        %v4065 = vadd.f32 %v3872, %v4064
        %v4066 = vpop.f32.mrf.mxu0
        %v4067 = vadd.f32 %v3874, %v4066
        %v4068 = vpop.f32.mrf.mxu0
        %v4069 = vadd.f32 %v3876, %v4068
        %4070 = vmatprep.mubr.bf16.mxu0 %v2688
        %4071 = vmatmul.mubr.bf16.gmra.mxu0 %v2687
        %v4072 = vpop.f32.mrf.mxu0
        %v4073 = vadd.f32 %v3880, %v4072
        %v4074 = vpop.f32.mrf.mxu0
        %v4075 = vadd.f32 %v3882, %v4074
        %v4076 = vpop.f32.mrf.mxu0
        %v4077 = vadd.f32 %v3884, %v4076
        %v4078 = vpop.f32.mrf.mxu0
        %v4079 = vadd.f32 %v3886, %v4078
        %4080 = vmatprep.mubr.bf16.mxu0 %v2696
        %4081 = vmatmul.mubr.bf16.gmra.mxu0 %v2695
        %v4082 = vpop.f32.mrf.mxu0
        %v4083 = vadd.f32 %v3890, %v4082
        %v4084 = vpop.f32.mrf.mxu0
        %v4085 = vadd.f32 %v3892, %v4084
        %v4086 = vpop.f32.mrf.mxu0
        %v4087 = vadd.f32 %v3894, %v4086
        %v4088 = vpop.f32.mrf.mxu0
        %v4089 = vadd.f32 %v3896, %v4088
        %4090 = vmatprep.mubr.bf16.mxu0 %v2704
        %4091 = vmatmul.mubr.bf16.gmra.mxu0 %v2703
        %v4092 = vpop.f32.mrf.mxu0
        %v4093 = vadd.f32 %v3900, %v4092
        %v4094 = vpop.f32.mrf.mxu0
        %v4095 = vadd.f32 %v3902, %v4094
        %v4096 = vpop.f32.mrf.mxu0
        %v4097 = vadd.f32 %v3904, %v4096
        %v4098 = vpop.f32.mrf.mxu0
        %v4099 = vadd.f32 %v3906, %v4098
        %4100 = vmatprep.mubr.bf16.mxu0 %v2712
        %4101 = vmatmul.mubr.bf16.gmra.mxu0 %v2711
        %v4102 = vpop.f32.mrf.mxu0
        %v4103 = vadd.f32 %v3910, %v4102
        %v4104 = vpop.f32.mrf.mxu0
        %v4105 = vadd.f32 %v3912, %v4104
        %v4106 = vpop.f32.mrf.mxu0
        %v4107 = vadd.f32 %v3914, %v4106
        %v4108 = vpop.f32.mrf.mxu0
        %v4109 = vadd.f32 %v3916, %v4108
        %4110 = vmatprep.mubr.bf16.mxu0 %v2720
        %4111 = vmatmul.mubr.bf16.gmra.mxu0 %v2719
        %v4112 = vpop.f32.mrf.mxu0
        %v4113 = vadd.f32 %v3920, %v4112
        %v4114 = vpop.f32.mrf.mxu0
        %v4115 = vadd.f32 %v3922, %v4114
        %v4116 = vpop.f32.mrf.mxu0
        %v4117 = vadd.f32 %v3924, %v4116
        %v4118 = vpop.f32.mrf.mxu0
        %v4119 = vadd.f32 %v3926, %v4118
        %4120 = vmatprep.mubr.bf16.mxu0 %v2728
        %4121 = vmatmul.mubr.bf16.gmra.mxu0 %v2727
        %v4122 = vpop.f32.mrf.mxu0
        %v4123 = vadd.f32 %v3930, %v4122
        %v4124 = vpop.f32.mrf.mxu0
        %v4125 = vadd.f32 %v3932, %v4124
        %v4126 = vpop.f32.mrf.mxu0
        %v4127 = vadd.f32 %v3934, %v4126
        %v4128 = vpop.f32.mrf.mxu0
        %v4129 = vadd.f32 %v3936, %v4128
        %4130 = vmatprep.mubr.bf16.mxu0 %v2736
        %4131 = vmatmul.mubr.bf16.gmra.mxu0 %v2735
        %v4132 = vpop.f32.mrf.mxu0
        %v4133 = vadd.f32 %v3940, %v4132
        %v4134 = vpop.f32.mrf.mxu0
        %v4135 = vadd.f32 %v3942, %v4134
        %v4136 = vpop.f32.mrf.mxu0
        %v4137 = vadd.f32 %v3944, %v4136
        %v4138 = vpop.f32.mrf.mxu0
        %v4139 = vadd.f32 %v3946, %v4138
        %4140 = vmatprep.mubr.bf16.mxu0 %v2744
        %4141 = vmatmul.mubr.bf16.gmra.mxu0 %v2743
        %v4142 = vpop.f32.mrf.mxu0
        %v4143 = vadd.f32 %v3950, %v4142
        %v4144 = vpop.f32.mrf.mxu0
        %v4145 = vadd.f32 %v3952, %v4144
        %v4146 = vpop.f32.mrf.mxu0
        %v4147 = vadd.f32 %v3954, %v4146
        %v4148 = vpop.f32.mrf.mxu0
        %v4149 = vadd.f32 %v3956, %v4148
        %4150 = vmatprep.mubr.bf16.mxu0 %v2752
        %4151 = vmatmul.mubr.bf16.gmra.mxu0 %v2751
        %v4152 = vpop.f32.mrf.mxu0
        %v4153 = vadd.f32 %v3960, %v4152
        %v4154 = vpop.f32.mrf.mxu0
        %v4155 = vadd.f32 %v3962, %v4154
        %v4156 = vpop.f32.mrf.mxu0
        %v4157 = vadd.f32 %v3964, %v4156
        %v4158 = vpop.f32.mrf.mxu0
        %v4159 = vadd.f32 %v3966, %v4158
        %4160 = vmatprep.mubr.bf16.mxu0 %v2760
        %4161 = vmatmul.mubr.bf16.gmra.mxu0 %v2759
        %v4162 = vpop.f32.mrf.mxu0
        %v4163 = vadd.f32 %v3970, %v4162
        %v4164 = vpop.f32.mrf.mxu0
        %v4165 = vadd.f32 %v3972, %v4164
        %v4166 = vpop.f32.mrf.mxu0
        %v4167 = vadd.f32 %v3974, %v4166
        %v4168 = vpop.f32.mrf.mxu0
        %v4169 = vadd.f32 %v3976, %v4168
        %4170 = vmatprep.mubr.bf16.mxu0 %v2768
        %4171 = vmatmul.mubr.bf16.gmra.mxu0 %v2767
        %v4172 = vpop.f32.mrf.mxu0
        %v4173 = vadd.f32 %v3980, %v4172
        %v4174 = vpop.f32.mrf.mxu0
        %v4175 = vadd.f32 %v3982, %v4174
        %v4176 = vpop.f32.mrf.mxu0
        %v4177 = vadd.f32 %v3984, %v4176
        %v4178 = vpop.f32.mrf.mxu0
        %v4179 = vadd.f32 %v3986, %v4178
        %4180 = vdwg.mxu0
        %v4181 = vadd.f32 %v2577, %v4023
        %v4182 = vadd.f32 %v2578, %v4025
        %v4183 = vadd.f32 %v2579, %v4027
        %v4184 = vadd.f32 %v2580, %v4029
        %v4185 = vadd.f32 %v2581, %v4033
        %v4186 = vadd.f32 %v2582, %v4035
        %v4187 = vadd.f32 %v2583, %v4037
        %v4188 = vadd.f32 %v2584, %v4039
        %v4189 = vadd.f32 %v2585, %v4043
        %v4190 = vadd.f32 %v2586, %v4045
        %v4191 = vadd.f32 %v2587, %v4047
        %v4192 = vadd.f32 %v2588, %v4049
        %v4193 = vadd.f32 %v2589, %v4053
        %v4194 = vadd.f32 %v2590, %v4055
        %v4195 = vadd.f32 %v2591, %v4057
        %v4196 = vadd.f32 %v2592, %v4059
        %v4197 = vadd.f32 %v2593, %v4063
        %v4198 = vadd.f32 %v2594, %v4065
        %v4199 = vadd.f32 %v2595, %v4067
        %v4200 = vadd.f32 %v2596, %v4069
        %v4201 = vadd.f32 %v2597, %v4073
        %v4202 = vadd.f32 %v2598, %v4075
        %v4203 = vadd.f32 %v2599, %v4077
        %v4204 = vadd.f32 %v2600, %v4079
        %v4205 = vadd.f32 %v2601, %v4083
        %v4206 = vadd.f32 %v2602, %v4085
        %v4207 = vadd.f32 %v2603, %v4087
        %v4208 = vadd.f32 %v2604, %v4089
        %v4209 = vadd.f32 %v2605, %v4093
        %v4210 = vadd.f32 %v2606, %v4095
        %v4211 = vadd.f32 %v2607, %v4097
        %v4212 = vadd.f32 %v2608, %v4099
        %v4213 = vadd.f32 %v2609, %v4103
        %v4214 = vadd.f32 %v2610, %v4105
        %v4215 = vadd.f32 %v2611, %v4107
        %v4216 = vadd.f32 %v2612, %v4109
        %v4217 = vadd.f32 %v2613, %v4113
        %v4218 = vadd.f32 %v2614, %v4115
        %v4219 = vadd.f32 %v2615, %v4117
        %v4220 = vadd.f32 %v2616, %v4119
        %v4221 = vadd.f32 %v2617, %v4123
        %v4222 = vadd.f32 %v2618, %v4125
        %v4223 = vadd.f32 %v2619, %v4127
        %v4224 = vadd.f32 %v2620, %v4129
        %v4225 = vadd.f32 %v2621, %v4133
        %v4226 = vadd.f32 %v2622, %v4135
        %v4227 = vadd.f32 %v2623, %v4137
        %v4228 = vadd.f32 %v2624, %v4139
        %v4229 = vadd.f32 %v2625, %v4143
        %v4230 = vadd.f32 %v2626, %v4145
        %v4231 = vadd.f32 %v2627, %v4147
        %v4232 = vadd.f32 %v2628, %v4149
        %v4233 = vadd.f32 %v2629, %v4153
        %v4234 = vadd.f32 %v2630, %v4155
        %v4235 = vadd.f32 %v2631, %v4157
        %v4236 = vadd.f32 %v2632, %v4159
        %v4237 = vadd.f32 %v2633, %v4163
        %v4238 = vadd.f32 %v2634, %v4165
        %v4239 = vadd.f32 %v2635, %v4167
        %v4240 = vadd.f32 %v2636, %v4169
        %v4241 = vadd.f32 %v2637, %v4173
        %v4242 = vadd.f32 %v2638, %v4175
        %v4243 = vadd.f32 %v2639, %v4177
        %v4244 = vadd.f32 %v2640, %v4179
        %4245 = vst [vmem:[%s230] sm:$0xff] %v4181
        %4246 = vst [vmem:[%s230 + $0x8] sm:$0xff] %v4182
        %4247 = vst [vmem:[%s230 + $0x10] sm:$0xff] %v4183
        %4248 = vst [vmem:[%s230 + $0x18] sm:$0xff] %v4184
        %4249 = vst [vmem:[%s230 + $0x20] sm:$0xff] %v4185
        %4250 = vst [vmem:[%s230 + $0x28] sm:$0xff] %v4186
        %4251 = vst [vmem:[%s230 + $0x30] sm:$0xff] %v4187
        %4252 = vst [vmem:[%s230 + $0x38] sm:$0xff] %v4188
        %4253 = vst [vmem:[%s230 + $0x40] sm:$0xff] %v4189
        %4254 = vst [vmem:[%s230 + $0x48] sm:$0xff] %v4190
        %4255 = vst [vmem:[%s230 + $0x50] sm:$0xff] %v4191
        %4256 = vst [vmem:[%s230 + $0x58] sm:$0xff] %v4192
        %4257 = vst [vmem:[%s230 + $0x60] sm:$0xff] %v4193
        %4258 = vst [vmem:[%s230 + $0x68] sm:$0xff] %v4194
        %4259 = vst [vmem:[%s230 + $0x70] sm:$0xff] %v4195
        %4260 = vst [vmem:[%s230 + $0x78] sm:$0xff] %v4196
        %4261 = vst [vmem:[%s230 + $0x80] sm:$0xff] %v4197
        %4262 = vst [vmem:[%s230 + $0x88] sm:$0xff] %v4198
        %4263 = vst [vmem:[%s230 + $0x90] sm:$0xff] %v4199
        %4264 = vst [vmem:[%s230 + $0x98] sm:$0xff] %v4200
        %4265 = vst [vmem:[%s230 + $0xa0] sm:$0xff] %v4201
        %4266 = vst [vmem:[%s230 + $0xa8] sm:$0xff] %v4202
        %4267 = vst [vmem:[%s230 + $0xb0] sm:$0xff] %v4203
        %4268 = vst [vmem:[%s230 + $0xb8] sm:$0xff] %v4204
        %4269 = vst [vmem:[%s230 + $0xc0] sm:$0xff] %v4205
        %4270 = vst [vmem:[%s230 + $0xc8] sm:$0xff] %v4206
        %4271 = vst [vmem:[%s230 + $0xd0] sm:$0xff] %v4207
        %4272 = vst [vmem:[%s230 + $0xd8] sm:$0xff] %v4208
        %4273 = vst [vmem:[%s230 + $0xe0] sm:$0xff] %v4209
        %4274 = vst [vmem:[%s230 + $0xe8] sm:$0xff] %v4210
        %4275 = vst [vmem:[%s230 + $0xf0] sm:$0xff] %v4211
        %4276 = vst [vmem:[%s230 + $0xf8] sm:$0xff] %v4212
        %4277 = vst [vmem:[%s230 + $0x100] sm:$0xff] %v4213
        %4278 = vst [vmem:[%s230 + $0x108] sm:$0xff] %v4214
        %4279 = vst [vmem:[%s230 + $0x110] sm:$0xff] %v4215
        %4280 = vst [vmem:[%s230 + $0x118] sm:$0xff] %v4216
        %4281 = vst [vmem:[%s230 + $0x120] sm:$0xff] %v4217
        %4282 = vst [vmem:[%s230 + $0x128] sm:$0xff] %v4218
        %4283 = vst [vmem:[%s230 + $0x130] sm:$0xff] %v4219
        %4284 = vst [vmem:[%s230 + $0x138] sm:$0xff] %v4220
        %4285 = vst [vmem:[%s230 + $0x140] sm:$0xff] %v4221
        %4286 = vst [vmem:[%s230 + $0x148] sm:$0xff] %v4222
        %4287 = vst [vmem:[%s230 + $0x150] sm:$0xff] %v4223
        %4288 = vst [vmem:[%s230 + $0x158] sm:$0xff] %v4224
        %4289 = vst [vmem:[%s230 + $0x160] sm:$0xff] %v4225
        %4290 = vst [vmem:[%s230 + $0x168] sm:$0xff] %v4226
        %4291 = vst [vmem:[%s230 + $0x170] sm:$0xff] %v4227
        %4292 = vst [vmem:[%s230 + $0x178] sm:$0xff] %v4228
        %4293 = vst [vmem:[%s230 + $0x180] sm:$0xff] %v4229
        %4294 = vst [vmem:[%s230 + $0x188] sm:$0xff] %v4230
        %4295 = vst [vmem:[%s230 + $0x190] sm:$0xff] %v4231
        %4296 = vst [vmem:[%s230 + $0x198] sm:$0xff] %v4232
        %4297 = vst [vmem:[%s230 + $0x1a0] sm:$0xff] %v4233
        %4298 = vst [vmem:[%s230 + $0x1a8] sm:$0xff] %v4234
        %4299 = vst [vmem:[%s230 + $0x1b0] sm:$0xff] %v4235
        %4300 = vst [vmem:[%s230 + $0x1b8] sm:$0xff] %v4236
        %4301 = vst [vmem:[%s230 + $0x1c0] sm:$0xff] %v4237
        %4302 = vst [vmem:[%s230 + $0x1c8] sm:$0xff] %v4238
        %4303 = vst [vmem:[%s230 + $0x1d0] sm:$0xff] %v4239
        %4304 = vst [vmem:[%s230 + $0x1d8] sm:$0xff] %v4240
        %4305 = vst [vmem:[%s230 + $0x1e0] sm:$0xff] %v4241
        %4306 = vst [vmem:[%s230 + $0x1e8] sm:$0xff] %v4242
        %4307 = vst [vmem:[%s230 + $0x1f0] sm:$0xff] %v4243
        %4308 = vst [vmem:[%s230 + $0x1f8] sm:$0xff] %v4244
        %s4309 = sand.u32 %s109, 1
        %s4310 = scalar_lea.sflag [#allocation4], %s4309
        %s4311 = sand.u32 %s109, 1
        %s4312 = smul.addr %s4311, 512
        %s4313 = scalar_lea.vmem [#allocation8], %s4312
        // Predicated region
        $region49: #{mlp_forward.1} parent=31 // pred_check
          %p4314 = pneg %p119
        $region50: #{mlp_forward.1} parent=31 // pred_check_branch
          %4316 = sbr.rel (%p4314) target = $region52
        $region51: #{mlp_forward.1} parent=31 // pred_region
          %s4317 = smul.u32 32, %s25
          %s4319 = ssub.s32 8192, 8192
          %4320 = vsyncadd %s4310, %s4319
          %s4321 = smul.addr %s4317, 2
          %s4322 = smul.addr %s4321, 128
          %s4323 = scalar_lea.hbm %s3, %s4322
          %s4324 = sshll.u32 %s4313, 4
          %s4325 = int_to_ptr.vmem [resolvable:$true] %s4324
          %4330 = dma.vmem_to_hbm [thread:$0]  %s4325, 8192, %s4323, %s4310, 256, 256, 16
        $region52: #{mlp_forward.1} parent=31 // pred_fallthru
          _
      $region32: #{mlp_forward.1} parent=5 // pred_fallthru
        _
      %p4331 = scmp.le.s32.totalorder 2, %s16
      // Predicated region
      $region53: #{mlp_forward.1} parent=5 // pred_check
        %p4332 = pneg %p4331
      $region54: #{mlp_forward.1} parent=5 // pred_check_branch
        %4334 = sbr.rel (%p4332) target = $region56
      $region55: #{mlp_forward.1} parent=5 // pred_region
        %s4335 = ssub.s32 %s16, 2
        // Predicated region
        $region57: #{mlp_forward.1} parent=55 // pred_check
          %p4336 = pneg %p125
        $region58: #{mlp_forward.1} parent=55 // pred_check_branch
          %4338 = sbr.rel (%p4336) target = $region60
        $region59: #{mlp_forward.1} parent=55 // pred_region
          %s4339 = sand.u32 %s110, 1
          %s4340 = scalar_lea.sflag [#allocation4], %s4339
          %s4341 = sand.u32 %s110, 1
          %s4342 = smul.addr %s4341, 512
          %s4343 = scalar_lea.vmem [#allocation8], %s4342
          %4344 = dma.done %s4340, 8192
        $region60: #{mlp_forward.1} parent=55 // pred_fallthru
          _
      $region56: #{mlp_forward.1} parent=5 // pred_fallthru
        _
    $region6: #{mlp_forward.1} parent=1 // loop_footer
      %s20 = sadd.s32 1, %s16
    $region7: #{mlp_forward.1} parent=1 // loop_footer_branch
      %15 = sbr.rel target = $region3
    $region8: #{mlp_forward.1} parent=1 // loop_exit
      _
    %4345 = vsyncpa [#allocation3], 1
    %s4346 = scalar_lea.sflag [#allocation3], 1
    %4347 = vsyncpa %s4346, 1
    %4348 = vsyncpa [#allocation6], 1
    %4349 = vsyncpa [#allocation4], 1
    %s4350 = scalar_lea.sflag [#allocation4], 1
    %4351 = vsyncpa %s4350, 1

</llo_original>
